<compile_context>
chip_gen: v6e
topology: v6e:2x2x1
jax: 0.10.0
libtpu: 0.0.40
codegen_flags: <defaults>
</compile_context>

<pallas_src>
import functools

import jax
import jax.numpy as jnp
from jax import lax
from jax.experimental import pallas as pl
from jax.experimental.pallas import tpu as pltpu


# ----------------------------------------------------------------------------
# Fused kernel: manual HBM row-gather + 3 block sums + cosine margin loss.
# ----------------------------------------------------------------------------
def _tagspace_kernel(idx_ref, pos_ref, neg_ref,        # scalar-prefetch (SMEM)
                     word_ref, tag_ref,                 # raw HBM refs (pl.ANY)
                     out_ref,                           # (1, 1, 1) per example
                     rows_ref, sems_ref,                # VMEM scratch + DMA sems
                     *, margin, n_words, n_pos, n_neg):
    b = pl.program_id(0)

    # ---- Issue all row DMAs up front (44 outstanding copies), wait once. ----
    def fetch(table_ref, row_idx, slot):
        cp = pltpu.make_async_copy(
            table_ref.at[pl.ds(row_idx, 1), :],
            rows_ref.at[pl.ds(slot, 1), :],
            sems_ref.at[slot])
        cp.start()
        return cp

    copies = []
    slot = 0
    for i in range(n_words):                      # word rows -> rows[0:n_words]
        copies.append(fetch(word_ref, idx_ref[b, i], slot)); slot += 1
    for i in range(n_pos):                        # pos tag rows
        copies.append(fetch(tag_ref, pos_ref[b, i], slot)); slot += 1
    for i in range(n_neg):                        # neg tag rows
        copies.append(fetch(tag_ref, neg_ref[b, i], slot)); slot += 1
    for cp in copies:                             # scalar reads all done above
        cp.wait()

    # ---- Contiguous block sums (f32 accumulation regardless of table dtype).
    s0, s1, s2 = n_words, n_words + n_pos, n_words + n_pos + n_neg
    xs = jnp.sum(rows_ref[0:s0, :].astype(jnp.float32), axis=0, keepdims=True)
    ys = jnp.sum(rows_ref[s0:s1, :].astype(jnp.float32), axis=0, keepdims=True)
    ng = jnp.sum(rows_ref[s1:s2, :].astype(jnp.float32), axis=0, keepdims=True)

    # ---- Five reductions packed into one (5, D) buffer, single lane reduce.
    prods = jnp.concatenate([xs * ng, xs * ys, xs * xs, ys * ys, ng * ng],
                            axis=0)                        # (5, D) f32
    sums = jnp.sum(prods, axis=-1)                         # (5,)
    dot_xn, dot_xy, nx2, ny2, nn2 = (sums[0], sums[1], sums[2], sums[3],
                                     sums[4])

    # cos(a, b) = a.b / max(|a||b|, eps); clamp folded into rsqrt (EUP slot).
    eps2 = jnp.float32(1e-8) * jnp.float32(1e-8)
    cos_xn = dot_xn * lax.rsqrt(jnp.maximum(nx2 * nn2, eps2))
    cos_xy = dot_xy * lax.rsqrt(jnp.maximum(nx2 * ny2, eps2))

    crude = cos_xn - cos_xy + jnp.float32(margin)
    result = jnp.maximum(crude, jnp.float32(0.0))          # MarginLoss hinge
    out_ref[...] = jnp.reshape(result, (1, 1, 1)).astype(jnp.float32)


# ----------------------------------------------------------------------------
# Batched TagSpaceModel forward (Pallas-backed, jitted wrapper)
# ----------------------------------------------------------------------------
@functools.partial(jax.jit, static_argnames=("margin",))
def tagspace_forward(word_embs, tag_embs, idx, targets_pos, targets_neg,
                     margin=0.1):
    """idx: (B, n_words), targets_pos: (B, n_pos), targets_neg: (B, n_neg).
    Returns (B,) per-example hinge losses."""
    assert word_embs.dtype == tag_embs.dtype
    B, n_words = idx.shape
    _, n_pos = targets_pos.shape
    _, n_neg = targets_neg.shape
    D = word_embs.shape[1]
    n_total = n_words + n_pos + n_neg
    n_pad = ((n_total + 7) // 8) * 8        # sublane-aligned scratch rows

    kernel = functools.partial(_tagspace_kernel, margin=float(margin),
                               n_words=n_words, n_pos=n_pos, n_neg=n_neg)

    out = pl.pallas_call(
        kernel,
        out_shape=jax.ShapeDtypeStruct((B, 1, 1), jnp.float32),
        grid_spec=pltpu.PrefetchScalarGridSpec(
            num_scalar_prefetch=3,          # idx / targets_pos / targets_neg
            grid=(B,),
            in_specs=[
                pl.BlockSpec(memory_space=pl.ANY),   # word_embs stays in HBM
                pl.BlockSpec(memory_space=pl.ANY),   # tag_embs stays in HBM
            ],
            out_specs=pl.BlockSpec((1, 1, 1),
                                   lambda b, idx_r, pos_r, neg_r: (b, 0, 0)),
            scratch_shapes=[
                pltpu.VMEM((n_pad, D), word_embs.dtype),   # gathered rows
                pltpu.SemaphoreType.DMA((n_total,)),       # one sem per row DMA
            ]),
        compiler_params=pltpu.CompilerParams(
            dimension_semantics=("parallel",)),
    )(idx, targets_pos, targets_neg, word_embs, tag_embs)
    return out[:, 0, 0]


# Pure-JAX reference (f32 accumulation, matching the kernel's upcast).
def tagspace_reference(word_embs, tag_embs, idx, targets_pos, targets_neg,
                       margin=0.1):
    def one(i, p, n):
        xs = jnp.sum(word_embs[i].astype(jnp.float32), axis=0)
        ys = jnp.sum(tag_embs[p].astype(jnp.float32), axis=0)
        ngs = jnp.sum(tag_embs[n].astype(jnp.float32), axis=0)

        def cos(a, b):
            return jnp.dot(a, b) / jnp.maximum(
                jnp.linalg.norm(a) * jnp.linalg.norm(b), 1e-8)

        crude = cos(xs, ngs) - cos(xs, ys) + margin
        return jnp.maximum(crude, 0.0)

    return jax.vmap(one)(idx, targets_pos, targets_neg)


if __name__ == "__main__":
    emb_size = 256          # module default
    vocab_size = 1000       # small synthetic vocab (test-sized)
    tag_vocab_size = 500
    B = 4                   # batched examples per launch
    n_words = 8             # tokens per example
    n_pos = 4               # positive tags per example
    n_neg = 32              # module uses 32 random negatives
    margin = 0.1

    key = jax.random.PRNGKey(0)
    k_w, k_t, k_i, k_p, k_n = jax.random.split(key, 5)

    # nn.Embedding default init: N(0, 1)
    word_embs = jax.random.normal(k_w, (vocab_size, emb_size), jnp.float32)
    tag_embs = jax.random.normal(k_t, (tag_vocab_size, emb_size), jnp.float32)

    idx = jax.random.randint(k_i, (B, n_words), 0, vocab_size, jnp.int32)
    targets_pos = jax.random.randint(k_p, (B, n_pos), 0, tag_vocab_size,
                                     jnp.int32)
    targets_neg = jax.random.randint(k_n, (B, n_neg), 0, tag_vocab_size,
                                     jnp.int32)

    # ---- f32 tables (exact torch nn.Embedding semantics) ----
    out = tagspace_forward(word_embs, tag_embs, idx, targets_pos, targets_neg,
                           margin=margin)
    out = jax.block_until_ready(out)
    ref = tagspace_reference(word_embs, tag_embs, idx, targets_pos,
                             targets_neg, margin)
    assert jnp.allclose(out, ref, atol=1e-5, rtol=1e-5), (out, ref)

    # ---- bf16 tables (halves HBM gather bytes; f32 accumulation in-kernel) ----
    word_bf = word_embs.astype(jnp.bfloat16)
    tag_bf = tag_embs.astype(jnp.bfloat16)
    out_bf = tagspace_forward(word_bf, tag_bf, idx, targets_pos, targets_neg,
                              margin=margin)
    out_bf = jax.block_until_ready(out_bf)
    ref_bf = tagspace_reference(word_bf, tag_bf, idx, targets_pos,
                                targets_neg, margin)
    assert jnp.allclose(out_bf, ref_bf, atol=1e-5, rtol=1e-5), (out_bf, ref_bf)

    print("KERNEL_OK")
</pallas_src>

<mosaic_0001>
module attributes {stable_mosaic.version = 11 : i64} {
  func.func @_tagspace_kernel(%arg0: i32, %arg1: memref<4x8xi32, #tpu.memory_space<smem>>, %arg2: memref<4x4xi32, #tpu.memory_space<smem>>, %arg3: memref<4x32xi32, #tpu.memory_space<smem>>, %arg4: memref<1000x256xf32, #tpu.memory_space<any>>, %arg5: memref<500x256xf32, #tpu.memory_space<any>>, %arg6: memref<1x1x1xf32, #tpu.memory_space<vmem>>, %arg7: memref<48x256xf32, #tpu.memory_space<vmem>>, %arg8: memref<44x!tpu.dma_semaphore, #tpu.memory_space<semaphore_mem>>) attributes {dimension_semantics = [#tpu.dimension_semantics<parallel>], iteration_bounds = array<i64: 4>, scalar_prefetch = 3 : i64, scratch_operands = 2 : i64, tpu.core_type = #tpu.core_type<tc>, window_params = [{}, {}, {transform_indices = @transform_2, window_bounds = array<i64: 1, 1, 1>}]} {
    %0 = arith.index_cast %arg0 : i32 to index
    %c0 = arith.constant 0 : index
    %1 = memref.load %arg1[%0, %c0] : memref<4x8xi32, #tpu.memory_space<smem>>
    %c0_i32 = arith.constant 0 : i32
    %c0_i32_0 = arith.constant 0 : i32
    %2 = tpu.memref_slice %arg4[%1, %c0_i32_0] : memref<1000x256xf32, #tpu.memory_space<any>> -> memref<1x256xf32, #tpu.memory_space<any>>
    %c0_i32_1 = arith.constant 0 : i32
    %c0_i32_2 = arith.constant 0 : i32
    %3 = tpu.memref_slice %arg7[%c0_i32_1, %c0_i32_2] : memref<48x256xf32, #tpu.memory_space<vmem>> -> memref<1x256xf32, #tpu.memory_space<vmem>>
    %4 = tpu.memref_slice %arg8[%c0_i32] : memref<44x!tpu.dma_semaphore, #tpu.memory_space<semaphore_mem>> -> memref<1x!tpu.dma_semaphore, #tpu.memory_space<semaphore_mem>>
    %5 = tpu.memref_squeeze %4 : memref<1x!tpu.dma_semaphore, #tpu.memory_space<semaphore_mem>> -> memref<!tpu.dma_semaphore, #tpu.memory_space<semaphore_mem>>
    tpu.enqueue_dma source(%2 : memref<1x256xf32, #tpu.memory_space<any>>) target(%3 : memref<1x256xf32, #tpu.memory_space<vmem>>) target_semaphore(%5 : memref<!tpu.dma_semaphore, #tpu.memory_space<semaphore_mem>>)
    %6 = arith.index_cast %arg0 : i32 to index
    %c1 = arith.constant 1 : index
    %7 = memref.load %arg1[%6, %c1] : memref<4x8xi32, #tpu.memory_space<smem>>
    %c1_i32 = arith.constant 1 : i32
    %c0_i32_3 = arith.constant 0 : i32
    %8 = tpu.memref_slice %arg4[%7, %c0_i32_3] : memref<1000x256xf32, #tpu.memory_space<any>> -> memref<1x256xf32, #tpu.memory_space<any>>
    %c1_i32_4 = arith.constant 1 : i32
    %c0_i32_5 = arith.constant 0 : i32
    %9 = tpu.memref_slice %arg7[%c1_i32_4, %c0_i32_5] : memref<48x256xf32, #tpu.memory_space<vmem>> -> memref<1x256xf32, #tpu.memory_space<vmem>>
    %10 = tpu.memref_slice %arg8[%c1_i32] : memref<44x!tpu.dma_semaphore, #tpu.memory_space<semaphore_mem>> -> memref<1x!tpu.dma_semaphore, #tpu.memory_space<semaphore_mem>>
    %11 = tpu.memref_squeeze %10 : memref<1x!tpu.dma_semaphore, #tpu.memory_space<semaphore_mem>> -> memref<!tpu.dma_semaphore, #tpu.memory_space<semaphore_mem>>
    tpu.enqueue_dma source(%8 : memref<1x256xf32, #tpu.memory_space<any>>) target(%9 : memref<1x256xf32, #tpu.memory_space<vmem>>) target_semaphore(%11 : memref<!tpu.dma_semaphore, #tpu.memory_space<semaphore_mem>>)
    %12 = arith.index_cast %arg0 : i32 to index
    %c2 = arith.constant 2 : index
    %13 = memref.load %arg1[%12, %c2] : memref<4x8xi32, #tpu.memory_space<smem>>
    %c2_i32 = arith.constant 2 : i32
    %c0_i32_6 = arith.constant 0 : i32
    %14 = tpu.memref_slice %arg4[%13, %c0_i32_6] : memref<1000x256xf32, #tpu.memory_space<any>> -> memref<1x256xf32, #tpu.memory_space<any>>
    %c2_i32_7 = arith.constant 2 : i32
    %c0_i32_8 = arith.constant 0 : i32
    %15 = tpu.memref_slice %arg7[%c2_i32_7, %c0_i32_8] : memref<48x256xf32, #tpu.memory_space<vmem>> -> memref<1x256xf32, #tpu.memory_space<vmem>>
    %16 = tpu.memref_slice %arg8[%c2_i32] : memref<44x!tpu.dma_semaphore, #tpu.memory_space<semaphore_mem>> -> memref<1x!tpu.dma_semaphore, #tpu.memory_space<semaphore_mem>>
    %17 = tpu.memref_squeeze %16 : memref<1x!tpu.dma_semaphore, #tpu.memory_space<semaphore_mem>> -> memref<!tpu.dma_semaphore, #tpu.memory_space<semaphore_mem>>
    tpu.enqueue_dma source(%14 : memref<1x256xf32, #tpu.memory_space<any>>) target(%15 : memref<1x256xf32, #tpu.memory_space<vmem>>) target_semaphore(%17 : memref<!tpu.dma_semaphore, #tpu.memory_space<semaphore_mem>>)
    %18 = arith.index_cast %arg0 : i32 to index
    %c3 = arith.constant 3 : index
    %19 = memref.load %arg1[%18, %c3] : memref<4x8xi32, #tpu.memory_space<smem>>
    %c3_i32 = arith.constant 3 : i32
    %c0_i32_9 = arith.constant 0 : i32
    %20 = tpu.memref_slice %arg4[%19, %c0_i32_9] : memref<1000x256xf32, #tpu.memory_space<any>> -> memref<1x256xf32, #tpu.memory_space<any>>
    %c3_i32_10 = arith.constant 3 : i32
    %c0_i32_11 = arith.constant 0 : i32
    %21 = tpu.memref_slice %arg7[%c3_i32_10, %c0_i32_11] : memref<48x256xf32, #tpu.memory_space<vmem>> -> memref<1x256xf32, #tpu.memory_space<vmem>>
    %22 = tpu.memref_slice %arg8[%c3_i32] : memref<44x!tpu.dma_semaphore, #tpu.memory_space<semaphore_mem>> -> memref<1x!tpu.dma_semaphore, #tpu.memory_space<semaphore_mem>>
    %23 = tpu.memref_squeeze %22 : memref<1x!tpu.dma_semaphore, #tpu.memory_space<semaphore_mem>> -> memref<!tpu.dma_semaphore, #tpu.memory_space<semaphore_mem>>
    tpu.enqueue_dma source(%20 : memref<1x256xf32, #tpu.memory_space<any>>) target(%21 : memref<1x256xf32, #tpu.memory_space<vmem>>) target_semaphore(%23 : memref<!tpu.dma_semaphore, #tpu.memory_space<semaphore_mem>>)
    %24 = arith.index_cast %arg0 : i32 to index
    %c4 = arith.constant 4 : index
    %25 = memref.load %arg1[%24, %c4] : memref<4x8xi32, #tpu.memory_space<smem>>
    %c4_i32 = arith.constant 4 : i32
    %c0_i32_12 = arith.constant 0 : i32
    %26 = tpu.memref_slice %arg4[%25, %c0_i32_12] : memref<1000x256xf32, #tpu.memory_space<any>> -> memref<1x256xf32, #tpu.memory_space<any>>
    %c4_i32_13 = arith.constant 4 : i32
    %c0_i32_14 = arith.constant 0 : i32
    %27 = tpu.memref_slice %arg7[%c4_i32_13, %c0_i32_14] : memref<48x256xf32, #tpu.memory_space<vmem>> -> memref<1x256xf32, #tpu.memory_space<vmem>>
    %28 = tpu.memref_slice %arg8[%c4_i32] : memref<44x!tpu.dma_semaphore, #tpu.memory_space<semaphore_mem>> -> memref<1x!tpu.dma_semaphore, #tpu.memory_space<semaphore_mem>>
    %29 = tpu.memref_squeeze %28 : memref<1x!tpu.dma_semaphore, #tpu.memory_space<semaphore_mem>> -> memref<!tpu.dma_semaphore, #tpu.memory_space<semaphore_mem>>
    tpu.enqueue_dma source(%26 : memref<1x256xf32, #tpu.memory_space<any>>) target(%27 : memref<1x256xf32, #tpu.memory_space<vmem>>) target_semaphore(%29 : memref<!tpu.dma_semaphore, #tpu.memory_space<semaphore_mem>>)
    %30 = arith.index_cast %arg0 : i32 to index
    %c5 = arith.constant 5 : index
    %31 = memref.load %arg1[%30, %c5] : memref<4x8xi32, #tpu.memory_space<smem>>
    %c5_i32 = arith.constant 5 : i32
    %c0_i32_15 = arith.constant 0 : i32
    %32 = tpu.memref_slice %arg4[%31, %c0_i32_15] : memref<1000x256xf32, #tpu.memory_space<any>> -> memref<1x256xf32, #tpu.memory_space<any>>
    %c5_i32_16 = arith.constant 5 : i32
    %c0_i32_17 = arith.constant 0 : i32
    %33 = tpu.memref_slice %arg7[%c5_i32_16, %c0_i32_17] : memref<48x256xf32, #tpu.memory_space<vmem>> -> memref<1x256xf32, #tpu.memory_space<vmem>>
    %34 = tpu.memref_slice %arg8[%c5_i32] : memref<44x!tpu.dma_semaphore, #tpu.memory_space<semaphore_mem>> -> memref<1x!tpu.dma_semaphore, #tpu.memory_space<semaphore_mem>>
    %35 = tpu.memref_squeeze %34 : memref<1x!tpu.dma_semaphore, #tpu.memory_space<semaphore_mem>> -> memref<!tpu.dma_semaphore, #tpu.memory_space<semaphore_mem>>
    tpu.enqueue_dma source(%32 : memref<1x256xf32, #tpu.memory_space<any>>) target(%33 : memref<1x256xf32, #tpu.memory_space<vmem>>) target_semaphore(%35 : memref<!tpu.dma_semaphore, #tpu.memory_space<semaphore_mem>>)
    %36 = arith.index_cast %arg0 : i32 to index
    %c6 = arith.constant 6 : index
    %37 = memref.load %arg1[%36, %c6] : memref<4x8xi32, #tpu.memory_space<smem>>
    %c6_i32 = arith.constant 6 : i32
    %c0_i32_18 = arith.constant 0 : i32
    %38 = tpu.memref_slice %arg4[%37, %c0_i32_18] : memref<1000x256xf32, #tpu.memory_space<any>> -> memref<1x256xf32, #tpu.memory_space<any>>
    %c6_i32_19 = arith.constant 6 : i32
    %c0_i32_20 = arith.constant 0 : i32
    %39 = tpu.memref_slice %arg7[%c6_i32_19, %c0_i32_20] : memref<48x256xf32, #tpu.memory_space<vmem>> -> memref<1x256xf32, #tpu.memory_space<vmem>>
    %40 = tpu.memref_slice %arg8[%c6_i32] : memref<44x!tpu.dma_semaphore, #tpu.memory_space<semaphore_mem>> -> memref<1x!tpu.dma_semaphore, #tpu.memory_space<semaphore_mem>>
    %41 = tpu.memref_squeeze %40 : memref<1x!tpu.dma_semaphore, #tpu.memory_space<semaphore_mem>> -> memref<!tpu.dma_semaphore, #tpu.memory_space<semaphore_mem>>
    tpu.enqueue_dma source(%38 : memref<1x256xf32, #tpu.memory_space<any>>) target(%39 : memref<1x256xf32, #tpu.memory_space<vmem>>) target_semaphore(%41 : memref<!tpu.dma_semaphore, #tpu.memory_space<semaphore_mem>>)
    %42 = arith.index_cast %arg0 : i32 to index
    %c7 = arith.constant 7 : index
    %43 = memref.load %arg1[%42, %c7] : memref<4x8xi32, #tpu.memory_space<smem>>
    %c7_i32 = arith.constant 7 : i32
    %c0_i32_21 = arith.constant 0 : i32
    %44 = tpu.memref_slice %arg4[%43, %c0_i32_21] : memref<1000x256xf32, #tpu.memory_space<any>> -> memref<1x256xf32, #tpu.memory_space<any>>
    %c7_i32_22 = arith.constant 7 : i32
    %c0_i32_23 = arith.constant 0 : i32
    %45 = tpu.memref_slice %arg7[%c7_i32_22, %c0_i32_23] : memref<48x256xf32, #tpu.memory_space<vmem>> -> memref<1x256xf32, #tpu.memory_space<vmem>>
    %46 = tpu.memref_slice %arg8[%c7_i32] : memref<44x!tpu.dma_semaphore, #tpu.memory_space<semaphore_mem>> -> memref<1x!tpu.dma_semaphore, #tpu.memory_space<semaphore_mem>>
    %47 = tpu.memref_squeeze %46 : memref<1x!tpu.dma_semaphore, #tpu.memory_space<semaphore_mem>> -> memref<!tpu.dma_semaphore, #tpu.memory_space<semaphore_mem>>
    tpu.enqueue_dma source(%44 : memref<1x256xf32, #tpu.memory_space<any>>) target(%45 : memref<1x256xf32, #tpu.memory_space<vmem>>) target_semaphore(%47 : memref<!tpu.dma_semaphore, #tpu.memory_space<semaphore_mem>>)
    %48 = arith.index_cast %arg0 : i32 to index
    %c0_24 = arith.constant 0 : index
    %49 = memref.load %arg2[%48, %c0_24] : memref<4x4xi32, #tpu.memory_space<smem>>
    %c8_i32 = arith.constant 8 : i32
    %c0_i32_25 = arith.constant 0 : i32
    %50 = tpu.memref_slice %arg5[%49, %c0_i32_25] : memref<500x256xf32, #tpu.memory_space<any>> -> memref<1x256xf32, #tpu.memory_space<any>>
    %c8_i32_26 = arith.constant 8 : i32
    %c0_i32_27 = arith.constant 0 : i32
    %51 = tpu.memref_slice %arg7[%c8_i32_26, %c0_i32_27] : memref<48x256xf32, #tpu.memory_space<vmem>> -> memref<1x256xf32, #tpu.memory_space<vmem>>
    %52 = tpu.memref_slice %arg8[%c8_i32] : memref<44x!tpu.dma_semaphore, #tpu.memory_space<semaphore_mem>> -> memref<1x!tpu.dma_semaphore, #tpu.memory_space<semaphore_mem>>
    %53 = tpu.memref_squeeze %52 : memref<1x!tpu.dma_semaphore, #tpu.memory_space<semaphore_mem>> -> memref<!tpu.dma_semaphore, #tpu.memory_space<semaphore_mem>>
    tpu.enqueue_dma source(%50 : memref<1x256xf32, #tpu.memory_space<any>>) target(%51 : memref<1x256xf32, #tpu.memory_space<vmem>>) target_semaphore(%53 : memref<!tpu.dma_semaphore, #tpu.memory_space<semaphore_mem>>)
    %54 = arith.index_cast %arg0 : i32 to index
    %c1_28 = arith.constant 1 : index
    %55 = memref.load %arg2[%54, %c1_28] : memref<4x4xi32, #tpu.memory_space<smem>>
    %c9_i32 = arith.constant 9 : i32
    %c0_i32_29 = arith.constant 0 : i32
    %56 = tpu.memref_slice %arg5[%55, %c0_i32_29] : memref<500x256xf32, #tpu.memory_space<any>> -> memref<1x256xf32, #tpu.memory_space<any>>
    %c9_i32_30 = arith.constant 9 : i32
    %c0_i32_31 = arith.constant 0 : i32
    %57 = tpu.memref_slice %arg7[%c9_i32_30, %c0_i32_31] : memref<48x256xf32, #tpu.memory_space<vmem>> -> memref<1x256xf32, #tpu.memory_space<vmem>>
    %58 = tpu.memref_slice %arg8[%c9_i32] : memref<44x!tpu.dma_semaphore, #tpu.memory_space<semaphore_mem>> -> memref<1x!tpu.dma_semaphore, #tpu.memory_space<semaphore_mem>>
    %59 = tpu.memref_squeeze %58 : memref<1x!tpu.dma_semaphore, #tpu.memory_space<semaphore_mem>> -> memref<!tpu.dma_semaphore, #tpu.memory_space<semaphore_mem>>
    tpu.enqueue_dma source(%56 : memref<1x256xf32, #tpu.memory_space<any>>) target(%57 : memref<1x256xf32, #tpu.memory_space<vmem>>) target_semaphore(%59 : memref<!tpu.dma_semaphore, #tpu.memory_space<semaphore_mem>>)
    %60 = arith.index_cast %arg0 : i32 to index
    %c2_32 = arith.constant 2 : index
    %61 = memref.load %arg2[%60, %c2_32] : memref<4x4xi32, #tpu.memory_space<smem>>
    %c10_i32 = arith.constant 10 : i32
    %c0_i32_33 = arith.constant 0 : i32
    %62 = tpu.memref_slice %arg5[%61, %c0_i32_33] : memref<500x256xf32, #tpu.memory_space<any>> -> memref<1x256xf32, #tpu.memory_space<any>>
    %c10_i32_34 = arith.constant 10 : i32
    %c0_i32_35 = arith.constant 0 : i32
    %63 = tpu.memref_slice %arg7[%c10_i32_34, %c0_i32_35] : memref<48x256xf32, #tpu.memory_space<vmem>> -> memref<1x256xf32, #tpu.memory_space<vmem>>
    %64 = tpu.memref_slice %arg8[%c10_i32] : memref<44x!tpu.dma_semaphore, #tpu.memory_space<semaphore_mem>> -> memref<1x!tpu.dma_semaphore, #tpu.memory_space<semaphore_mem>>
    %65 = tpu.memref_squeeze %64 : memref<1x!tpu.dma_semaphore, #tpu.memory_space<semaphore_mem>> -> memref<!tpu.dma_semaphore, #tpu.memory_space<semaphore_mem>>
    tpu.enqueue_dma source(%62 : memref<1x256xf32, #tpu.memory_space<any>>) target(%63 : memref<1x256xf32, #tpu.memory_space<vmem>>) target_semaphore(%65 : memref<!tpu.dma_semaphore, #tpu.memory_space<semaphore_mem>>)
    %66 = arith.index_cast %arg0 : i32 to index
    %c3_36 = arith.constant 3 : index
    %67 = memref.load %arg2[%66, %c3_36] : memref<4x4xi32, #tpu.memory_space<smem>>
    %c11_i32 = arith.constant 11 : i32
    %c0_i32_37 = arith.constant 0 : i32
    %68 = tpu.memref_slice %arg5[%67, %c0_i32_37] : memref<500x256xf32, #tpu.memory_space<any>> -> memref<1x256xf32, #tpu.memory_space<any>>
    %c11_i32_38 = arith.constant 11 : i32
    %c0_i32_39 = arith.constant 0 : i32
    %69 = tpu.memref_slice %arg7[%c11_i32_38, %c0_i32_39] : memref<48x256xf32, #tpu.memory_space<vmem>> -> memref<1x256xf32, #tpu.memory_space<vmem>>
    %70 = tpu.memref_slice %arg8[%c11_i32] : memref<44x!tpu.dma_semaphore, #tpu.memory_space<semaphore_mem>> -> memref<1x!tpu.dma_semaphore, #tpu.memory_space<semaphore_mem>>
    %71 = tpu.memref_squeeze %70 : memref<1x!tpu.dma_semaphore, #tpu.memory_space<semaphore_mem>> -> memref<!tpu.dma_semaphore, #tpu.memory_space<semaphore_mem>>
    tpu.enqueue_dma source(%68 : memref<1x256xf32, #tpu.memory_space<any>>) target(%69 : memref<1x256xf32, #tpu.memory_space<vmem>>) target_semaphore(%71 : memref<!tpu.dma_semaphore, #tpu.memory_space<semaphore_mem>>)
    %72 = arith.index_cast %arg0 : i32 to index
    %c0_40 = arith.constant 0 : index
    %73 = memref.load %arg3[%72, %c0_40] : memref<4x32xi32, #tpu.memory_space<smem>>
    %c12_i32 = arith.constant 12 : i32
    %c0_i32_41 = arith.constant 0 : i32
    %74 = tpu.memref_slice %arg5[%73, %c0_i32_41] : memref<500x256xf32, #tpu.memory_space<any>> -> memref<1x256xf32, #tpu.memory_space<any>>
    %c12_i32_42 = arith.constant 12 : i32
    %c0_i32_43 = arith.constant 0 : i32
    %75 = tpu.memref_slice %arg7[%c12_i32_42, %c0_i32_43] : memref<48x256xf32, #tpu.memory_space<vmem>> -> memref<1x256xf32, #tpu.memory_space<vmem>>
    %76 = tpu.memref_slice %arg8[%c12_i32] : memref<44x!tpu.dma_semaphore, #tpu.memory_space<semaphore_mem>> -> memref<1x!tpu.dma_semaphore, #tpu.memory_space<semaphore_mem>>
    %77 = tpu.memref_squeeze %76 : memref<1x!tpu.dma_semaphore, #tpu.memory_space<semaphore_mem>> -> memref<!tpu.dma_semaphore, #tpu.memory_space<semaphore_mem>>
    tpu.enqueue_dma source(%74 : memref<1x256xf32, #tpu.memory_space<any>>) target(%75 : memref<1x256xf32, #tpu.memory_space<vmem>>) target_semaphore(%77 : memref<!tpu.dma_semaphore, #tpu.memory_space<semaphore_mem>>)
    %78 = arith.index_cast %arg0 : i32 to index
    %c1_44 = arith.constant 1 : index
    %79 = memref.load %arg3[%78, %c1_44] : memref<4x32xi32, #tpu.memory_space<smem>>
    %c13_i32 = arith.constant 13 : i32
    %c0_i32_45 = arith.constant 0 : i32
    %80 = tpu.memref_slice %arg5[%79, %c0_i32_45] : memref<500x256xf32, #tpu.memory_space<any>> -> memref<1x256xf32, #tpu.memory_space<any>>
    %c13_i32_46 = arith.constant 13 : i32
    %c0_i32_47 = arith.constant 0 : i32
    %81 = tpu.memref_slice %arg7[%c13_i32_46, %c0_i32_47] : memref<48x256xf32, #tpu.memory_space<vmem>> -> memref<1x256xf32, #tpu.memory_space<vmem>>
    %82 = tpu.memref_slice %arg8[%c13_i32] : memref<44x!tpu.dma_semaphore, #tpu.memory_space<semaphore_mem>> -> memref<1x!tpu.dma_semaphore, #tpu.memory_space<semaphore_mem>>
    %83 = tpu.memref_squeeze %82 : memref<1x!tpu.dma_semaphore, #tpu.memory_space<semaphore_mem>> -> memref<!tpu.dma_semaphore, #tpu.memory_space<semaphore_mem>>
    tpu.enqueue_dma source(%80 : memref<1x256xf32, #tpu.memory_space<any>>) target(%81 : memref<1x256xf32, #tpu.memory_space<vmem>>) target_semaphore(%83 : memref<!tpu.dma_semaphore, #tpu.memory_space<semaphore_mem>>)
    %84 = arith.index_cast %arg0 : i32 to index
    %c2_48 = arith.constant 2 : index
    %85 = memref.load %arg3[%84, %c2_48] : memref<4x32xi32, #tpu.memory_space<smem>>
    %c14_i32 = arith.constant 14 : i32
    %c0_i32_49 = arith.constant 0 : i32
    %86 = tpu.memref_slice %arg5[%85, %c0_i32_49] : memref<500x256xf32, #tpu.memory_space<any>> -> memref<1x256xf32, #tpu.memory_space<any>>
    %c14_i32_50 = arith.constant 14 : i32
    %c0_i32_51 = arith.constant 0 : i32
    %87 = tpu.memref_slice %arg7[%c14_i32_50, %c0_i32_51] : memref<48x256xf32, #tpu.memory_space<vmem>> -> memref<1x256xf32, #tpu.memory_space<vmem>>
    %88 = tpu.memref_slice %arg8[%c14_i32] : memref<44x!tpu.dma_semaphore, #tpu.memory_space<semaphore_mem>> -> memref<1x!tpu.dma_semaphore, #tpu.memory_space<semaphore_mem>>
    %89 = tpu.memref_squeeze %88 : memref<1x!tpu.dma_semaphore, #tpu.memory_space<semaphore_mem>> -> memref<!tpu.dma_semaphore, #tpu.memory_space<semaphore_mem>>
    tpu.enqueue_dma source(%86 : memref<1x256xf32, #tpu.memory_space<any>>) target(%87 : memref<1x256xf32, #tpu.memory_space<vmem>>) target_semaphore(%89 : memref<!tpu.dma_semaphore, #tpu.memory_space<semaphore_mem>>)
    %90 = arith.index_cast %arg0 : i32 to index
    %c3_52 = arith.constant 3 : index
    %91 = memref.load %arg3[%90, %c3_52] : memref<4x32xi32, #tpu.memory_space<smem>>
    %c15_i32 = arith.constant 15 : i32
    %c0_i32_53 = arith.constant 0 : i32
    %92 = tpu.memref_slice %arg5[%91, %c0_i32_53] : memref<500x256xf32, #tpu.memory_space<any>> -> memref<1x256xf32, #tpu.memory_space<any>>
    %c15_i32_54 = arith.constant 15 : i32
    %c0_i32_55 = arith.constant 0 : i32
    %93 = tpu.memref_slice %arg7[%c15_i32_54, %c0_i32_55] : memref<48x256xf32, #tpu.memory_space<vmem>> -> memref<1x256xf32, #tpu.memory_space<vmem>>
    %94 = tpu.memref_slice %arg8[%c15_i32] : memref<44x!tpu.dma_semaphore, #tpu.memory_space<semaphore_mem>> -> memref<1x!tpu.dma_semaphore, #tpu.memory_space<semaphore_mem>>
    %95 = tpu.memref_squeeze %94 : memref<1x!tpu.dma_semaphore, #tpu.memory_space<semaphore_mem>> -> memref<!tpu.dma_semaphore, #tpu.memory_space<semaphore_mem>>
    tpu.enqueue_dma source(%92 : memref<1x256xf32, #tpu.memory_space<any>>) target(%93 : memref<1x256xf32, #tpu.memory_space<vmem>>) target_semaphore(%95 : memref<!tpu.dma_semaphore, #tpu.memory_space<semaphore_mem>>)
    %96 = arith.index_cast %arg0 : i32 to index
    %c4_56 = arith.constant 4 : index
    %97 = memref.load %arg3[%96, %c4_56] : memref<4x32xi32, #tpu.memory_space<smem>>
    %c16_i32 = arith.constant 16 : i32
    %c0_i32_57 = arith.constant 0 : i32
    %98 = tpu.memref_slice %arg5[%97, %c0_i32_57] : memref<500x256xf32, #tpu.memory_space<any>> -> memref<1x256xf32, #tpu.memory_space<any>>
    %c16_i32_58 = arith.constant 16 : i32
    %c0_i32_59 = arith.constant 0 : i32
    %99 = tpu.memref_slice %arg7[%c16_i32_58, %c0_i32_59] : memref<48x256xf32, #tpu.memory_space<vmem>> -> memref<1x256xf32, #tpu.memory_space<vmem>>
    %100 = tpu.memref_slice %arg8[%c16_i32] : memref<44x!tpu.dma_semaphore, #tpu.memory_space<semaphore_mem>> -> memref<1x!tpu.dma_semaphore, #tpu.memory_space<semaphore_mem>>
    %101 = tpu.memref_squeeze %100 : memref<1x!tpu.dma_semaphore, #tpu.memory_space<semaphore_mem>> -> memref<!tpu.dma_semaphore, #tpu.memory_space<semaphore_mem>>
    tpu.enqueue_dma source(%98 : memref<1x256xf32, #tpu.memory_space<any>>) target(%99 : memref<1x256xf32, #tpu.memory_space<vmem>>) target_semaphore(%101 : memref<!tpu.dma_semaphore, #tpu.memory_space<semaphore_mem>>)
    %102 = arith.index_cast %arg0 : i32 to index
    %c5_60 = arith.constant 5 : index
    %103 = memref.load %arg3[%102, %c5_60] : memref<4x32xi32, #tpu.memory_space<smem>>
    %c17_i32 = arith.constant 17 : i32
    %c0_i32_61 = arith.constant 0 : i32
    %104 = tpu.memref_slice %arg5[%103, %c0_i32_61] : memref<500x256xf32, #tpu.memory_space<any>> -> memref<1x256xf32, #tpu.memory_space<any>>
    %c17_i32_62 = arith.constant 17 : i32
    %c0_i32_63 = arith.constant 0 : i32
    %105 = tpu.memref_slice %arg7[%c17_i32_62, %c0_i32_63] : memref<48x256xf32, #tpu.memory_space<vmem>> -> memref<1x256xf32, #tpu.memory_space<vmem>>
    %106 = tpu.memref_slice %arg8[%c17_i32] : memref<44x!tpu.dma_semaphore, #tpu.memory_space<semaphore_mem>> -> memref<1x!tpu.dma_semaphore, #tpu.memory_space<semaphore_mem>>
    %107 = tpu.memref_squeeze %106 : memref<1x!tpu.dma_semaphore, #tpu.memory_space<semaphore_mem>> -> memref<!tpu.dma_semaphore, #tpu.memory_space<semaphore_mem>>
    tpu.enqueue_dma source(%104 : memref<1x256xf32, #tpu.memory_space<any>>) target(%105 : memref<1x256xf32, #tpu.memory_space<vmem>>) target_semaphore(%107 : memref<!tpu.dma_semaphore, #tpu.memory_space<semaphore_mem>>)
    %108 = arith.index_cast %arg0 : i32 to index
    %c6_64 = arith.constant 6 : index
    %109 = memref.load %arg3[%108, %c6_64] : memref<4x32xi32, #tpu.memory_space<smem>>
    %c18_i32 = arith.constant 18 : i32
    %c0_i32_65 = arith.constant 0 : i32
    %110 = tpu.memref_slice %arg5[%109, %c0_i32_65] : memref<500x256xf32, #tpu.memory_space<any>> -> memref<1x256xf32, #tpu.memory_space<any>>
    %c18_i32_66 = arith.constant 18 : i32
    %c0_i32_67 = arith.constant 0 : i32
    %111 = tpu.memref_slice %arg7[%c18_i32_66, %c0_i32_67] : memref<48x256xf32, #tpu.memory_space<vmem>> -> memref<1x256xf32, #tpu.memory_space<vmem>>
    %112 = tpu.memref_slice %arg8[%c18_i32] : memref<44x!tpu.dma_semaphore, #tpu.memory_space<semaphore_mem>> -> memref<1x!tpu.dma_semaphore, #tpu.memory_space<semaphore_mem>>
    %113 = tpu.memref_squeeze %112 : memref<1x!tpu.dma_semaphore, #tpu.memory_space<semaphore_mem>> -> memref<!tpu.dma_semaphore, #tpu.memory_space<semaphore_mem>>
    tpu.enqueue_dma source(%110 : memref<1x256xf32, #tpu.memory_space<any>>) target(%111 : memref<1x256xf32, #tpu.memory_space<vmem>>) target_semaphore(%113 : memref<!tpu.dma_semaphore, #tpu.memory_space<semaphore_mem>>)
    %114 = arith.index_cast %arg0 : i32 to index
    %c7_68 = arith.constant 7 : index
    %115 = memref.load %arg3[%114, %c7_68] : memref<4x32xi32, #tpu.memory_space<smem>>
    %c19_i32 = arith.constant 19 : i32
    %c0_i32_69 = arith.constant 0 : i32
    %116 = tpu.memref_slice %arg5[%115, %c0_i32_69] : memref<500x256xf32, #tpu.memory_space<any>> -> memref<1x256xf32, #tpu.memory_space<any>>
    %c19_i32_70 = arith.constant 19 : i32
    %c0_i32_71 = arith.constant 0 : i32
    %117 = tpu.memref_slice %arg7[%c19_i32_70, %c0_i32_71] : memref<48x256xf32, #tpu.memory_space<vmem>> -> memref<1x256xf32, #tpu.memory_space<vmem>>
    %118 = tpu.memref_slice %arg8[%c19_i32] : memref<44x!tpu.dma_semaphore, #tpu.memory_space<semaphore_mem>> -> memref<1x!tpu.dma_semaphore, #tpu.memory_space<semaphore_mem>>
    %119 = tpu.memref_squeeze %118 : memref<1x!tpu.dma_semaphore, #tpu.memory_space<semaphore_mem>> -> memref<!tpu.dma_semaphore, #tpu.memory_space<semaphore_mem>>
    tpu.enqueue_dma source(%116 : memref<1x256xf32, #tpu.memory_space<any>>) target(%117 : memref<1x256xf32, #tpu.memory_space<vmem>>) target_semaphore(%119 : memref<!tpu.dma_semaphore, #tpu.memory_space<semaphore_mem>>)
    %120 = arith.index_cast %arg0 : i32 to index
    %c8 = arith.constant 8 : index
    %121 = memref.load %arg3[%120, %c8] : memref<4x32xi32, #tpu.memory_space<smem>>
    %c20_i32 = arith.constant 20 : i32
    %c0_i32_72 = arith.constant 0 : i32
    %122 = tpu.memref_slice %arg5[%121, %c0_i32_72] : memref<500x256xf32, #tpu.memory_space<any>> -> memref<1x256xf32, #tpu.memory_space<any>>
    %c20_i32_73 = arith.constant 20 : i32
    %c0_i32_74 = arith.constant 0 : i32
    %123 = tpu.memref_slice %arg7[%c20_i32_73, %c0_i32_74] : memref<48x256xf32, #tpu.memory_space<vmem>> -> memref<1x256xf32, #tpu.memory_space<vmem>>
    %124 = tpu.memref_slice %arg8[%c20_i32] : memref<44x!tpu.dma_semaphore, #tpu.memory_space<semaphore_mem>> -> memref<1x!tpu.dma_semaphore, #tpu.memory_space<semaphore_mem>>
    %125 = tpu.memref_squeeze %124 : memref<1x!tpu.dma_semaphore, #tpu.memory_space<semaphore_mem>> -> memref<!tpu.dma_semaphore, #tpu.memory_space<semaphore_mem>>
    tpu.enqueue_dma source(%122 : memref<1x256xf32, #tpu.memory_space<any>>) target(%123 : memref<1x256xf32, #tpu.memory_space<vmem>>) target_semaphore(%125 : memref<!tpu.dma_semaphore, #tpu.memory_space<semaphore_mem>>)
    %126 = arith.index_cast %arg0 : i32 to index
    %c9 = arith.constant 9 : index
    %127 = memref.load %arg3[%126, %c9] : memref<4x32xi32, #tpu.memory_space<smem>>
    %c21_i32 = arith.constant 21 : i32
    %c0_i32_75 = arith.constant 0 : i32
    %128 = tpu.memref_slice %arg5[%127, %c0_i32_75] : memref<500x256xf32, #tpu.memory_space<any>> -> memref<1x256xf32, #tpu.memory_space<any>>
    %c21_i32_76 = arith.constant 21 : i32
    %c0_i32_77 = arith.constant 0 : i32
    %129 = tpu.memref_slice %arg7[%c21_i32_76, %c0_i32_77] : memref<48x256xf32, #tpu.memory_space<vmem>> -> memref<1x256xf32, #tpu.memory_space<vmem>>
    %130 = tpu.memref_slice %arg8[%c21_i32] : memref<44x!tpu.dma_semaphore, #tpu.memory_space<semaphore_mem>> -> memref<1x!tpu.dma_semaphore, #tpu.memory_space<semaphore_mem>>
    %131 = tpu.memref_squeeze %130 : memref<1x!tpu.dma_semaphore, #tpu.memory_space<semaphore_mem>> -> memref<!tpu.dma_semaphore, #tpu.memory_space<semaphore_mem>>
    tpu.enqueue_dma source(%128 : memref<1x256xf32, #tpu.memory_space<any>>) target(%129 : memref<1x256xf32, #tpu.memory_space<vmem>>) target_semaphore(%131 : memref<!tpu.dma_semaphore, #tpu.memory_space<semaphore_mem>>)
    %132 = arith.index_cast %arg0 : i32 to index
    %c10 = arith.constant 10 : index
    %133 = memref.load %arg3[%132, %c10] : memref<4x32xi32, #tpu.memory_space<smem>>
    %c22_i32 = arith.constant 22 : i32
    %c0_i32_78 = arith.constant 0 : i32
    %134 = tpu.memref_slice %arg5[%133, %c0_i32_78] : memref<500x256xf32, #tpu.memory_space<any>> -> memref<1x256xf32, #tpu.memory_space<any>>
    %c22_i32_79 = arith.constant 22 : i32
    %c0_i32_80 = arith.constant 0 : i32
    %135 = tpu.memref_slice %arg7[%c22_i32_79, %c0_i32_80] : memref<48x256xf32, #tpu.memory_space<vmem>> -> memref<1x256xf32, #tpu.memory_space<vmem>>
    %136 = tpu.memref_slice %arg8[%c22_i32] : memref<44x!tpu.dma_semaphore, #tpu.memory_space<semaphore_mem>> -> memref<1x!tpu.dma_semaphore, #tpu.memory_space<semaphore_mem>>
    %137 = tpu.memref_squeeze %136 : memref<1x!tpu.dma_semaphore, #tpu.memory_space<semaphore_mem>> -> memref<!tpu.dma_semaphore, #tpu.memory_space<semaphore_mem>>
    tpu.enqueue_dma source(%134 : memref<1x256xf32, #tpu.memory_space<any>>) target(%135 : memref<1x256xf32, #tpu.memory_space<vmem>>) target_semaphore(%137 : memref<!tpu.dma_semaphore, #tpu.memory_space<semaphore_mem>>)
    %138 = arith.index_cast %arg0 : i32 to index
    %c11 = arith.constant 11 : index
    %139 = memref.load %arg3[%138, %c11] : memref<4x32xi32, #tpu.memory_space<smem>>
    %c23_i32 = arith.constant 23 : i32
    %c0_i32_81 = arith.constant 0 : i32
    %140 = tpu.memref_slice %arg5[%139, %c0_i32_81] : memref<500x256xf32, #tpu.memory_space<any>> -> memref<1x256xf32, #tpu.memory_space<any>>
    %c23_i32_82 = arith.constant 23 : i32
    %c0_i32_83 = arith.constant 0 : i32
    %141 = tpu.memref_slice %arg7[%c23_i32_82, %c0_i32_83] : memref<48x256xf32, #tpu.memory_space<vmem>> -> memref<1x256xf32, #tpu.memory_space<vmem>>
    %142 = tpu.memref_slice %arg8[%c23_i32] : memref<44x!tpu.dma_semaphore, #tpu.memory_space<semaphore_mem>> -> memref<1x!tpu.dma_semaphore, #tpu.memory_space<semaphore_mem>>
    %143 = tpu.memref_squeeze %142 : memref<1x!tpu.dma_semaphore, #tpu.memory_space<semaphore_mem>> -> memref<!tpu.dma_semaphore, #tpu.memory_space<semaphore_mem>>
    tpu.enqueue_dma source(%140 : memref<1x256xf32, #tpu.memory_space<any>>) target(%141 : memref<1x256xf32, #tpu.memory_space<vmem>>) target_semaphore(%143 : memref<!tpu.dma_semaphore, #tpu.memory_space<semaphore_mem>>)
    %144 = arith.index_cast %arg0 : i32 to index
    %c12 = arith.constant 12 : index
    %145 = memref.load %arg3[%144, %c12] : memref<4x32xi32, #tpu.memory_space<smem>>
    %c24_i32 = arith.constant 24 : i32
    %c0_i32_84 = arith.constant 0 : i32
    %146 = tpu.memref_slice %arg5[%145, %c0_i32_84] : memref<500x256xf32, #tpu.memory_space<any>> -> memref<1x256xf32, #tpu.memory_space<any>>
    %c24_i32_85 = arith.constant 24 : i32
    %c0_i32_86 = arith.constant 0 : i32
    %147 = tpu.memref_slice %arg7[%c24_i32_85, %c0_i32_86] : memref<48x256xf32, #tpu.memory_space<vmem>> -> memref<1x256xf32, #tpu.memory_space<vmem>>
    %148 = tpu.memref_slice %arg8[%c24_i32] : memref<44x!tpu.dma_semaphore, #tpu.memory_space<semaphore_mem>> -> memref<1x!tpu.dma_semaphore, #tpu.memory_space<semaphore_mem>>
    %149 = tpu.memref_squeeze %148 : memref<1x!tpu.dma_semaphore, #tpu.memory_space<semaphore_mem>> -> memref<!tpu.dma_semaphore, #tpu.memory_space<semaphore_mem>>
    tpu.enqueue_dma source(%146 : memref<1x256xf32, #tpu.memory_space<any>>) target(%147 : memref<1x256xf32, #tpu.memory_space<vmem>>) target_semaphore(%149 : memref<!tpu.dma_semaphore, #tpu.memory_space<semaphore_mem>>)
    %150 = arith.index_cast %arg0 : i32 to index
    %c13 = arith.constant 13 : index
    %151 = memref.load %arg3[%150, %c13] : memref<4x32xi32, #tpu.memory_space<smem>>
    %c25_i32 = arith.constant 25 : i32
    %c0_i32_87 = arith.constant 0 : i32
    %152 = tpu.memref_slice %arg5[%151, %c0_i32_87] : memref<500x256xf32, #tpu.memory_space<any>> -> memref<1x256xf32, #tpu.memory_space<any>>
    %c25_i32_88 = arith.constant 25 : i32
    %c0_i32_89 = arith.constant 0 : i32
    %153 = tpu.memref_slice %arg7[%c25_i32_88, %c0_i32_89] : memref<48x256xf32, #tpu.memory_space<vmem>> -> memref<1x256xf32, #tpu.memory_space<vmem>>
    %154 = tpu.memref_slice %arg8[%c25_i32] : memref<44x!tpu.dma_semaphore, #tpu.memory_space<semaphore_mem>> -> memref<1x!tpu.dma_semaphore, #tpu.memory_space<semaphore_mem>>
    %155 = tpu.memref_squeeze %154 : memref<1x!tpu.dma_semaphore, #tpu.memory_space<semaphore_mem>> -> memref<!tpu.dma_semaphore, #tpu.memory_space<semaphore_mem>>
    tpu.enqueue_dma source(%152 : memref<1x256xf32, #tpu.memory_space<any>>) target(%153 : memref<1x256xf32, #tpu.memory_space<vmem>>) target_semaphore(%155 : memref<!tpu.dma_semaphore, #tpu.memory_space<semaphore_mem>>)
    %156 = arith.index_cast %arg0 : i32 to index
    %c14 = arith.constant 14 : index
    %157 = memref.load %arg3[%156, %c14] : memref<4x32xi32, #tpu.memory_space<smem>>
    %c26_i32 = arith.constant 26 : i32
    %c0_i32_90 = arith.constant 0 : i32
    %158 = tpu.memref_slice %arg5[%157, %c0_i32_90] : memref<500x256xf32, #tpu.memory_space<any>> -> memref<1x256xf32, #tpu.memory_space<any>>
    %c26_i32_91 = arith.constant 26 : i32
    %c0_i32_92 = arith.constant 0 : i32
    %159 = tpu.memref_slice %arg7[%c26_i32_91, %c0_i32_92] : memref<48x256xf32, #tpu.memory_space<vmem>> -> memref<1x256xf32, #tpu.memory_space<vmem>>
    %160 = tpu.memref_slice %arg8[%c26_i32] : memref<44x!tpu.dma_semaphore, #tpu.memory_space<semaphore_mem>> -> memref<1x!tpu.dma_semaphore, #tpu.memory_space<semaphore_mem>>
    %161 = tpu.memref_squeeze %160 : memref<1x!tpu.dma_semaphore, #tpu.memory_space<semaphore_mem>> -> memref<!tpu.dma_semaphore, #tpu.memory_space<semaphore_mem>>
    tpu.enqueue_dma source(%158 : memref<1x256xf32, #tpu.memory_space<any>>) target(%159 : memref<1x256xf32, #tpu.memory_space<vmem>>) target_semaphore(%161 : memref<!tpu.dma_semaphore, #tpu.memory_space<semaphore_mem>>)
    %162 = arith.index_cast %arg0 : i32 to index
    %c15 = arith.constant 15 : index
    %163 = memref.load %arg3[%162, %c15] : memref<4x32xi32, #tpu.memory_space<smem>>
    %c27_i32 = arith.constant 27 : i32
    %c0_i32_93 = arith.constant 0 : i32
    %164 = tpu.memref_slice %arg5[%163, %c0_i32_93] : memref<500x256xf32, #tpu.memory_space<any>> -> memref<1x256xf32, #tpu.memory_space<any>>
    %c27_i32_94 = arith.constant 27 : i32
    %c0_i32_95 = arith.constant 0 : i32
    %165 = tpu.memref_slice %arg7[%c27_i32_94, %c0_i32_95] : memref<48x256xf32, #tpu.memory_space<vmem>> -> memref<1x256xf32, #tpu.memory_space<vmem>>
    %166 = tpu.memref_slice %arg8[%c27_i32] : memref<44x!tpu.dma_semaphore, #tpu.memory_space<semaphore_mem>> -> memref<1x!tpu.dma_semaphore, #tpu.memory_space<semaphore_mem>>
    %167 = tpu.memref_squeeze %166 : memref<1x!tpu.dma_semaphore, #tpu.memory_space<semaphore_mem>> -> memref<!tpu.dma_semaphore, #tpu.memory_space<semaphore_mem>>
    tpu.enqueue_dma source(%164 : memref<1x256xf32, #tpu.memory_space<any>>) target(%165 : memref<1x256xf32, #tpu.memory_space<vmem>>) target_semaphore(%167 : memref<!tpu.dma_semaphore, #tpu.memory_space<semaphore_mem>>)
    %168 = arith.index_cast %arg0 : i32 to index
    %c16 = arith.constant 16 : index
    %169 = memref.load %arg3[%168, %c16] : memref<4x32xi32, #tpu.memory_space<smem>>
    %c28_i32 = arith.constant 28 : i32
    %c0_i32_96 = arith.constant 0 : i32
    %170 = tpu.memref_slice %arg5[%169, %c0_i32_96] : memref<500x256xf32, #tpu.memory_space<any>> -> memref<1x256xf32, #tpu.memory_space<any>>
    %c28_i32_97 = arith.constant 28 : i32
    %c0_i32_98 = arith.constant 0 : i32
    %171 = tpu.memref_slice %arg7[%c28_i32_97, %c0_i32_98] : memref<48x256xf32, #tpu.memory_space<vmem>> -> memref<1x256xf32, #tpu.memory_space<vmem>>
    %172 = tpu.memref_slice %arg8[%c28_i32] : memref<44x!tpu.dma_semaphore, #tpu.memory_space<semaphore_mem>> -> memref<1x!tpu.dma_semaphore, #tpu.memory_space<semaphore_mem>>
    %173 = tpu.memref_squeeze %172 : memref<1x!tpu.dma_semaphore, #tpu.memory_space<semaphore_mem>> -> memref<!tpu.dma_semaphore, #tpu.memory_space<semaphore_mem>>
    tpu.enqueue_dma source(%170 : memref<1x256xf32, #tpu.memory_space<any>>) target(%171 : memref<1x256xf32, #tpu.memory_space<vmem>>) target_semaphore(%173 : memref<!tpu.dma_semaphore, #tpu.memory_space<semaphore_mem>>)
    %174 = arith.index_cast %arg0 : i32 to index
    %c17 = arith.constant 17 : index
    %175 = memref.load %arg3[%174, %c17] : memref<4x32xi32, #tpu.memory_space<smem>>
    %c29_i32 = arith.constant 29 : i32
    %c0_i32_99 = arith.constant 0 : i32
    %176 = tpu.memref_slice %arg5[%175, %c0_i32_99] : memref<500x256xf32, #tpu.memory_space<any>> -> memref<1x256xf32, #tpu.memory_space<any>>
    %c29_i32_100 = arith.constant 29 : i32
    %c0_i32_101 = arith.constant 0 : i32
    %177 = tpu.memref_slice %arg7[%c29_i32_100, %c0_i32_101] : memref<48x256xf32, #tpu.memory_space<vmem>> -> memref<1x256xf32, #tpu.memory_space<vmem>>
    %178 = tpu.memref_slice %arg8[%c29_i32] : memref<44x!tpu.dma_semaphore, #tpu.memory_space<semaphore_mem>> -> memref<1x!tpu.dma_semaphore, #tpu.memory_space<semaphore_mem>>
    %179 = tpu.memref_squeeze %178 : memref<1x!tpu.dma_semaphore, #tpu.memory_space<semaphore_mem>> -> memref<!tpu.dma_semaphore, #tpu.memory_space<semaphore_mem>>
    tpu.enqueue_dma source(%176 : memref<1x256xf32, #tpu.memory_space<any>>) target(%177 : memref<1x256xf32, #tpu.memory_space<vmem>>) target_semaphore(%179 : memref<!tpu.dma_semaphore, #tpu.memory_space<semaphore_mem>>)
    %180 = arith.index_cast %arg0 : i32 to index
    %c18 = arith.constant 18 : index
    %181 = memref.load %arg3[%180, %c18] : memref<4x32xi32, #tpu.memory_space<smem>>
    %c30_i32 = arith.constant 30 : i32
    %c0_i32_102 = arith.constant 0 : i32
    %182 = tpu.memref_slice %arg5[%181, %c0_i32_102] : memref<500x256xf32, #tpu.memory_space<any>> -> memref<1x256xf32, #tpu.memory_space<any>>
    %c30_i32_103 = arith.constant 30 : i32
    %c0_i32_104 = arith.constant 0 : i32
    %183 = tpu.memref_slice %arg7[%c30_i32_103, %c0_i32_104] : memref<48x256xf32, #tpu.memory_space<vmem>> -> memref<1x256xf32, #tpu.memory_space<vmem>>
    %184 = tpu.memref_slice %arg8[%c30_i32] : memref<44x!tpu.dma_semaphore, #tpu.memory_space<semaphore_mem>> -> memref<1x!tpu.dma_semaphore, #tpu.memory_space<semaphore_mem>>
    %185 = tpu.memref_squeeze %184 : memref<1x!tpu.dma_semaphore, #tpu.memory_space<semaphore_mem>> -> memref<!tpu.dma_semaphore, #tpu.memory_space<semaphore_mem>>
    tpu.enqueue_dma source(%182 : memref<1x256xf32, #tpu.memory_space<any>>) target(%183 : memref<1x256xf32, #tpu.memory_space<vmem>>) target_semaphore(%185 : memref<!tpu.dma_semaphore, #tpu.memory_space<semaphore_mem>>)
    %186 = arith.index_cast %arg0 : i32 to index
    %c19 = arith.constant 19 : index
    %187 = memref.load %arg3[%186, %c19] : memref<4x32xi32, #tpu.memory_space<smem>>
    %c31_i32 = arith.constant 31 : i32
    %c0_i32_105 = arith.constant 0 : i32
    %188 = tpu.memref_slice %arg5[%187, %c0_i32_105] : memref<500x256xf32, #tpu.memory_space<any>> -> memref<1x256xf32, #tpu.memory_space<any>>
    %c31_i32_106 = arith.constant 31 : i32
    %c0_i32_107 = arith.constant 0 : i32
    %189 = tpu.memref_slice %arg7[%c31_i32_106, %c0_i32_107] : memref<48x256xf32, #tpu.memory_space<vmem>> -> memref<1x256xf32, #tpu.memory_space<vmem>>
    %190 = tpu.memref_slice %arg8[%c31_i32] : memref<44x!tpu.dma_semaphore, #tpu.memory_space<semaphore_mem>> -> memref<1x!tpu.dma_semaphore, #tpu.memory_space<semaphore_mem>>
    %191 = tpu.memref_squeeze %190 : memref<1x!tpu.dma_semaphore, #tpu.memory_space<semaphore_mem>> -> memref<!tpu.dma_semaphore, #tpu.memory_space<semaphore_mem>>
    tpu.enqueue_dma source(%188 : memref<1x256xf32, #tpu.memory_space<any>>) target(%189 : memref<1x256xf32, #tpu.memory_space<vmem>>) target_semaphore(%191 : memref<!tpu.dma_semaphore, #tpu.memory_space<semaphore_mem>>)
    %192 = arith.index_cast %arg0 : i32 to index
    %c20 = arith.constant 20 : index
    %193 = memref.load %arg3[%192, %c20] : memref<4x32xi32, #tpu.memory_space<smem>>
    %c32_i32 = arith.constant 32 : i32
    %c0_i32_108 = arith.constant 0 : i32
    %194 = tpu.memref_slice %arg5[%193, %c0_i32_108] : memref<500x256xf32, #tpu.memory_space<any>> -> memref<1x256xf32, #tpu.memory_space<any>>
    %c32_i32_109 = arith.constant 32 : i32
    %c0_i32_110 = arith.constant 0 : i32
    %195 = tpu.memref_slice %arg7[%c32_i32_109, %c0_i32_110] : memref<48x256xf32, #tpu.memory_space<vmem>> -> memref<1x256xf32, #tpu.memory_space<vmem>>
    %196 = tpu.memref_slice %arg8[%c32_i32] : memref<44x!tpu.dma_semaphore, #tpu.memory_space<semaphore_mem>> -> memref<1x!tpu.dma_semaphore, #tpu.memory_space<semaphore_mem>>
    %197 = tpu.memref_squeeze %196 : memref<1x!tpu.dma_semaphore, #tpu.memory_space<semaphore_mem>> -> memref<!tpu.dma_semaphore, #tpu.memory_space<semaphore_mem>>
    tpu.enqueue_dma source(%194 : memref<1x256xf32, #tpu.memory_space<any>>) target(%195 : memref<1x256xf32, #tpu.memory_space<vmem>>) target_semaphore(%197 : memref<!tpu.dma_semaphore, #tpu.memory_space<semaphore_mem>>)
    %198 = arith.index_cast %arg0 : i32 to index
    %c21 = arith.constant 21 : index
    %199 = memref.load %arg3[%198, %c21] : memref<4x32xi32, #tpu.memory_space<smem>>
    %c33_i32 = arith.constant 33 : i32
    %c0_i32_111 = arith.constant 0 : i32
    %200 = tpu.memref_slice %arg5[%199, %c0_i32_111] : memref<500x256xf32, #tpu.memory_space<any>> -> memref<1x256xf32, #tpu.memory_space<any>>
    %c33_i32_112 = arith.constant 33 : i32
    %c0_i32_113 = arith.constant 0 : i32
    %201 = tpu.memref_slice %arg7[%c33_i32_112, %c0_i32_113] : memref<48x256xf32, #tpu.memory_space<vmem>> -> memref<1x256xf32, #tpu.memory_space<vmem>>
    %202 = tpu.memref_slice %arg8[%c33_i32] : memref<44x!tpu.dma_semaphore, #tpu.memory_space<semaphore_mem>> -> memref<1x!tpu.dma_semaphore, #tpu.memory_space<semaphore_mem>>
    %203 = tpu.memref_squeeze %202 : memref<1x!tpu.dma_semaphore, #tpu.memory_space<semaphore_mem>> -> memref<!tpu.dma_semaphore, #tpu.memory_space<semaphore_mem>>
    tpu.enqueue_dma source(%200 : memref<1x256xf32, #tpu.memory_space<any>>) target(%201 : memref<1x256xf32, #tpu.memory_space<vmem>>) target_semaphore(%203 : memref<!tpu.dma_semaphore, #tpu.memory_space<semaphore_mem>>)
    %204 = arith.index_cast %arg0 : i32 to index
    %c22 = arith.constant 22 : index
    %205 = memref.load %arg3[%204, %c22] : memref<4x32xi32, #tpu.memory_space<smem>>
    %c34_i32 = arith.constant 34 : i32
    %c0_i32_114 = arith.constant 0 : i32
    %206 = tpu.memref_slice %arg5[%205, %c0_i32_114] : memref<500x256xf32, #tpu.memory_space<any>> -> memref<1x256xf32, #tpu.memory_space<any>>
    %c34_i32_115 = arith.constant 34 : i32
    %c0_i32_116 = arith.constant 0 : i32
    %207 = tpu.memref_slice %arg7[%c34_i32_115, %c0_i32_116] : memref<48x256xf32, #tpu.memory_space<vmem>> -> memref<1x256xf32, #tpu.memory_space<vmem>>
    %208 = tpu.memref_slice %arg8[%c34_i32] : memref<44x!tpu.dma_semaphore, #tpu.memory_space<semaphore_mem>> -> memref<1x!tpu.dma_semaphore, #tpu.memory_space<semaphore_mem>>
    %209 = tpu.memref_squeeze %208 : memref<1x!tpu.dma_semaphore, #tpu.memory_space<semaphore_mem>> -> memref<!tpu.dma_semaphore, #tpu.memory_space<semaphore_mem>>
    tpu.enqueue_dma source(%206 : memref<1x256xf32, #tpu.memory_space<any>>) target(%207 : memref<1x256xf32, #tpu.memory_space<vmem>>) target_semaphore(%209 : memref<!tpu.dma_semaphore, #tpu.memory_space<semaphore_mem>>)
    %210 = arith.index_cast %arg0 : i32 to index
    %c23 = arith.constant 23 : index
    %211 = memref.load %arg3[%210, %c23] : memref<4x32xi32, #tpu.memory_space<smem>>
    %c35_i32 = arith.constant 35 : i32
    %c0_i32_117 = arith.constant 0 : i32
    %212 = tpu.memref_slice %arg5[%211, %c0_i32_117] : memref<500x256xf32, #tpu.memory_space<any>> -> memref<1x256xf32, #tpu.memory_space<any>>
    %c35_i32_118 = arith.constant 35 : i32
    %c0_i32_119 = arith.constant 0 : i32
    %213 = tpu.memref_slice %arg7[%c35_i32_118, %c0_i32_119] : memref<48x256xf32, #tpu.memory_space<vmem>> -> memref<1x256xf32, #tpu.memory_space<vmem>>
    %214 = tpu.memref_slice %arg8[%c35_i32] : memref<44x!tpu.dma_semaphore, #tpu.memory_space<semaphore_mem>> -> memref<1x!tpu.dma_semaphore, #tpu.memory_space<semaphore_mem>>
    %215 = tpu.memref_squeeze %214 : memref<1x!tpu.dma_semaphore, #tpu.memory_space<semaphore_mem>> -> memref<!tpu.dma_semaphore, #tpu.memory_space<semaphore_mem>>
    tpu.enqueue_dma source(%212 : memref<1x256xf32, #tpu.memory_space<any>>) target(%213 : memref<1x256xf32, #tpu.memory_space<vmem>>) target_semaphore(%215 : memref<!tpu.dma_semaphore, #tpu.memory_space<semaphore_mem>>)
    %216 = arith.index_cast %arg0 : i32 to index
    %c24 = arith.constant 24 : index
    %217 = memref.load %arg3[%216, %c24] : memref<4x32xi32, #tpu.memory_space<smem>>
    %c36_i32 = arith.constant 36 : i32
    %c0_i32_120 = arith.constant 0 : i32
    %218 = tpu.memref_slice %arg5[%217, %c0_i32_120] : memref<500x256xf32, #tpu.memory_space<any>> -> memref<1x256xf32, #tpu.memory_space<any>>
    %c36_i32_121 = arith.constant 36 : i32
    %c0_i32_122 = arith.constant 0 : i32
    %219 = tpu.memref_slice %arg7[%c36_i32_121, %c0_i32_122] : memref<48x256xf32, #tpu.memory_space<vmem>> -> memref<1x256xf32, #tpu.memory_space<vmem>>
    %220 = tpu.memref_slice %arg8[%c36_i32] : memref<44x!tpu.dma_semaphore, #tpu.memory_space<semaphore_mem>> -> memref<1x!tpu.dma_semaphore, #tpu.memory_space<semaphore_mem>>
    %221 = tpu.memref_squeeze %220 : memref<1x!tpu.dma_semaphore, #tpu.memory_space<semaphore_mem>> -> memref<!tpu.dma_semaphore, #tpu.memory_space<semaphore_mem>>
    tpu.enqueue_dma source(%218 : memref<1x256xf32, #tpu.memory_space<any>>) target(%219 : memref<1x256xf32, #tpu.memory_space<vmem>>) target_semaphore(%221 : memref<!tpu.dma_semaphore, #tpu.memory_space<semaphore_mem>>)
    %222 = arith.index_cast %arg0 : i32 to index
    %c25 = arith.constant 25 : index
    %223 = memref.load %arg3[%222, %c25] : memref<4x32xi32, #tpu.memory_space<smem>>
    %c37_i32 = arith.constant 37 : i32
    %c0_i32_123 = arith.constant 0 : i32
    %224 = tpu.memref_slice %arg5[%223, %c0_i32_123] : memref<500x256xf32, #tpu.memory_space<any>> -> memref<1x256xf32, #tpu.memory_space<any>>
    %c37_i32_124 = arith.constant 37 : i32
    %c0_i32_125 = arith.constant 0 : i32
    %225 = tpu.memref_slice %arg7[%c37_i32_124, %c0_i32_125] : memref<48x256xf32, #tpu.memory_space<vmem>> -> memref<1x256xf32, #tpu.memory_space<vmem>>
    %226 = tpu.memref_slice %arg8[%c37_i32] : memref<44x!tpu.dma_semaphore, #tpu.memory_space<semaphore_mem>> -> memref<1x!tpu.dma_semaphore, #tpu.memory_space<semaphore_mem>>
    %227 = tpu.memref_squeeze %226 : memref<1x!tpu.dma_semaphore, #tpu.memory_space<semaphore_mem>> -> memref<!tpu.dma_semaphore, #tpu.memory_space<semaphore_mem>>
    tpu.enqueue_dma source(%224 : memref<1x256xf32, #tpu.memory_space<any>>) target(%225 : memref<1x256xf32, #tpu.memory_space<vmem>>) target_semaphore(%227 : memref<!tpu.dma_semaphore, #tpu.memory_space<semaphore_mem>>)
    %228 = arith.index_cast %arg0 : i32 to index
    %c26 = arith.constant 26 : index
    %229 = memref.load %arg3[%228, %c26] : memref<4x32xi32, #tpu.memory_space<smem>>
    %c38_i32 = arith.constant 38 : i32
    %c0_i32_126 = arith.constant 0 : i32
    %230 = tpu.memref_slice %arg5[%229, %c0_i32_126] : memref<500x256xf32, #tpu.memory_space<any>> -> memref<1x256xf32, #tpu.memory_space<any>>
    %c38_i32_127 = arith.constant 38 : i32
    %c0_i32_128 = arith.constant 0 : i32
    %231 = tpu.memref_slice %arg7[%c38_i32_127, %c0_i32_128] : memref<48x256xf32, #tpu.memory_space<vmem>> -> memref<1x256xf32, #tpu.memory_space<vmem>>
    %232 = tpu.memref_slice %arg8[%c38_i32] : memref<44x!tpu.dma_semaphore, #tpu.memory_space<semaphore_mem>> -> memref<1x!tpu.dma_semaphore, #tpu.memory_space<semaphore_mem>>
    %233 = tpu.memref_squeeze %232 : memref<1x!tpu.dma_semaphore, #tpu.memory_space<semaphore_mem>> -> memref<!tpu.dma_semaphore, #tpu.memory_space<semaphore_mem>>
    tpu.enqueue_dma source(%230 : memref<1x256xf32, #tpu.memory_space<any>>) target(%231 : memref<1x256xf32, #tpu.memory_space<vmem>>) target_semaphore(%233 : memref<!tpu.dma_semaphore, #tpu.memory_space<semaphore_mem>>)
    %234 = arith.index_cast %arg0 : i32 to index
    %c27 = arith.constant 27 : index
    %235 = memref.load %arg3[%234, %c27] : memref<4x32xi32, #tpu.memory_space<smem>>
    %c39_i32 = arith.constant 39 : i32
    %c0_i32_129 = arith.constant 0 : i32
    %236 = tpu.memref_slice %arg5[%235, %c0_i32_129] : memref<500x256xf32, #tpu.memory_space<any>> -> memref<1x256xf32, #tpu.memory_space<any>>
    %c39_i32_130 = arith.constant 39 : i32
    %c0_i32_131 = arith.constant 0 : i32
    %237 = tpu.memref_slice %arg7[%c39_i32_130, %c0_i32_131] : memref<48x256xf32, #tpu.memory_space<vmem>> -> memref<1x256xf32, #tpu.memory_space<vmem>>
    %238 = tpu.memref_slice %arg8[%c39_i32] : memref<44x!tpu.dma_semaphore, #tpu.memory_space<semaphore_mem>> -> memref<1x!tpu.dma_semaphore, #tpu.memory_space<semaphore_mem>>
    %239 = tpu.memref_squeeze %238 : memref<1x!tpu.dma_semaphore, #tpu.memory_space<semaphore_mem>> -> memref<!tpu.dma_semaphore, #tpu.memory_space<semaphore_mem>>
    tpu.enqueue_dma source(%236 : memref<1x256xf32, #tpu.memory_space<any>>) target(%237 : memref<1x256xf32, #tpu.memory_space<vmem>>) target_semaphore(%239 : memref<!tpu.dma_semaphore, #tpu.memory_space<semaphore_mem>>)
    %240 = arith.index_cast %arg0 : i32 to index
    %c28 = arith.constant 28 : index
    %241 = memref.load %arg3[%240, %c28] : memref<4x32xi32, #tpu.memory_space<smem>>
    %c40_i32 = arith.constant 40 : i32
    %c0_i32_132 = arith.constant 0 : i32
    %242 = tpu.memref_slice %arg5[%241, %c0_i32_132] : memref<500x256xf32, #tpu.memory_space<any>> -> memref<1x256xf32, #tpu.memory_space<any>>
    %c40_i32_133 = arith.constant 40 : i32
    %c0_i32_134 = arith.constant 0 : i32
    %243 = tpu.memref_slice %arg7[%c40_i32_133, %c0_i32_134] : memref<48x256xf32, #tpu.memory_space<vmem>> -> memref<1x256xf32, #tpu.memory_space<vmem>>
    %244 = tpu.memref_slice %arg8[%c40_i32] : memref<44x!tpu.dma_semaphore, #tpu.memory_space<semaphore_mem>> -> memref<1x!tpu.dma_semaphore, #tpu.memory_space<semaphore_mem>>
    %245 = tpu.memref_squeeze %244 : memref<1x!tpu.dma_semaphore, #tpu.memory_space<semaphore_mem>> -> memref<!tpu.dma_semaphore, #tpu.memory_space<semaphore_mem>>
    tpu.enqueue_dma source(%242 : memref<1x256xf32, #tpu.memory_space<any>>) target(%243 : memref<1x256xf32, #tpu.memory_space<vmem>>) target_semaphore(%245 : memref<!tpu.dma_semaphore, #tpu.memory_space<semaphore_mem>>)
    %246 = arith.index_cast %arg0 : i32 to index
    %c29 = arith.constant 29 : index
    %247 = memref.load %arg3[%246, %c29] : memref<4x32xi32, #tpu.memory_space<smem>>
    %c41_i32 = arith.constant 41 : i32
    %c0_i32_135 = arith.constant 0 : i32
    %248 = tpu.memref_slice %arg5[%247, %c0_i32_135] : memref<500x256xf32, #tpu.memory_space<any>> -> memref<1x256xf32, #tpu.memory_space<any>>
    %c41_i32_136 = arith.constant 41 : i32
    %c0_i32_137 = arith.constant 0 : i32
    %249 = tpu.memref_slice %arg7[%c41_i32_136, %c0_i32_137] : memref<48x256xf32, #tpu.memory_space<vmem>> -> memref<1x256xf32, #tpu.memory_space<vmem>>
    %250 = tpu.memref_slice %arg8[%c41_i32] : memref<44x!tpu.dma_semaphore, #tpu.memory_space<semaphore_mem>> -> memref<1x!tpu.dma_semaphore, #tpu.memory_space<semaphore_mem>>
    %251 = tpu.memref_squeeze %250 : memref<1x!tpu.dma_semaphore, #tpu.memory_space<semaphore_mem>> -> memref<!tpu.dma_semaphore, #tpu.memory_space<semaphore_mem>>
    tpu.enqueue_dma source(%248 : memref<1x256xf32, #tpu.memory_space<any>>) target(%249 : memref<1x256xf32, #tpu.memory_space<vmem>>) target_semaphore(%251 : memref<!tpu.dma_semaphore, #tpu.memory_space<semaphore_mem>>)
    %252 = arith.index_cast %arg0 : i32 to index
    %c30 = arith.constant 30 : index
    %253 = memref.load %arg3[%252, %c30] : memref<4x32xi32, #tpu.memory_space<smem>>
    %c42_i32 = arith.constant 42 : i32
    %c0_i32_138 = arith.constant 0 : i32
    %254 = tpu.memref_slice %arg5[%253, %c0_i32_138] : memref<500x256xf32, #tpu.memory_space<any>> -> memref<1x256xf32, #tpu.memory_space<any>>
    %c42_i32_139 = arith.constant 42 : i32
    %c0_i32_140 = arith.constant 0 : i32
    %255 = tpu.memref_slice %arg7[%c42_i32_139, %c0_i32_140] : memref<48x256xf32, #tpu.memory_space<vmem>> -> memref<1x256xf32, #tpu.memory_space<vmem>>
    %256 = tpu.memref_slice %arg8[%c42_i32] : memref<44x!tpu.dma_semaphore, #tpu.memory_space<semaphore_mem>> -> memref<1x!tpu.dma_semaphore, #tpu.memory_space<semaphore_mem>>
    %257 = tpu.memref_squeeze %256 : memref<1x!tpu.dma_semaphore, #tpu.memory_space<semaphore_mem>> -> memref<!tpu.dma_semaphore, #tpu.memory_space<semaphore_mem>>
    tpu.enqueue_dma source(%254 : memref<1x256xf32, #tpu.memory_space<any>>) target(%255 : memref<1x256xf32, #tpu.memory_space<vmem>>) target_semaphore(%257 : memref<!tpu.dma_semaphore, #tpu.memory_space<semaphore_mem>>)
    %258 = arith.index_cast %arg0 : i32 to index
    %c31 = arith.constant 31 : index
    %259 = memref.load %arg3[%258, %c31] : memref<4x32xi32, #tpu.memory_space<smem>>
    %c43_i32 = arith.constant 43 : i32
    %c0_i32_141 = arith.constant 0 : i32
    %260 = tpu.memref_slice %arg5[%259, %c0_i32_141] : memref<500x256xf32, #tpu.memory_space<any>> -> memref<1x256xf32, #tpu.memory_space<any>>
    %c43_i32_142 = arith.constant 43 : i32
    %c0_i32_143 = arith.constant 0 : i32
    %261 = tpu.memref_slice %arg7[%c43_i32_142, %c0_i32_143] : memref<48x256xf32, #tpu.memory_space<vmem>> -> memref<1x256xf32, #tpu.memory_space<vmem>>
    %262 = tpu.memref_slice %arg8[%c43_i32] : memref<44x!tpu.dma_semaphore, #tpu.memory_space<semaphore_mem>> -> memref<1x!tpu.dma_semaphore, #tpu.memory_space<semaphore_mem>>
    %263 = tpu.memref_squeeze %262 : memref<1x!tpu.dma_semaphore, #tpu.memory_space<semaphore_mem>> -> memref<!tpu.dma_semaphore, #tpu.memory_space<semaphore_mem>>
    tpu.enqueue_dma source(%260 : memref<1x256xf32, #tpu.memory_space<any>>) target(%261 : memref<1x256xf32, #tpu.memory_space<vmem>>) target_semaphore(%263 : memref<!tpu.dma_semaphore, #tpu.memory_space<semaphore_mem>>)
    %c0_i32_144 = arith.constant 0 : i32
    %c0_i32_145 = arith.constant 0 : i32
    %264 = tpu.memref_slice %arg4[%1, %c0_i32_145] : memref<1000x256xf32, #tpu.memory_space<any>> -> memref<1x256xf32, #tpu.memory_space<any>>
    %c0_i32_146 = arith.constant 0 : i32
    %c0_i32_147 = arith.constant 0 : i32
    %265 = tpu.memref_slice %arg7[%c0_i32_146, %c0_i32_147] : memref<48x256xf32, #tpu.memory_space<vmem>> -> memref<1x256xf32, #tpu.memory_space<vmem>>
    %266 = tpu.memref_slice %arg8[%c0_i32_144] : memref<44x!tpu.dma_semaphore, #tpu.memory_space<semaphore_mem>> -> memref<1x!tpu.dma_semaphore, #tpu.memory_space<semaphore_mem>>
    %267 = tpu.memref_squeeze %266 : memref<1x!tpu.dma_semaphore, #tpu.memory_space<semaphore_mem>> -> memref<!tpu.dma_semaphore, #tpu.memory_space<semaphore_mem>>
    tpu.wait_dma2 semaphore(%267 : memref<!tpu.dma_semaphore, #tpu.memory_space<semaphore_mem>>) src(%264 : memref<1x256xf32, #tpu.memory_space<any>>) dst(%265 : memref<1x256xf32, #tpu.memory_space<vmem>>)
    %c1_i32_148 = arith.constant 1 : i32
    %c0_i32_149 = arith.constant 0 : i32
    %268 = tpu.memref_slice %arg4[%7, %c0_i32_149] : memref<1000x256xf32, #tpu.memory_space<any>> -> memref<1x256xf32, #tpu.memory_space<any>>
    %c1_i32_150 = arith.constant 1 : i32
    %c0_i32_151 = arith.constant 0 : i32
    %269 = tpu.memref_slice %arg7[%c1_i32_150, %c0_i32_151] : memref<48x256xf32, #tpu.memory_space<vmem>> -> memref<1x256xf32, #tpu.memory_space<vmem>>
    %270 = tpu.memref_slice %arg8[%c1_i32_148] : memref<44x!tpu.dma_semaphore, #tpu.memory_space<semaphore_mem>> -> memref<1x!tpu.dma_semaphore, #tpu.memory_space<semaphore_mem>>
    %271 = tpu.memref_squeeze %270 : memref<1x!tpu.dma_semaphore, #tpu.memory_space<semaphore_mem>> -> memref<!tpu.dma_semaphore, #tpu.memory_space<semaphore_mem>>
    tpu.wait_dma2 semaphore(%271 : memref<!tpu.dma_semaphore, #tpu.memory_space<semaphore_mem>>) src(%268 : memref<1x256xf32, #tpu.memory_space<any>>) dst(%269 : memref<1x256xf32, #tpu.memory_space<vmem>>)
    %c2_i32_152 = arith.constant 2 : i32
    %c0_i32_153 = arith.constant 0 : i32
    %272 = tpu.memref_slice %arg4[%13, %c0_i32_153] : memref<1000x256xf32, #tpu.memory_space<any>> -> memref<1x256xf32, #tpu.memory_space<any>>
    %c2_i32_154 = arith.constant 2 : i32
    %c0_i32_155 = arith.constant 0 : i32
    %273 = tpu.memref_slice %arg7[%c2_i32_154, %c0_i32_155] : memref<48x256xf32, #tpu.memory_space<vmem>> -> memref<1x256xf32, #tpu.memory_space<vmem>>
    %274 = tpu.memref_slice %arg8[%c2_i32_152] : memref<44x!tpu.dma_semaphore, #tpu.memory_space<semaphore_mem>> -> memref<1x!tpu.dma_semaphore, #tpu.memory_space<semaphore_mem>>
    %275 = tpu.memref_squeeze %274 : memref<1x!tpu.dma_semaphore, #tpu.memory_space<semaphore_mem>> -> memref<!tpu.dma_semaphore, #tpu.memory_space<semaphore_mem>>
    tpu.wait_dma2 semaphore(%275 : memref<!tpu.dma_semaphore, #tpu.memory_space<semaphore_mem>>) src(%272 : memref<1x256xf32, #tpu.memory_space<any>>) dst(%273 : memref<1x256xf32, #tpu.memory_space<vmem>>)
    %c3_i32_156 = arith.constant 3 : i32
    %c0_i32_157 = arith.constant 0 : i32
    %276 = tpu.memref_slice %arg4[%19, %c0_i32_157] : memref<1000x256xf32, #tpu.memory_space<any>> -> memref<1x256xf32, #tpu.memory_space<any>>
    %c3_i32_158 = arith.constant 3 : i32
    %c0_i32_159 = arith.constant 0 : i32
    %277 = tpu.memref_slice %arg7[%c3_i32_158, %c0_i32_159] : memref<48x256xf32, #tpu.memory_space<vmem>> -> memref<1x256xf32, #tpu.memory_space<vmem>>
    %278 = tpu.memref_slice %arg8[%c3_i32_156] : memref<44x!tpu.dma_semaphore, #tpu.memory_space<semaphore_mem>> -> memref<1x!tpu.dma_semaphore, #tpu.memory_space<semaphore_mem>>
    %279 = tpu.memref_squeeze %278 : memref<1x!tpu.dma_semaphore, #tpu.memory_space<semaphore_mem>> -> memref<!tpu.dma_semaphore, #tpu.memory_space<semaphore_mem>>
    tpu.wait_dma2 semaphore(%279 : memref<!tpu.dma_semaphore, #tpu.memory_space<semaphore_mem>>) src(%276 : memref<1x256xf32, #tpu.memory_space<any>>) dst(%277 : memref<1x256xf32, #tpu.memory_space<vmem>>)
    %c4_i32_160 = arith.constant 4 : i32
    %c0_i32_161 = arith.constant 0 : i32
    %280 = tpu.memref_slice %arg4[%25, %c0_i32_161] : memref<1000x256xf32, #tpu.memory_space<any>> -> memref<1x256xf32, #tpu.memory_space<any>>
    %c4_i32_162 = arith.constant 4 : i32
    %c0_i32_163 = arith.constant 0 : i32
    %281 = tpu.memref_slice %arg7[%c4_i32_162, %c0_i32_163] : memref<48x256xf32, #tpu.memory_space<vmem>> -> memref<1x256xf32, #tpu.memory_space<vmem>>
    %282 = tpu.memref_slice %arg8[%c4_i32_160] : memref<44x!tpu.dma_semaphore, #tpu.memory_space<semaphore_mem>> -> memref<1x!tpu.dma_semaphore, #tpu.memory_space<semaphore_mem>>
    %283 = tpu.memref_squeeze %282 : memref<1x!tpu.dma_semaphore, #tpu.memory_space<semaphore_mem>> -> memref<!tpu.dma_semaphore, #tpu.memory_space<semaphore_mem>>
    tpu.wait_dma2 semaphore(%283 : memref<!tpu.dma_semaphore, #tpu.memory_space<semaphore_mem>>) src(%280 : memref<1x256xf32, #tpu.memory_space<any>>) dst(%281 : memref<1x256xf32, #tpu.memory_space<vmem>>)
    %c5_i32_164 = arith.constant 5 : i32
    %c0_i32_165 = arith.constant 0 : i32
    %284 = tpu.memref_slice %arg4[%31, %c0_i32_165] : memref<1000x256xf32, #tpu.memory_space<any>> -> memref<1x256xf32, #tpu.memory_space<any>>
    %c5_i32_166 = arith.constant 5 : i32
    %c0_i32_167 = arith.constant 0 : i32
    %285 = tpu.memref_slice %arg7[%c5_i32_166, %c0_i32_167] : memref<48x256xf32, #tpu.memory_space<vmem>> -> memref<1x256xf32, #tpu.memory_space<vmem>>
    %286 = tpu.memref_slice %arg8[%c5_i32_164] : memref<44x!tpu.dma_semaphore, #tpu.memory_space<semaphore_mem>> -> memref<1x!tpu.dma_semaphore, #tpu.memory_space<semaphore_mem>>
    %287 = tpu.memref_squeeze %286 : memref<1x!tpu.dma_semaphore, #tpu.memory_space<semaphore_mem>> -> memref<!tpu.dma_semaphore, #tpu.memory_space<semaphore_mem>>
    tpu.wait_dma2 semaphore(%287 : memref<!tpu.dma_semaphore, #tpu.memory_space<semaphore_mem>>) src(%284 : memref<1x256xf32, #tpu.memory_space<any>>) dst(%285 : memref<1x256xf32, #tpu.memory_space<vmem>>)
    %c6_i32_168 = arith.constant 6 : i32
    %c0_i32_169 = arith.constant 0 : i32
    %288 = tpu.memref_slice %arg4[%37, %c0_i32_169] : memref<1000x256xf32, #tpu.memory_space<any>> -> memref<1x256xf32, #tpu.memory_space<any>>
    %c6_i32_170 = arith.constant 6 : i32
    %c0_i32_171 = arith.constant 0 : i32
    %289 = tpu.memref_slice %arg7[%c6_i32_170, %c0_i32_171] : memref<48x256xf32, #tpu.memory_space<vmem>> -> memref<1x256xf32, #tpu.memory_space<vmem>>
    %290 = tpu.memref_slice %arg8[%c6_i32_168] : memref<44x!tpu.dma_semaphore, #tpu.memory_space<semaphore_mem>> -> memref<1x!tpu.dma_semaphore, #tpu.memory_space<semaphore_mem>>
    %291 = tpu.memref_squeeze %290 : memref<1x!tpu.dma_semaphore, #tpu.memory_space<semaphore_mem>> -> memref<!tpu.dma_semaphore, #tpu.memory_space<semaphore_mem>>
    tpu.wait_dma2 semaphore(%291 : memref<!tpu.dma_semaphore, #tpu.memory_space<semaphore_mem>>) src(%288 : memref<1x256xf32, #tpu.memory_space<any>>) dst(%289 : memref<1x256xf32, #tpu.memory_space<vmem>>)
    %c7_i32_172 = arith.constant 7 : i32
    %c0_i32_173 = arith.constant 0 : i32
    %292 = tpu.memref_slice %arg4[%43, %c0_i32_173] : memref<1000x256xf32, #tpu.memory_space<any>> -> memref<1x256xf32, #tpu.memory_space<any>>
    %c7_i32_174 = arith.constant 7 : i32
    %c0_i32_175 = arith.constant 0 : i32
    %293 = tpu.memref_slice %arg7[%c7_i32_174, %c0_i32_175] : memref<48x256xf32, #tpu.memory_space<vmem>> -> memref<1x256xf32, #tpu.memory_space<vmem>>
    %294 = tpu.memref_slice %arg8[%c7_i32_172] : memref<44x!tpu.dma_semaphore, #tpu.memory_space<semaphore_mem>> -> memref<1x!tpu.dma_semaphore, #tpu.memory_space<semaphore_mem>>
    %295 = tpu.memref_squeeze %294 : memref<1x!tpu.dma_semaphore, #tpu.memory_space<semaphore_mem>> -> memref<!tpu.dma_semaphore, #tpu.memory_space<semaphore_mem>>
    tpu.wait_dma2 semaphore(%295 : memref<!tpu.dma_semaphore, #tpu.memory_space<semaphore_mem>>) src(%292 : memref<1x256xf32, #tpu.memory_space<any>>) dst(%293 : memref<1x256xf32, #tpu.memory_space<vmem>>)
    %c8_i32_176 = arith.constant 8 : i32
    %c0_i32_177 = arith.constant 0 : i32
    %296 = tpu.memref_slice %arg5[%49, %c0_i32_177] : memref<500x256xf32, #tpu.memory_space<any>> -> memref<1x256xf32, #tpu.memory_space<any>>
    %c8_i32_178 = arith.constant 8 : i32
    %c0_i32_179 = arith.constant 0 : i32
    %297 = tpu.memref_slice %arg7[%c8_i32_178, %c0_i32_179] : memref<48x256xf32, #tpu.memory_space<vmem>> -> memref<1x256xf32, #tpu.memory_space<vmem>>
    %298 = tpu.memref_slice %arg8[%c8_i32_176] : memref<44x!tpu.dma_semaphore, #tpu.memory_space<semaphore_mem>> -> memref<1x!tpu.dma_semaphore, #tpu.memory_space<semaphore_mem>>
    %299 = tpu.memref_squeeze %298 : memref<1x!tpu.dma_semaphore, #tpu.memory_space<semaphore_mem>> -> memref<!tpu.dma_semaphore, #tpu.memory_space<semaphore_mem>>
    tpu.wait_dma2 semaphore(%299 : memref<!tpu.dma_semaphore, #tpu.memory_space<semaphore_mem>>) src(%296 : memref<1x256xf32, #tpu.memory_space<any>>) dst(%297 : memref<1x256xf32, #tpu.memory_space<vmem>>)
    %c9_i32_180 = arith.constant 9 : i32
    %c0_i32_181 = arith.constant 0 : i32
    %300 = tpu.memref_slice %arg5[%55, %c0_i32_181] : memref<500x256xf32, #tpu.memory_space<any>> -> memref<1x256xf32, #tpu.memory_space<any>>
    %c9_i32_182 = arith.constant 9 : i32
    %c0_i32_183 = arith.constant 0 : i32
    %301 = tpu.memref_slice %arg7[%c9_i32_182, %c0_i32_183] : memref<48x256xf32, #tpu.memory_space<vmem>> -> memref<1x256xf32, #tpu.memory_space<vmem>>
    %302 = tpu.memref_slice %arg8[%c9_i32_180] : memref<44x!tpu.dma_semaphore, #tpu.memory_space<semaphore_mem>> -> memref<1x!tpu.dma_semaphore, #tpu.memory_space<semaphore_mem>>
    %303 = tpu.memref_squeeze %302 : memref<1x!tpu.dma_semaphore, #tpu.memory_space<semaphore_mem>> -> memref<!tpu.dma_semaphore, #tpu.memory_space<semaphore_mem>>
    tpu.wait_dma2 semaphore(%303 : memref<!tpu.dma_semaphore, #tpu.memory_space<semaphore_mem>>) src(%300 : memref<1x256xf32, #tpu.memory_space<any>>) dst(%301 : memref<1x256xf32, #tpu.memory_space<vmem>>)
    %c10_i32_184 = arith.constant 10 : i32
    %c0_i32_185 = arith.constant 0 : i32
    %304 = tpu.memref_slice %arg5[%61, %c0_i32_185] : memref<500x256xf32, #tpu.memory_space<any>> -> memref<1x256xf32, #tpu.memory_space<any>>
    %c10_i32_186 = arith.constant 10 : i32
    %c0_i32_187 = arith.constant 0 : i32
    %305 = tpu.memref_slice %arg7[%c10_i32_186, %c0_i32_187] : memref<48x256xf32, #tpu.memory_space<vmem>> -> memref<1x256xf32, #tpu.memory_space<vmem>>
    %306 = tpu.memref_slice %arg8[%c10_i32_184] : memref<44x!tpu.dma_semaphore, #tpu.memory_space<semaphore_mem>> -> memref<1x!tpu.dma_semaphore, #tpu.memory_space<semaphore_mem>>
    %307 = tpu.memref_squeeze %306 : memref<1x!tpu.dma_semaphore, #tpu.memory_space<semaphore_mem>> -> memref<!tpu.dma_semaphore, #tpu.memory_space<semaphore_mem>>
    tpu.wait_dma2 semaphore(%307 : memref<!tpu.dma_semaphore, #tpu.memory_space<semaphore_mem>>) src(%304 : memref<1x256xf32, #tpu.memory_space<any>>) dst(%305 : memref<1x256xf32, #tpu.memory_space<vmem>>)
    %c11_i32_188 = arith.constant 11 : i32
    %c0_i32_189 = arith.constant 0 : i32
    %308 = tpu.memref_slice %arg5[%67, %c0_i32_189] : memref<500x256xf32, #tpu.memory_space<any>> -> memref<1x256xf32, #tpu.memory_space<any>>
    %c11_i32_190 = arith.constant 11 : i32
    %c0_i32_191 = arith.constant 0 : i32
    %309 = tpu.memref_slice %arg7[%c11_i32_190, %c0_i32_191] : memref<48x256xf32, #tpu.memory_space<vmem>> -> memref<1x256xf32, #tpu.memory_space<vmem>>
    %310 = tpu.memref_slice %arg8[%c11_i32_188] : memref<44x!tpu.dma_semaphore, #tpu.memory_space<semaphore_mem>> -> memref<1x!tpu.dma_semaphore, #tpu.memory_space<semaphore_mem>>
    %311 = tpu.memref_squeeze %310 : memref<1x!tpu.dma_semaphore, #tpu.memory_space<semaphore_mem>> -> memref<!tpu.dma_semaphore, #tpu.memory_space<semaphore_mem>>
    tpu.wait_dma2 semaphore(%311 : memref<!tpu.dma_semaphore, #tpu.memory_space<semaphore_mem>>) src(%308 : memref<1x256xf32, #tpu.memory_space<any>>) dst(%309 : memref<1x256xf32, #tpu.memory_space<vmem>>)
    %c12_i32_192 = arith.constant 12 : i32
    %c0_i32_193 = arith.constant 0 : i32
    %312 = tpu.memref_slice %arg5[%73, %c0_i32_193] : memref<500x256xf32, #tpu.memory_space<any>> -> memref<1x256xf32, #tpu.memory_space<any>>
    %c12_i32_194 = arith.constant 12 : i32
    %c0_i32_195 = arith.constant 0 : i32
    %313 = tpu.memref_slice %arg7[%c12_i32_194, %c0_i32_195] : memref<48x256xf32, #tpu.memory_space<vmem>> -> memref<1x256xf32, #tpu.memory_space<vmem>>
    %314 = tpu.memref_slice %arg8[%c12_i32_192] : memref<44x!tpu.dma_semaphore, #tpu.memory_space<semaphore_mem>> -> memref<1x!tpu.dma_semaphore, #tpu.memory_space<semaphore_mem>>
    %315 = tpu.memref_squeeze %314 : memref<1x!tpu.dma_semaphore, #tpu.memory_space<semaphore_mem>> -> memref<!tpu.dma_semaphore, #tpu.memory_space<semaphore_mem>>
    tpu.wait_dma2 semaphore(%315 : memref<!tpu.dma_semaphore, #tpu.memory_space<semaphore_mem>>) src(%312 : memref<1x256xf32, #tpu.memory_space<any>>) dst(%313 : memref<1x256xf32, #tpu.memory_space<vmem>>)
    %c13_i32_196 = arith.constant 13 : i32
    %c0_i32_197 = arith.constant 0 : i32
    %316 = tpu.memref_slice %arg5[%79, %c0_i32_197] : memref<500x256xf32, #tpu.memory_space<any>> -> memref<1x256xf32, #tpu.memory_space<any>>
    %c13_i32_198 = arith.constant 13 : i32
    %c0_i32_199 = arith.constant 0 : i32
    %317 = tpu.memref_slice %arg7[%c13_i32_198, %c0_i32_199] : memref<48x256xf32, #tpu.memory_space<vmem>> -> memref<1x256xf32, #tpu.memory_space<vmem>>
    %318 = tpu.memref_slice %arg8[%c13_i32_196] : memref<44x!tpu.dma_semaphore, #tpu.memory_space<semaphore_mem>> -> memref<1x!tpu.dma_semaphore, #tpu.memory_space<semaphore_mem>>
    %319 = tpu.memref_squeeze %318 : memref<1x!tpu.dma_semaphore, #tpu.memory_space<semaphore_mem>> -> memref<!tpu.dma_semaphore, #tpu.memory_space<semaphore_mem>>
    tpu.wait_dma2 semaphore(%319 : memref<!tpu.dma_semaphore, #tpu.memory_space<semaphore_mem>>) src(%316 : memref<1x256xf32, #tpu.memory_space<any>>) dst(%317 : memref<1x256xf32, #tpu.memory_space<vmem>>)
    %c14_i32_200 = arith.constant 14 : i32
    %c0_i32_201 = arith.constant 0 : i32
    %320 = tpu.memref_slice %arg5[%85, %c0_i32_201] : memref<500x256xf32, #tpu.memory_space<any>> -> memref<1x256xf32, #tpu.memory_space<any>>
    %c14_i32_202 = arith.constant 14 : i32
    %c0_i32_203 = arith.constant 0 : i32
    %321 = tpu.memref_slice %arg7[%c14_i32_202, %c0_i32_203] : memref<48x256xf32, #tpu.memory_space<vmem>> -> memref<1x256xf32, #tpu.memory_space<vmem>>
    %322 = tpu.memref_slice %arg8[%c14_i32_200] : memref<44x!tpu.dma_semaphore, #tpu.memory_space<semaphore_mem>> -> memref<1x!tpu.dma_semaphore, #tpu.memory_space<semaphore_mem>>
    %323 = tpu.memref_squeeze %322 : memref<1x!tpu.dma_semaphore, #tpu.memory_space<semaphore_mem>> -> memref<!tpu.dma_semaphore, #tpu.memory_space<semaphore_mem>>
    tpu.wait_dma2 semaphore(%323 : memref<!tpu.dma_semaphore, #tpu.memory_space<semaphore_mem>>) src(%320 : memref<1x256xf32, #tpu.memory_space<any>>) dst(%321 : memref<1x256xf32, #tpu.memory_space<vmem>>)
    %c15_i32_204 = arith.constant 15 : i32
    %c0_i32_205 = arith.constant 0 : i32
    %324 = tpu.memref_slice %arg5[%91, %c0_i32_205] : memref<500x256xf32, #tpu.memory_space<any>> -> memref<1x256xf32, #tpu.memory_space<any>>
    %c15_i32_206 = arith.constant 15 : i32
    %c0_i32_207 = arith.constant 0 : i32
    %325 = tpu.memref_slice %arg7[%c15_i32_206, %c0_i32_207] : memref<48x256xf32, #tpu.memory_space<vmem>> -> memref<1x256xf32, #tpu.memory_space<vmem>>
    %326 = tpu.memref_slice %arg8[%c15_i32_204] : memref<44x!tpu.dma_semaphore, #tpu.memory_space<semaphore_mem>> -> memref<1x!tpu.dma_semaphore, #tpu.memory_space<semaphore_mem>>
    %327 = tpu.memref_squeeze %326 : memref<1x!tpu.dma_semaphore, #tpu.memory_space<semaphore_mem>> -> memref<!tpu.dma_semaphore, #tpu.memory_space<semaphore_mem>>
    tpu.wait_dma2 semaphore(%327 : memref<!tpu.dma_semaphore, #tpu.memory_space<semaphore_mem>>) src(%324 : memref<1x256xf32, #tpu.memory_space<any>>) dst(%325 : memref<1x256xf32, #tpu.memory_space<vmem>>)
    %c16_i32_208 = arith.constant 16 : i32
    %c0_i32_209 = arith.constant 0 : i32
    %328 = tpu.memref_slice %arg5[%97, %c0_i32_209] : memref<500x256xf32, #tpu.memory_space<any>> -> memref<1x256xf32, #tpu.memory_space<any>>
    %c16_i32_210 = arith.constant 16 : i32
    %c0_i32_211 = arith.constant 0 : i32
    %329 = tpu.memref_slice %arg7[%c16_i32_210, %c0_i32_211] : memref<48x256xf32, #tpu.memory_space<vmem>> -> memref<1x256xf32, #tpu.memory_space<vmem>>
    %330 = tpu.memref_slice %arg8[%c16_i32_208] : memref<44x!tpu.dma_semaphore, #tpu.memory_space<semaphore_mem>> -> memref<1x!tpu.dma_semaphore, #tpu.memory_space<semaphore_mem>>
    %331 = tpu.memref_squeeze %330 : memref<1x!tpu.dma_semaphore, #tpu.memory_space<semaphore_mem>> -> memref<!tpu.dma_semaphore, #tpu.memory_space<semaphore_mem>>
    tpu.wait_dma2 semaphore(%331 : memref<!tpu.dma_semaphore, #tpu.memory_space<semaphore_mem>>) src(%328 : memref<1x256xf32, #tpu.memory_space<any>>) dst(%329 : memref<1x256xf32, #tpu.memory_space<vmem>>)
    %c17_i32_212 = arith.constant 17 : i32
    %c0_i32_213 = arith.constant 0 : i32
    %332 = tpu.memref_slice %arg5[%103, %c0_i32_213] : memref<500x256xf32, #tpu.memory_space<any>> -> memref<1x256xf32, #tpu.memory_space<any>>
    %c17_i32_214 = arith.constant 17 : i32
    %c0_i32_215 = arith.constant 0 : i32
    %333 = tpu.memref_slice %arg7[%c17_i32_214, %c0_i32_215] : memref<48x256xf32, #tpu.memory_space<vmem>> -> memref<1x256xf32, #tpu.memory_space<vmem>>
    %334 = tpu.memref_slice %arg8[%c17_i32_212] : memref<44x!tpu.dma_semaphore, #tpu.memory_space<semaphore_mem>> -> memref<1x!tpu.dma_semaphore, #tpu.memory_space<semaphore_mem>>
    %335 = tpu.memref_squeeze %334 : memref<1x!tpu.dma_semaphore, #tpu.memory_space<semaphore_mem>> -> memref<!tpu.dma_semaphore, #tpu.memory_space<semaphore_mem>>
    tpu.wait_dma2 semaphore(%335 : memref<!tpu.dma_semaphore, #tpu.memory_space<semaphore_mem>>) src(%332 : memref<1x256xf32, #tpu.memory_space<any>>) dst(%333 : memref<1x256xf32, #tpu.memory_space<vmem>>)
    %c18_i32_216 = arith.constant 18 : i32
    %c0_i32_217 = arith.constant 0 : i32
    %336 = tpu.memref_slice %arg5[%109, %c0_i32_217] : memref<500x256xf32, #tpu.memory_space<any>> -> memref<1x256xf32, #tpu.memory_space<any>>
    %c18_i32_218 = arith.constant 18 : i32
    %c0_i32_219 = arith.constant 0 : i32
    %337 = tpu.memref_slice %arg7[%c18_i32_218, %c0_i32_219] : memref<48x256xf32, #tpu.memory_space<vmem>> -> memref<1x256xf32, #tpu.memory_space<vmem>>
    %338 = tpu.memref_slice %arg8[%c18_i32_216] : memref<44x!tpu.dma_semaphore, #tpu.memory_space<semaphore_mem>> -> memref<1x!tpu.dma_semaphore, #tpu.memory_space<semaphore_mem>>
    %339 = tpu.memref_squeeze %338 : memref<1x!tpu.dma_semaphore, #tpu.memory_space<semaphore_mem>> -> memref<!tpu.dma_semaphore, #tpu.memory_space<semaphore_mem>>
    tpu.wait_dma2 semaphore(%339 : memref<!tpu.dma_semaphore, #tpu.memory_space<semaphore_mem>>) src(%336 : memref<1x256xf32, #tpu.memory_space<any>>) dst(%337 : memref<1x256xf32, #tpu.memory_space<vmem>>)
    %c19_i32_220 = arith.constant 19 : i32
    %c0_i32_221 = arith.constant 0 : i32
    %340 = tpu.memref_slice %arg5[%115, %c0_i32_221] : memref<500x256xf32, #tpu.memory_space<any>> -> memref<1x256xf32, #tpu.memory_space<any>>
    %c19_i32_222 = arith.constant 19 : i32
    %c0_i32_223 = arith.constant 0 : i32
    %341 = tpu.memref_slice %arg7[%c19_i32_222, %c0_i32_223] : memref<48x256xf32, #tpu.memory_space<vmem>> -> memref<1x256xf32, #tpu.memory_space<vmem>>
    %342 = tpu.memref_slice %arg8[%c19_i32_220] : memref<44x!tpu.dma_semaphore, #tpu.memory_space<semaphore_mem>> -> memref<1x!tpu.dma_semaphore, #tpu.memory_space<semaphore_mem>>
    %343 = tpu.memref_squeeze %342 : memref<1x!tpu.dma_semaphore, #tpu.memory_space<semaphore_mem>> -> memref<!tpu.dma_semaphore, #tpu.memory_space<semaphore_mem>>
    tpu.wait_dma2 semaphore(%343 : memref<!tpu.dma_semaphore, #tpu.memory_space<semaphore_mem>>) src(%340 : memref<1x256xf32, #tpu.memory_space<any>>) dst(%341 : memref<1x256xf32, #tpu.memory_space<vmem>>)
    %c20_i32_224 = arith.constant 20 : i32
    %c0_i32_225 = arith.constant 0 : i32
    %344 = tpu.memref_slice %arg5[%121, %c0_i32_225] : memref<500x256xf32, #tpu.memory_space<any>> -> memref<1x256xf32, #tpu.memory_space<any>>
    %c20_i32_226 = arith.constant 20 : i32
    %c0_i32_227 = arith.constant 0 : i32
    %345 = tpu.memref_slice %arg7[%c20_i32_226, %c0_i32_227] : memref<48x256xf32, #tpu.memory_space<vmem>> -> memref<1x256xf32, #tpu.memory_space<vmem>>
    %346 = tpu.memref_slice %arg8[%c20_i32_224] : memref<44x!tpu.dma_semaphore, #tpu.memory_space<semaphore_mem>> -> memref<1x!tpu.dma_semaphore, #tpu.memory_space<semaphore_mem>>
    %347 = tpu.memref_squeeze %346 : memref<1x!tpu.dma_semaphore, #tpu.memory_space<semaphore_mem>> -> memref<!tpu.dma_semaphore, #tpu.memory_space<semaphore_mem>>
    tpu.wait_dma2 semaphore(%347 : memref<!tpu.dma_semaphore, #tpu.memory_space<semaphore_mem>>) src(%344 : memref<1x256xf32, #tpu.memory_space<any>>) dst(%345 : memref<1x256xf32, #tpu.memory_space<vmem>>)
    %c21_i32_228 = arith.constant 21 : i32
    %c0_i32_229 = arith.constant 0 : i32
    %348 = tpu.memref_slice %arg5[%127, %c0_i32_229] : memref<500x256xf32, #tpu.memory_space<any>> -> memref<1x256xf32, #tpu.memory_space<any>>
    %c21_i32_230 = arith.constant 21 : i32
    %c0_i32_231 = arith.constant 0 : i32
    %349 = tpu.memref_slice %arg7[%c21_i32_230, %c0_i32_231] : memref<48x256xf32, #tpu.memory_space<vmem>> -> memref<1x256xf32, #tpu.memory_space<vmem>>
    %350 = tpu.memref_slice %arg8[%c21_i32_228] : memref<44x!tpu.dma_semaphore, #tpu.memory_space<semaphore_mem>> -> memref<1x!tpu.dma_semaphore, #tpu.memory_space<semaphore_mem>>
    %351 = tpu.memref_squeeze %350 : memref<1x!tpu.dma_semaphore, #tpu.memory_space<semaphore_mem>> -> memref<!tpu.dma_semaphore, #tpu.memory_space<semaphore_mem>>
    tpu.wait_dma2 semaphore(%351 : memref<!tpu.dma_semaphore, #tpu.memory_space<semaphore_mem>>) src(%348 : memref<1x256xf32, #tpu.memory_space<any>>) dst(%349 : memref<1x256xf32, #tpu.memory_space<vmem>>)
    %c22_i32_232 = arith.constant 22 : i32
    %c0_i32_233 = arith.constant 0 : i32
    %352 = tpu.memref_slice %arg5[%133, %c0_i32_233] : memref<500x256xf32, #tpu.memory_space<any>> -> memref<1x256xf32, #tpu.memory_space<any>>
    %c22_i32_234 = arith.constant 22 : i32
    %c0_i32_235 = arith.constant 0 : i32
    %353 = tpu.memref_slice %arg7[%c22_i32_234, %c0_i32_235] : memref<48x256xf32, #tpu.memory_space<vmem>> -> memref<1x256xf32, #tpu.memory_space<vmem>>
    %354 = tpu.memref_slice %arg8[%c22_i32_232] : memref<44x!tpu.dma_semaphore, #tpu.memory_space<semaphore_mem>> -> memref<1x!tpu.dma_semaphore, #tpu.memory_space<semaphore_mem>>
    %355 = tpu.memref_squeeze %354 : memref<1x!tpu.dma_semaphore, #tpu.memory_space<semaphore_mem>> -> memref<!tpu.dma_semaphore, #tpu.memory_space<semaphore_mem>>
    tpu.wait_dma2 semaphore(%355 : memref<!tpu.dma_semaphore, #tpu.memory_space<semaphore_mem>>) src(%352 : memref<1x256xf32, #tpu.memory_space<any>>) dst(%353 : memref<1x256xf32, #tpu.memory_space<vmem>>)
    %c23_i32_236 = arith.constant 23 : i32
    %c0_i32_237 = arith.constant 0 : i32
    %356 = tpu.memref_slice %arg5[%139, %c0_i32_237] : memref<500x256xf32, #tpu.memory_space<any>> -> memref<1x256xf32, #tpu.memory_space<any>>
    %c23_i32_238 = arith.constant 23 : i32
    %c0_i32_239 = arith.constant 0 : i32
    %357 = tpu.memref_slice %arg7[%c23_i32_238, %c0_i32_239] : memref<48x256xf32, #tpu.memory_space<vmem>> -> memref<1x256xf32, #tpu.memory_space<vmem>>
    %358 = tpu.memref_slice %arg8[%c23_i32_236] : memref<44x!tpu.dma_semaphore, #tpu.memory_space<semaphore_mem>> -> memref<1x!tpu.dma_semaphore, #tpu.memory_space<semaphore_mem>>
    %359 = tpu.memref_squeeze %358 : memref<1x!tpu.dma_semaphore, #tpu.memory_space<semaphore_mem>> -> memref<!tpu.dma_semaphore, #tpu.memory_space<semaphore_mem>>
    tpu.wait_dma2 semaphore(%359 : memref<!tpu.dma_semaphore, #tpu.memory_space<semaphore_mem>>) src(%356 : memref<1x256xf32, #tpu.memory_space<any>>) dst(%357 : memref<1x256xf32, #tpu.memory_space<vmem>>)
    %c24_i32_240 = arith.constant 24 : i32
    %c0_i32_241 = arith.constant 0 : i32
    %360 = tpu.memref_slice %arg5[%145, %c0_i32_241] : memref<500x256xf32, #tpu.memory_space<any>> -> memref<1x256xf32, #tpu.memory_space<any>>
    %c24_i32_242 = arith.constant 24 : i32
    %c0_i32_243 = arith.constant 0 : i32
    %361 = tpu.memref_slice %arg7[%c24_i32_242, %c0_i32_243] : memref<48x256xf32, #tpu.memory_space<vmem>> -> memref<1x256xf32, #tpu.memory_space<vmem>>
    %362 = tpu.memref_slice %arg8[%c24_i32_240] : memref<44x!tpu.dma_semaphore, #tpu.memory_space<semaphore_mem>> -> memref<1x!tpu.dma_semaphore, #tpu.memory_space<semaphore_mem>>
    %363 = tpu.memref_squeeze %362 : memref<1x!tpu.dma_semaphore, #tpu.memory_space<semaphore_mem>> -> memref<!tpu.dma_semaphore, #tpu.memory_space<semaphore_mem>>
    tpu.wait_dma2 semaphore(%363 : memref<!tpu.dma_semaphore, #tpu.memory_space<semaphore_mem>>) src(%360 : memref<1x256xf32, #tpu.memory_space<any>>) dst(%361 : memref<1x256xf32, #tpu.memory_space<vmem>>)
    %c25_i32_244 = arith.constant 25 : i32
    %c0_i32_245 = arith.constant 0 : i32
    %364 = tpu.memref_slice %arg5[%151, %c0_i32_245] : memref<500x256xf32, #tpu.memory_space<any>> -> memref<1x256xf32, #tpu.memory_space<any>>
    %c25_i32_246 = arith.constant 25 : i32
    %c0_i32_247 = arith.constant 0 : i32
    %365 = tpu.memref_slice %arg7[%c25_i32_246, %c0_i32_247] : memref<48x256xf32, #tpu.memory_space<vmem>> -> memref<1x256xf32, #tpu.memory_space<vmem>>
    %366 = tpu.memref_slice %arg8[%c25_i32_244] : memref<44x!tpu.dma_semaphore, #tpu.memory_space<semaphore_mem>> -> memref<1x!tpu.dma_semaphore, #tpu.memory_space<semaphore_mem>>
    %367 = tpu.memref_squeeze %366 : memref<1x!tpu.dma_semaphore, #tpu.memory_space<semaphore_mem>> -> memref<!tpu.dma_semaphore, #tpu.memory_space<semaphore_mem>>
    tpu.wait_dma2 semaphore(%367 : memref<!tpu.dma_semaphore, #tpu.memory_space<semaphore_mem>>) src(%364 : memref<1x256xf32, #tpu.memory_space<any>>) dst(%365 : memref<1x256xf32, #tpu.memory_space<vmem>>)
    %c26_i32_248 = arith.constant 26 : i32
    %c0_i32_249 = arith.constant 0 : i32
    %368 = tpu.memref_slice %arg5[%157, %c0_i32_249] : memref<500x256xf32, #tpu.memory_space<any>> -> memref<1x256xf32, #tpu.memory_space<any>>
    %c26_i32_250 = arith.constant 26 : i32
    %c0_i32_251 = arith.constant 0 : i32
    %369 = tpu.memref_slice %arg7[%c26_i32_250, %c0_i32_251] : memref<48x256xf32, #tpu.memory_space<vmem>> -> memref<1x256xf32, #tpu.memory_space<vmem>>
    %370 = tpu.memref_slice %arg8[%c26_i32_248] : memref<44x!tpu.dma_semaphore, #tpu.memory_space<semaphore_mem>> -> memref<1x!tpu.dma_semaphore, #tpu.memory_space<semaphore_mem>>
    %371 = tpu.memref_squeeze %370 : memref<1x!tpu.dma_semaphore, #tpu.memory_space<semaphore_mem>> -> memref<!tpu.dma_semaphore, #tpu.memory_space<semaphore_mem>>
    tpu.wait_dma2 semaphore(%371 : memref<!tpu.dma_semaphore, #tpu.memory_space<semaphore_mem>>) src(%368 : memref<1x256xf32, #tpu.memory_space<any>>) dst(%369 : memref<1x256xf32, #tpu.memory_space<vmem>>)
    %c27_i32_252 = arith.constant 27 : i32
    %c0_i32_253 = arith.constant 0 : i32
    %372 = tpu.memref_slice %arg5[%163, %c0_i32_253] : memref<500x256xf32, #tpu.memory_space<any>> -> memref<1x256xf32, #tpu.memory_space<any>>
    %c27_i32_254 = arith.constant 27 : i32
    %c0_i32_255 = arith.constant 0 : i32
    %373 = tpu.memref_slice %arg7[%c27_i32_254, %c0_i32_255] : memref<48x256xf32, #tpu.memory_space<vmem>> -> memref<1x256xf32, #tpu.memory_space<vmem>>
    %374 = tpu.memref_slice %arg8[%c27_i32_252] : memref<44x!tpu.dma_semaphore, #tpu.memory_space<semaphore_mem>> -> memref<1x!tpu.dma_semaphore, #tpu.memory_space<semaphore_mem>>
    %375 = tpu.memref_squeeze %374 : memref<1x!tpu.dma_semaphore, #tpu.memory_space<semaphore_mem>> -> memref<!tpu.dma_semaphore, #tpu.memory_space<semaphore_mem>>
    tpu.wait_dma2 semaphore(%375 : memref<!tpu.dma_semaphore, #tpu.memory_space<semaphore_mem>>) src(%372 : memref<1x256xf32, #tpu.memory_space<any>>) dst(%373 : memref<1x256xf32, #tpu.memory_space<vmem>>)
    %c28_i32_256 = arith.constant 28 : i32
    %c0_i32_257 = arith.constant 0 : i32
    %376 = tpu.memref_slice %arg5[%169, %c0_i32_257] : memref<500x256xf32, #tpu.memory_space<any>> -> memref<1x256xf32, #tpu.memory_space<any>>
    %c28_i32_258 = arith.constant 28 : i32
    %c0_i32_259 = arith.constant 0 : i32
    %377 = tpu.memref_slice %arg7[%c28_i32_258, %c0_i32_259] : memref<48x256xf32, #tpu.memory_space<vmem>> -> memref<1x256xf32, #tpu.memory_space<vmem>>
    %378 = tpu.memref_slice %arg8[%c28_i32_256] : memref<44x!tpu.dma_semaphore, #tpu.memory_space<semaphore_mem>> -> memref<1x!tpu.dma_semaphore, #tpu.memory_space<semaphore_mem>>
    %379 = tpu.memref_squeeze %378 : memref<1x!tpu.dma_semaphore, #tpu.memory_space<semaphore_mem>> -> memref<!tpu.dma_semaphore, #tpu.memory_space<semaphore_mem>>
    tpu.wait_dma2 semaphore(%379 : memref<!tpu.dma_semaphore, #tpu.memory_space<semaphore_mem>>) src(%376 : memref<1x256xf32, #tpu.memory_space<any>>) dst(%377 : memref<1x256xf32, #tpu.memory_space<vmem>>)
    %c29_i32_260 = arith.constant 29 : i32
    %c0_i32_261 = arith.constant 0 : i32
    %380 = tpu.memref_slice %arg5[%175, %c0_i32_261] : memref<500x256xf32, #tpu.memory_space<any>> -> memref<1x256xf32, #tpu.memory_space<any>>
    %c29_i32_262 = arith.constant 29 : i32
    %c0_i32_263 = arith.constant 0 : i32
    %381 = tpu.memref_slice %arg7[%c29_i32_262, %c0_i32_263] : memref<48x256xf32, #tpu.memory_space<vmem>> -> memref<1x256xf32, #tpu.memory_space<vmem>>
    %382 = tpu.memref_slice %arg8[%c29_i32_260] : memref<44x!tpu.dma_semaphore, #tpu.memory_space<semaphore_mem>> -> memref<1x!tpu.dma_semaphore, #tpu.memory_space<semaphore_mem>>
    %383 = tpu.memref_squeeze %382 : memref<1x!tpu.dma_semaphore, #tpu.memory_space<semaphore_mem>> -> memref<!tpu.dma_semaphore, #tpu.memory_space<semaphore_mem>>
    tpu.wait_dma2 semaphore(%383 : memref<!tpu.dma_semaphore, #tpu.memory_space<semaphore_mem>>) src(%380 : memref<1x256xf32, #tpu.memory_space<any>>) dst(%381 : memref<1x256xf32, #tpu.memory_space<vmem>>)
    %c30_i32_264 = arith.constant 30 : i32
    %c0_i32_265 = arith.constant 0 : i32
    %384 = tpu.memref_slice %arg5[%181, %c0_i32_265] : memref<500x256xf32, #tpu.memory_space<any>> -> memref<1x256xf32, #tpu.memory_space<any>>
    %c30_i32_266 = arith.constant 30 : i32
    %c0_i32_267 = arith.constant 0 : i32
    %385 = tpu.memref_slice %arg7[%c30_i32_266, %c0_i32_267] : memref<48x256xf32, #tpu.memory_space<vmem>> -> memref<1x256xf32, #tpu.memory_space<vmem>>
    %386 = tpu.memref_slice %arg8[%c30_i32_264] : memref<44x!tpu.dma_semaphore, #tpu.memory_space<semaphore_mem>> -> memref<1x!tpu.dma_semaphore, #tpu.memory_space<semaphore_mem>>
    %387 = tpu.memref_squeeze %386 : memref<1x!tpu.dma_semaphore, #tpu.memory_space<semaphore_mem>> -> memref<!tpu.dma_semaphore, #tpu.memory_space<semaphore_mem>>
    tpu.wait_dma2 semaphore(%387 : memref<!tpu.dma_semaphore, #tpu.memory_space<semaphore_mem>>) src(%384 : memref<1x256xf32, #tpu.memory_space<any>>) dst(%385 : memref<1x256xf32, #tpu.memory_space<vmem>>)
    %c31_i32_268 = arith.constant 31 : i32
    %c0_i32_269 = arith.constant 0 : i32
    %388 = tpu.memref_slice %arg5[%187, %c0_i32_269] : memref<500x256xf32, #tpu.memory_space<any>> -> memref<1x256xf32, #tpu.memory_space<any>>
    %c31_i32_270 = arith.constant 31 : i32
    %c0_i32_271 = arith.constant 0 : i32
    %389 = tpu.memref_slice %arg7[%c31_i32_270, %c0_i32_271] : memref<48x256xf32, #tpu.memory_space<vmem>> -> memref<1x256xf32, #tpu.memory_space<vmem>>
    %390 = tpu.memref_slice %arg8[%c31_i32_268] : memref<44x!tpu.dma_semaphore, #tpu.memory_space<semaphore_mem>> -> memref<1x!tpu.dma_semaphore, #tpu.memory_space<semaphore_mem>>
    %391 = tpu.memref_squeeze %390 : memref<1x!tpu.dma_semaphore, #tpu.memory_space<semaphore_mem>> -> memref<!tpu.dma_semaphore, #tpu.memory_space<semaphore_mem>>
    tpu.wait_dma2 semaphore(%391 : memref<!tpu.dma_semaphore, #tpu.memory_space<semaphore_mem>>) src(%388 : memref<1x256xf32, #tpu.memory_space<any>>) dst(%389 : memref<1x256xf32, #tpu.memory_space<vmem>>)
    %c32_i32_272 = arith.constant 32 : i32
    %c0_i32_273 = arith.constant 0 : i32
    %392 = tpu.memref_slice %arg5[%193, %c0_i32_273] : memref<500x256xf32, #tpu.memory_space<any>> -> memref<1x256xf32, #tpu.memory_space<any>>
    %c32_i32_274 = arith.constant 32 : i32
    %c0_i32_275 = arith.constant 0 : i32
    %393 = tpu.memref_slice %arg7[%c32_i32_274, %c0_i32_275] : memref<48x256xf32, #tpu.memory_space<vmem>> -> memref<1x256xf32, #tpu.memory_space<vmem>>
    %394 = tpu.memref_slice %arg8[%c32_i32_272] : memref<44x!tpu.dma_semaphore, #tpu.memory_space<semaphore_mem>> -> memref<1x!tpu.dma_semaphore, #tpu.memory_space<semaphore_mem>>
    %395 = tpu.memref_squeeze %394 : memref<1x!tpu.dma_semaphore, #tpu.memory_space<semaphore_mem>> -> memref<!tpu.dma_semaphore, #tpu.memory_space<semaphore_mem>>
    tpu.wait_dma2 semaphore(%395 : memref<!tpu.dma_semaphore, #tpu.memory_space<semaphore_mem>>) src(%392 : memref<1x256xf32, #tpu.memory_space<any>>) dst(%393 : memref<1x256xf32, #tpu.memory_space<vmem>>)
    %c33_i32_276 = arith.constant 33 : i32
    %c0_i32_277 = arith.constant 0 : i32
    %396 = tpu.memref_slice %arg5[%199, %c0_i32_277] : memref<500x256xf32, #tpu.memory_space<any>> -> memref<1x256xf32, #tpu.memory_space<any>>
    %c33_i32_278 = arith.constant 33 : i32
    %c0_i32_279 = arith.constant 0 : i32
    %397 = tpu.memref_slice %arg7[%c33_i32_278, %c0_i32_279] : memref<48x256xf32, #tpu.memory_space<vmem>> -> memref<1x256xf32, #tpu.memory_space<vmem>>
    %398 = tpu.memref_slice %arg8[%c33_i32_276] : memref<44x!tpu.dma_semaphore, #tpu.memory_space<semaphore_mem>> -> memref<1x!tpu.dma_semaphore, #tpu.memory_space<semaphore_mem>>
    %399 = tpu.memref_squeeze %398 : memref<1x!tpu.dma_semaphore, #tpu.memory_space<semaphore_mem>> -> memref<!tpu.dma_semaphore, #tpu.memory_space<semaphore_mem>>
    tpu.wait_dma2 semaphore(%399 : memref<!tpu.dma_semaphore, #tpu.memory_space<semaphore_mem>>) src(%396 : memref<1x256xf32, #tpu.memory_space<any>>) dst(%397 : memref<1x256xf32, #tpu.memory_space<vmem>>)
    %c34_i32_280 = arith.constant 34 : i32
    %c0_i32_281 = arith.constant 0 : i32
    %400 = tpu.memref_slice %arg5[%205, %c0_i32_281] : memref<500x256xf32, #tpu.memory_space<any>> -> memref<1x256xf32, #tpu.memory_space<any>>
    %c34_i32_282 = arith.constant 34 : i32
    %c0_i32_283 = arith.constant 0 : i32
    %401 = tpu.memref_slice %arg7[%c34_i32_282, %c0_i32_283] : memref<48x256xf32, #tpu.memory_space<vmem>> -> memref<1x256xf32, #tpu.memory_space<vmem>>
    %402 = tpu.memref_slice %arg8[%c34_i32_280] : memref<44x!tpu.dma_semaphore, #tpu.memory_space<semaphore_mem>> -> memref<1x!tpu.dma_semaphore, #tpu.memory_space<semaphore_mem>>
    %403 = tpu.memref_squeeze %402 : memref<1x!tpu.dma_semaphore, #tpu.memory_space<semaphore_mem>> -> memref<!tpu.dma_semaphore, #tpu.memory_space<semaphore_mem>>
    tpu.wait_dma2 semaphore(%403 : memref<!tpu.dma_semaphore, #tpu.memory_space<semaphore_mem>>) src(%400 : memref<1x256xf32, #tpu.memory_space<any>>) dst(%401 : memref<1x256xf32, #tpu.memory_space<vmem>>)
    %c35_i32_284 = arith.constant 35 : i32
    %c0_i32_285 = arith.constant 0 : i32
    %404 = tpu.memref_slice %arg5[%211, %c0_i32_285] : memref<500x256xf32, #tpu.memory_space<any>> -> memref<1x256xf32, #tpu.memory_space<any>>
    %c35_i32_286 = arith.constant 35 : i32
    %c0_i32_287 = arith.constant 0 : i32
    %405 = tpu.memref_slice %arg7[%c35_i32_286, %c0_i32_287] : memref<48x256xf32, #tpu.memory_space<vmem>> -> memref<1x256xf32, #tpu.memory_space<vmem>>
    %406 = tpu.memref_slice %arg8[%c35_i32_284] : memref<44x!tpu.dma_semaphore, #tpu.memory_space<semaphore_mem>> -> memref<1x!tpu.dma_semaphore, #tpu.memory_space<semaphore_mem>>
    %407 = tpu.memref_squeeze %406 : memref<1x!tpu.dma_semaphore, #tpu.memory_space<semaphore_mem>> -> memref<!tpu.dma_semaphore, #tpu.memory_space<semaphore_mem>>
    tpu.wait_dma2 semaphore(%407 : memref<!tpu.dma_semaphore, #tpu.memory_space<semaphore_mem>>) src(%404 : memref<1x256xf32, #tpu.memory_space<any>>) dst(%405 : memref<1x256xf32, #tpu.memory_space<vmem>>)
    %c36_i32_288 = arith.constant 36 : i32
    %c0_i32_289 = arith.constant 0 : i32
    %408 = tpu.memref_slice %arg5[%217, %c0_i32_289] : memref<500x256xf32, #tpu.memory_space<any>> -> memref<1x256xf32, #tpu.memory_space<any>>
    %c36_i32_290 = arith.constant 36 : i32
    %c0_i32_291 = arith.constant 0 : i32
    %409 = tpu.memref_slice %arg7[%c36_i32_290, %c0_i32_291] : memref<48x256xf32, #tpu.memory_space<vmem>> -> memref<1x256xf32, #tpu.memory_space<vmem>>
    %410 = tpu.memref_slice %arg8[%c36_i32_288] : memref<44x!tpu.dma_semaphore, #tpu.memory_space<semaphore_mem>> -> memref<1x!tpu.dma_semaphore, #tpu.memory_space<semaphore_mem>>
    %411 = tpu.memref_squeeze %410 : memref<1x!tpu.dma_semaphore, #tpu.memory_space<semaphore_mem>> -> memref<!tpu.dma_semaphore, #tpu.memory_space<semaphore_mem>>
    tpu.wait_dma2 semaphore(%411 : memref<!tpu.dma_semaphore, #tpu.memory_space<semaphore_mem>>) src(%408 : memref<1x256xf32, #tpu.memory_space<any>>) dst(%409 : memref<1x256xf32, #tpu.memory_space<vmem>>)
    %c37_i32_292 = arith.constant 37 : i32
    %c0_i32_293 = arith.constant 0 : i32
    %412 = tpu.memref_slice %arg5[%223, %c0_i32_293] : memref<500x256xf32, #tpu.memory_space<any>> -> memref<1x256xf32, #tpu.memory_space<any>>
    %c37_i32_294 = arith.constant 37 : i32
    %c0_i32_295 = arith.constant 0 : i32
    %413 = tpu.memref_slice %arg7[%c37_i32_294, %c0_i32_295] : memref<48x256xf32, #tpu.memory_space<vmem>> -> memref<1x256xf32, #tpu.memory_space<vmem>>
    %414 = tpu.memref_slice %arg8[%c37_i32_292] : memref<44x!tpu.dma_semaphore, #tpu.memory_space<semaphore_mem>> -> memref<1x!tpu.dma_semaphore, #tpu.memory_space<semaphore_mem>>
    %415 = tpu.memref_squeeze %414 : memref<1x!tpu.dma_semaphore, #tpu.memory_space<semaphore_mem>> -> memref<!tpu.dma_semaphore, #tpu.memory_space<semaphore_mem>>
    tpu.wait_dma2 semaphore(%415 : memref<!tpu.dma_semaphore, #tpu.memory_space<semaphore_mem>>) src(%412 : memref<1x256xf32, #tpu.memory_space<any>>) dst(%413 : memref<1x256xf32, #tpu.memory_space<vmem>>)
    %c38_i32_296 = arith.constant 38 : i32
    %c0_i32_297 = arith.constant 0 : i32
    %416 = tpu.memref_slice %arg5[%229, %c0_i32_297] : memref<500x256xf32, #tpu.memory_space<any>> -> memref<1x256xf32, #tpu.memory_space<any>>
    %c38_i32_298 = arith.constant 38 : i32
    %c0_i32_299 = arith.constant 0 : i32
    %417 = tpu.memref_slice %arg7[%c38_i32_298, %c0_i32_299] : memref<48x256xf32, #tpu.memory_space<vmem>> -> memref<1x256xf32, #tpu.memory_space<vmem>>
    %418 = tpu.memref_slice %arg8[%c38_i32_296] : memref<44x!tpu.dma_semaphore, #tpu.memory_space<semaphore_mem>> -> memref<1x!tpu.dma_semaphore, #tpu.memory_space<semaphore_mem>>
    %419 = tpu.memref_squeeze %418 : memref<1x!tpu.dma_semaphore, #tpu.memory_space<semaphore_mem>> -> memref<!tpu.dma_semaphore, #tpu.memory_space<semaphore_mem>>
    tpu.wait_dma2 semaphore(%419 : memref<!tpu.dma_semaphore, #tpu.memory_space<semaphore_mem>>) src(%416 : memref<1x256xf32, #tpu.memory_space<any>>) dst(%417 : memref<1x256xf32, #tpu.memory_space<vmem>>)
    %c39_i32_300 = arith.constant 39 : i32
    %c0_i32_301 = arith.constant 0 : i32
    %420 = tpu.memref_slice %arg5[%235, %c0_i32_301] : memref<500x256xf32, #tpu.memory_space<any>> -> memref<1x256xf32, #tpu.memory_space<any>>
    %c39_i32_302 = arith.constant 39 : i32
    %c0_i32_303 = arith.constant 0 : i32
    %421 = tpu.memref_slice %arg7[%c39_i32_302, %c0_i32_303] : memref<48x256xf32, #tpu.memory_space<vmem>> -> memref<1x256xf32, #tpu.memory_space<vmem>>
    %422 = tpu.memref_slice %arg8[%c39_i32_300] : memref<44x!tpu.dma_semaphore, #tpu.memory_space<semaphore_mem>> -> memref<1x!tpu.dma_semaphore, #tpu.memory_space<semaphore_mem>>
    %423 = tpu.memref_squeeze %422 : memref<1x!tpu.dma_semaphore, #tpu.memory_space<semaphore_mem>> -> memref<!tpu.dma_semaphore, #tpu.memory_space<semaphore_mem>>
    tpu.wait_dma2 semaphore(%423 : memref<!tpu.dma_semaphore, #tpu.memory_space<semaphore_mem>>) src(%420 : memref<1x256xf32, #tpu.memory_space<any>>) dst(%421 : memref<1x256xf32, #tpu.memory_space<vmem>>)
    %c40_i32_304 = arith.constant 40 : i32
    %c0_i32_305 = arith.constant 0 : i32
    %424 = tpu.memref_slice %arg5[%241, %c0_i32_305] : memref<500x256xf32, #tpu.memory_space<any>> -> memref<1x256xf32, #tpu.memory_space<any>>
    %c40_i32_306 = arith.constant 40 : i32
    %c0_i32_307 = arith.constant 0 : i32
    %425 = tpu.memref_slice %arg7[%c40_i32_306, %c0_i32_307] : memref<48x256xf32, #tpu.memory_space<vmem>> -> memref<1x256xf32, #tpu.memory_space<vmem>>
    %426 = tpu.memref_slice %arg8[%c40_i32_304] : memref<44x!tpu.dma_semaphore, #tpu.memory_space<semaphore_mem>> -> memref<1x!tpu.dma_semaphore, #tpu.memory_space<semaphore_mem>>
    %427 = tpu.memref_squeeze %426 : memref<1x!tpu.dma_semaphore, #tpu.memory_space<semaphore_mem>> -> memref<!tpu.dma_semaphore, #tpu.memory_space<semaphore_mem>>
    tpu.wait_dma2 semaphore(%427 : memref<!tpu.dma_semaphore, #tpu.memory_space<semaphore_mem>>) src(%424 : memref<1x256xf32, #tpu.memory_space<any>>) dst(%425 : memref<1x256xf32, #tpu.memory_space<vmem>>)
    %c41_i32_308 = arith.constant 41 : i32
    %c0_i32_309 = arith.constant 0 : i32
    %428 = tpu.memref_slice %arg5[%247, %c0_i32_309] : memref<500x256xf32, #tpu.memory_space<any>> -> memref<1x256xf32, #tpu.memory_space<any>>
    %c41_i32_310 = arith.constant 41 : i32
    %c0_i32_311 = arith.constant 0 : i32
    %429 = tpu.memref_slice %arg7[%c41_i32_310, %c0_i32_311] : memref<48x256xf32, #tpu.memory_space<vmem>> -> memref<1x256xf32, #tpu.memory_space<vmem>>
    %430 = tpu.memref_slice %arg8[%c41_i32_308] : memref<44x!tpu.dma_semaphore, #tpu.memory_space<semaphore_mem>> -> memref<1x!tpu.dma_semaphore, #tpu.memory_space<semaphore_mem>>
    %431 = tpu.memref_squeeze %430 : memref<1x!tpu.dma_semaphore, #tpu.memory_space<semaphore_mem>> -> memref<!tpu.dma_semaphore, #tpu.memory_space<semaphore_mem>>
    tpu.wait_dma2 semaphore(%431 : memref<!tpu.dma_semaphore, #tpu.memory_space<semaphore_mem>>) src(%428 : memref<1x256xf32, #tpu.memory_space<any>>) dst(%429 : memref<1x256xf32, #tpu.memory_space<vmem>>)
    %c42_i32_312 = arith.constant 42 : i32
    %c0_i32_313 = arith.constant 0 : i32
    %432 = tpu.memref_slice %arg5[%253, %c0_i32_313] : memref<500x256xf32, #tpu.memory_space<any>> -> memref<1x256xf32, #tpu.memory_space<any>>
    %c42_i32_314 = arith.constant 42 : i32
    %c0_i32_315 = arith.constant 0 : i32
    %433 = tpu.memref_slice %arg7[%c42_i32_314, %c0_i32_315] : memref<48x256xf32, #tpu.memory_space<vmem>> -> memref<1x256xf32, #tpu.memory_space<vmem>>
    %434 = tpu.memref_slice %arg8[%c42_i32_312] : memref<44x!tpu.dma_semaphore, #tpu.memory_space<semaphore_mem>> -> memref<1x!tpu.dma_semaphore, #tpu.memory_space<semaphore_mem>>
    %435 = tpu.memref_squeeze %434 : memref<1x!tpu.dma_semaphore, #tpu.memory_space<semaphore_mem>> -> memref<!tpu.dma_semaphore, #tpu.memory_space<semaphore_mem>>
    tpu.wait_dma2 semaphore(%435 : memref<!tpu.dma_semaphore, #tpu.memory_space<semaphore_mem>>) src(%432 : memref<1x256xf32, #tpu.memory_space<any>>) dst(%433 : memref<1x256xf32, #tpu.memory_space<vmem>>)
    %c43_i32_316 = arith.constant 43 : i32
    %c0_i32_317 = arith.constant 0 : i32
    %436 = tpu.memref_slice %arg5[%259, %c0_i32_317] : memref<500x256xf32, #tpu.memory_space<any>> -> memref<1x256xf32, #tpu.memory_space<any>>
    %c43_i32_318 = arith.constant 43 : i32
    %c0_i32_319 = arith.constant 0 : i32
    %437 = tpu.memref_slice %arg7[%c43_i32_318, %c0_i32_319] : memref<48x256xf32, #tpu.memory_space<vmem>> -> memref<1x256xf32, #tpu.memory_space<vmem>>
    %438 = tpu.memref_slice %arg8[%c43_i32_316] : memref<44x!tpu.dma_semaphore, #tpu.memory_space<semaphore_mem>> -> memref<1x!tpu.dma_semaphore, #tpu.memory_space<semaphore_mem>>
    %439 = tpu.memref_squeeze %438 : memref<1x!tpu.dma_semaphore, #tpu.memory_space<semaphore_mem>> -> memref<!tpu.dma_semaphore, #tpu.memory_space<semaphore_mem>>
    tpu.wait_dma2 semaphore(%439 : memref<!tpu.dma_semaphore, #tpu.memory_space<semaphore_mem>>) src(%436 : memref<1x256xf32, #tpu.memory_space<any>>) dst(%437 : memref<1x256xf32, #tpu.memory_space<vmem>>)
    %c0_320 = arith.constant 0 : index
    %c0_321 = arith.constant 0 : index
    %440 = vector.load %arg7[%c0_320, %c0_321] : memref<48x256xf32, #tpu.memory_space<vmem>>, vector<8x256xf32>
    %cst = arith.constant dense<0.000000e+00> : vector<256xf32>
    %441 = vector.multi_reduction <add>, %440, %cst [0] : vector<8x256xf32> to vector<256xf32>
    %442 = vector.shape_cast %441 : vector<256xf32> to vector<1x256xf32>
    %c8_322 = arith.constant 8 : index
    %c0_323 = arith.constant 0 : index
    %443 = vector.load %arg7[%c8_322, %c0_323] : memref<48x256xf32, #tpu.memory_space<vmem>>, vector<4x256xf32>
    %cst_324 = arith.constant dense<0.000000e+00> : vector<256xf32>
    %444 = vector.multi_reduction <add>, %443, %cst_324 [0] : vector<4x256xf32> to vector<256xf32>
    %445 = vector.shape_cast %444 : vector<256xf32> to vector<1x256xf32>
    %c12_325 = arith.constant 12 : index
    %c0_326 = arith.constant 0 : index
    %446 = vector.load %arg7[%c12_325, %c0_326] : memref<48x256xf32, #tpu.memory_space<vmem>>, vector<32x256xf32>
    %cst_327 = arith.constant dense<0.000000e+00> : vector<256xf32>
    %447 = vector.multi_reduction <add>, %446, %cst_327 [0] : vector<32x256xf32> to vector<256xf32>
    %448 = vector.shape_cast %447 : vector<256xf32> to vector<1x256xf32>
    %449 = arith.mulf %442, %448 : vector<1x256xf32>
    %450 = arith.mulf %442, %445 : vector<1x256xf32>
    %451 = arith.mulf %442, %442 : vector<1x256xf32>
    %452 = arith.mulf %445, %445 : vector<1x256xf32>
    %453 = arith.mulf %448, %448 : vector<1x256xf32>
    %454 = tpu.concatenate %449, %450, %451, %452, %453 in 0 : vector<1x256xf32>, vector<1x256xf32>, vector<1x256xf32>, vector<1x256xf32>, vector<1x256xf32> -> vector<5x256xf32>
    %cst_328 = arith.constant dense<0.000000e+00> : vector<5xf32>
    %455 = vector.multi_reduction <add>, %454, %cst_328 [1] : vector<5x256xf32> to vector<5xf32>
    %456 = vector.extract_strided_slice %455 {offsets = [0], sizes = [1], strides = [1]} : vector<5xf32> to vector<1xf32>
    %457 = vector.extract %456[0] : f32 from vector<1xf32>
    %458 = vector.extract_strided_slice %455 {offsets = [1], sizes = [1], strides = [1]} : vector<5xf32> to vector<1xf32>
    %459 = vector.extract %458[0] : f32 from vector<1xf32>
    %460 = vector.extract_strided_slice %455 {offsets = [2], sizes = [1], strides = [1]} : vector<5xf32> to vector<1xf32>
    %461 = vector.extract %460[0] : f32 from vector<1xf32>
    %462 = vector.extract_strided_slice %455 {offsets = [3], sizes = [1], strides = [1]} : vector<5xf32> to vector<1xf32>
    %463 = vector.extract %462[0] : f32 from vector<1xf32>
    %464 = vector.extract_strided_slice %455 {offsets = [4], sizes = [1], strides = [1]} : vector<5xf32> to vector<1xf32>
    %465 = vector.extract %464[0] : f32 from vector<1xf32>
    %cst_329 = arith.constant 9.99999993E-9 : f32
    %cst_330 = arith.constant 9.99999993E-9 : f32
    %466 = arith.mulf %cst_329, %cst_330 : f32
    %467 = arith.mulf %461, %465 : f32
    %468 = arith.maximumf %467, %466 : f32
    %469 = math.rsqrt %468 : f32
    %470 = arith.mulf %457, %469 : f32
    %471 = arith.mulf %461, %463 : f32
    %472 = arith.maximumf %471, %466 : f32
    %473 = math.rsqrt %472 : f32
    %474 = arith.mulf %459, %473 : f32
    %475 = arith.subf %470, %474 : f32
    %cst_331 = arith.constant 1.000000e-01 : f32
    %476 = arith.addf %475, %cst_331 : f32
    %cst_332 = arith.constant 0.000000e+00 : f32
    %477 = arith.maximumf %476, %cst_332 : f32
    %478 = vector.broadcast %477 : f32 to vector<1x1x1xf32>
    %c0_333 = arith.constant 0 : index
    %c0_334 = arith.constant 0 : index
    %c0_335 = arith.constant 0 : index
    %479 = vector.load %arg6[%c0_333, %c0_334, %c0_335] : memref<1x1x1xf32, #tpu.memory_space<vmem>>, vector<1x1x1xf32>
    tpu.vector_store %arg6[%c0_333, %c0_334, %c0_335], %478 {strides = array<i32>} : memref<1x1x1xf32, #tpu.memory_space<vmem>>, vector<1x1x1xf32>,
    return
  }
  func.func @transform_2(%arg0: i32, %arg1: memref<4x8xi32, #tpu.memory_space<smem>>, %arg2: memref<4x4xi32, #tpu.memory_space<smem>>, %arg3: memref<4x32xi32, #tpu.memory_space<smem>>) -> (i32, i32, i32) {
    %c0_i32 = arith.constant 0 : i32
    %c0_i32_0 = arith.constant 0 : i32
    %c0_i32_1 = arith.constant 0 : i32
    return %arg0, %c0_i32, %c0_i32_0 : i32, i32, i32
  }
}

</mosaic_0001>

<llo_original>
// kernel: tagspace_forward.1
$region0: #{tagspace_forward.1}
  #allocation0 [shape = 'u32[]', space=smem, size = 0x4, offset = 0x4, fixed_abs, tag = 'smem constant byte address 0x4 - core index']
  #allocation1 [shape = 'u32[144,128]{1,0:T(1,128)}', space=vmem, size = 0x12000, scoped, tag = 'internal scratch']
  #allocation2 [shape = 'f32[48,256]{1,0:T(8,128)}', space=vmem, size = 0xc000, scoped, tag = 'scratch operand']
  #allocation3 [shape = 's32[44]{0}', space=sflag, size = 0xb0, scoped, tag = 'scratch operand']
  #allocation4 [shape = 's32[1]{0}', space=sflag, size = 0x4, scoped, tag = 'scoped memory for tagspace_forward.1']
  #allocation5 [shape = 'u8[2048]{0}', space=smem, size = 0x800, scoped, tag = 'prefetched SMEM operand 0']
  #allocation6 [shape = 'u8[2048]{0}', space=smem, size = 0x800, scoped, tag = 'prefetched SMEM operand 1']
  #allocation7 [shape = 'u8[2048]{0}', space=smem, size = 0x800, scoped, tag = 'prefetched SMEM operand 2']
  #allocation8 [shape = 's32[]', space=sflag, size = 0x4, offset = 0, fixed_abs, tag = 'sflag constant byte address 0x0 - dummy sync flag']
  #allocation9 [shape = 's32[]', space=sflag, size = 0x4, offset = 0, fixed_abs, tag = 'sflag constant byte address 0x0 - dummy sync flag']
  #allocation10 [shape = 's32[]', space=sflag, size = 0x4, offset = 0, fixed_abs, tag = 'sflag constant byte address 0x0 - dummy sync flag']
  #allocation11 [shape = 's32[]', space=sflag, size = 0x4, offset = 0, fixed_abs, tag = 'sflag constant byte address 0x0 - dummy sync flag']
  #allocation12 [shape = 's32[]', space=sflag, size = 0x4, offset = 0, fixed_abs, tag = 'sflag constant byte address 0x0 - dummy sync flag']
  #allocation13 [shape = 's32[]', space=sflag, size = 0x4, offset = 0, fixed_abs, tag = 'sflag constant byte address 0x0 - dummy sync flag']
  #allocation14 [shape = 's32[]', space=sflag, size = 0x4, offset = 0, fixed_abs, tag = 'sflag constant byte address 0x0 - dummy sync flag']
  #allocation15 [shape = 's32[]', space=sflag, size = 0x4, offset = 0, fixed_abs, tag = 'sflag constant byte address 0x0 - dummy sync flag']
  #allocation16 [shape = 's32[]', space=sflag, size = 0x4, offset = 0, fixed_abs, tag = 'sflag constant byte address 0x0 - dummy sync flag']
  #allocation17 [shape = 's32[]', space=sflag, size = 0x4, offset = 0, fixed_abs, tag = 'sflag constant byte address 0x0 - dummy sync flag']
  #allocation18 [shape = 's32[]', space=sflag, size = 0x4, offset = 0, fixed_abs, tag = 'sflag constant byte address 0x0 - dummy sync flag']
  #allocation19 [shape = 's32[]', space=sflag, size = 0x4, offset = 0, fixed_abs, tag = 'sflag constant byte address 0x0 - dummy sync flag']
  #allocation20 [shape = 's32[]', space=sflag, size = 0x4, offset = 0, fixed_abs, tag = 'sflag constant byte address 0x0 - dummy sync flag']
  #allocation21 [shape = 's32[]', space=sflag, size = 0x4, offset = 0, fixed_abs, tag = 'sflag constant byte address 0x0 - dummy sync flag']
  #allocation22 [shape = 's32[]', space=sflag, size = 0x4, offset = 0, fixed_abs, tag = 'sflag constant byte address 0x0 - dummy sync flag']
  #allocation23 [shape = 's32[]', space=sflag, size = 0x4, offset = 0, fixed_abs, tag = 'sflag constant byte address 0x0 - dummy sync flag']
  #allocation24 [shape = 's32[]', space=sflag, size = 0x4, offset = 0, fixed_abs, tag = 'sflag constant byte address 0x0 - dummy sync flag']
  #allocation25 [shape = 's32[]', space=sflag, size = 0x4, offset = 0, fixed_abs, tag = 'sflag constant byte address 0x0 - dummy sync flag']
  #allocation26 [shape = 's32[]', space=sflag, size = 0x4, offset = 0, fixed_abs, tag = 'sflag constant byte address 0x0 - dummy sync flag']
  #allocation27 [shape = 's32[]', space=sflag, size = 0x4, offset = 0, fixed_abs, tag = 'sflag constant byte address 0x0 - dummy sync flag']
  #allocation28 [shape = 's32[]', space=sflag, size = 0x4, offset = 0, fixed_abs, tag = 'sflag constant byte address 0x0 - dummy sync flag']
  #allocation29 [shape = 's32[]', space=sflag, size = 0x4, offset = 0, fixed_abs, tag = 'sflag constant byte address 0x0 - dummy sync flag']
  #allocation30 [shape = 's32[]', space=sflag, size = 0x4, offset = 0, fixed_abs, tag = 'sflag constant byte address 0x0 - dummy sync flag']
  #allocation31 [shape = 's32[]', space=sflag, size = 0x4, offset = 0, fixed_abs, tag = 'sflag constant byte address 0x0 - dummy sync flag']
  #allocation32 [shape = 's32[]', space=sflag, size = 0x4, offset = 0, fixed_abs, tag = 'sflag constant byte address 0x0 - dummy sync flag']
  #allocation33 [shape = 's32[]', space=sflag, size = 0x4, offset = 0, fixed_abs, tag = 'sflag constant byte address 0x0 - dummy sync flag']
  #allocation34 [shape = 's32[]', space=sflag, size = 0x4, offset = 0, fixed_abs, tag = 'sflag constant byte address 0x0 - dummy sync flag']
  #allocation35 [shape = 's32[]', space=sflag, size = 0x4, offset = 0, fixed_abs, tag = 'sflag constant byte address 0x0 - dummy sync flag']
  #allocation36 [shape = 's32[]', space=sflag, size = 0x4, offset = 0, fixed_abs, tag = 'sflag constant byte address 0x0 - dummy sync flag']
  #allocation37 [shape = 's32[]', space=sflag, size = 0x4, offset = 0, fixed_abs, tag = 'sflag constant byte address 0x0 - dummy sync flag']
  #allocation38 [shape = 's32[]', space=sflag, size = 0x4, offset = 0, fixed_abs, tag = 'sflag constant byte address 0x0 - dummy sync flag']
  #allocation39 [shape = 's32[]', space=sflag, size = 0x4, offset = 0, fixed_abs, tag = 'sflag constant byte address 0x0 - dummy sync flag']
  #allocation40 [shape = 's32[]', space=sflag, size = 0x4, offset = 0, fixed_abs, tag = 'sflag constant byte address 0x0 - dummy sync flag']
  #allocation41 [shape = 's32[]', space=sflag, size = 0x4, offset = 0, fixed_abs, tag = 'sflag constant byte address 0x0 - dummy sync flag']
  #allocation42 [shape = 's32[]', space=sflag, size = 0x4, offset = 0, fixed_abs, tag = 'sflag constant byte address 0x0 - dummy sync flag']
  #allocation43 [shape = 's32[]', space=sflag, size = 0x4, offset = 0, fixed_abs, tag = 'sflag constant byte address 0x0 - dummy sync flag']
  #allocation44 [shape = 's32[]', space=sflag, size = 0x4, offset = 0, fixed_abs, tag = 'sflag constant byte address 0x0 - dummy sync flag']
  #allocation45 [shape = 's32[]', space=sflag, size = 0x4, offset = 0, fixed_abs, tag = 'sflag constant byte address 0x0 - dummy sync flag']
  #allocation46 [shape = 's32[]', space=sflag, size = 0x4, offset = 0, fixed_abs, tag = 'sflag constant byte address 0x0 - dummy sync flag']
  #allocation47 [shape = 's32[]', space=sflag, size = 0x4, offset = 0, fixed_abs, tag = 'sflag constant byte address 0x0 - dummy sync flag']
  #allocation48 [shape = 's32[]', space=sflag, size = 0x4, offset = 0, fixed_abs, tag = 'sflag constant byte address 0x0 - dummy sync flag']
  #allocation49 [shape = 's32[]', space=sflag, size = 0x4, offset = 0, fixed_abs, tag = 'sflag constant byte address 0x0 - dummy sync flag']
  #allocation50 [shape = 's32[]', space=sflag, size = 0x4, offset = 0, fixed_abs, tag = 'sflag constant byte address 0x0 - dummy sync flag']
  #allocation51 [shape = 's32[]', space=sflag, size = 0x4, offset = 0, fixed_abs, tag = 'sflag constant byte address 0x0 - dummy sync flag']
  %s0 = inlined_call_operand.hbm [shape: s32[4,8], index: 0, kind: input, shape index: {}]
  %s1 = inlined_call_operand.vmem [shape: s32[4,4], index: 1, kind: input, shape index: {}]
  %s2 = inlined_call_operand.hbm [shape: s32[4,32], index: 2, kind: input, shape index: {}]
  %s3 = inlined_call_operand.hbm [shape: f32[1000,256], index: 3, kind: input, shape index: {}]
  %s4 = inlined_call_operand.hbm [shape: f32[500,256], index: 4, kind: input, shape index: {}]
  %s5 = inlined_call_operand.vmem [shape: f32[4,1,1], index: 5, kind: output, shape index: {}]
  %s6 = sld [smem:[#allocation0]]
  $region25: #{tagspace_forward.1} parent=0
    _
  %s8 = ssub.s32 1, %s6
  %s9 = scalar_select 0, %s8, %s6
  %11 = dma.hbm_to_smem %s0, 64, [#allocation5], [#allocation4]
  %s12 = sshll.u32 %s1, 4
  %s13 = int_to_ptr.vmem [resolvable:$true] %s12
  %15 = dma.vmem_to_smem %s13, 64, [#allocation6], [#allocation4]
  %17 = dma.hbm_to_smem %s2, 64, [#allocation7], [#allocation4]
  %18 = dma.done [#allocation4], 192
  %19 = sfence
  loop: start=0, step=1, limit=5
  $region2: #{tagspace_forward.1} parent=0 // loop_pre_header
    _
  $region3: #{tagspace_forward.1} parent=0 // loop_header
    %s21 = sphi 0, %s25
    %p22 = scmp.ge.s32.totalorder %s21, 5
    %s30 = sphi 0, %s32
    %s33 = sphi 0, %s30
    %s43 = sphi 0, %s33
  $region4: #{tagspace_forward.1} parent=0 // loop_header_branch
    %24 = sbr.rel (%p22) target = $region8
  $region5: #{tagspace_forward.1} parent=0 // loop_body
    %s26 = ssub.s32 %s21, 1
    %s27 = sadd.s32 %s21, 1
    %s28 = ssub.s32 %s21, %s27
    %p29 = scmp.eq.s32.totalorder %s28, 0
    %s31 = sadd.s32 %s30, 1
    %s32 = scalar_select %p29, %s30, %s31
    %p34 = pneg %p29
    %p35 = scmp.eq.s32.totalorder %s21, 3
    %p36 = por %p34, %p35
    %p37 = scmp.ne.s32.totalorder %s30, %s33
    %p38 = scmp.eq.s32.totalorder %s21, 0
    %p39 = por %p37, %p38
    %p40 = scmp.ne.s32.totalorder %s30, %s33
    %p41 = scmp.eq.s32.totalorder %s26, 3
    %p42 = por %p40, %p41
    %p44 = scmp.ne.s32.totalorder %s33, %s43
    %p45 = scmp.eq.s32.totalorder %s26, 0
    %p46 = por %p44, %p45
    %p47 = scmp.lt.s32.totalorder %s21, 4
    // Predicated region
    $region9: #{tagspace_forward.1} parent=5 // pred_check
      %p48 = pneg %p47
    $region10: #{tagspace_forward.1} parent=5 // pred_check_branch
      %50 = sbr.rel (%p48) target = $region12
    $region11: #{tagspace_forward.1} parent=5 // pred_region
      %p51 = pneg %p39
      %p52 = pneg %p36
      %p53 = scmp.lt.s32.totalorder %s21, 3
      %s54 = scalar_select %p53, %s21, 3
      %s55 = scalar_lea.vmem %s5, %s54
      %p56 = scmp.lt.s32.totalorder %s21, 3
      %s57 = scalar_select %p56, %s21, 3
      %s58 = scalar_lea.vmem %s5, %s57
      %s59 = smul.u32 %s21, 128
      %s60 = sld [smem:[#allocation5 + %s59]]
      %s61 = sshrl.u32 %s60, 3
      %s62 = sand.u32 %s60, 7
      %s63 = smul.u32 %s61, 16
      %s64 = sadd.s32 %s62, %s63
      %s65 = smul.addr %s64, 16
      %s66 = scalar_lea.hbm %s3, %s65
      %s68 = sshll.u32 [#allocation2], 4
      %s69 = int_to_ptr.vmem [resolvable:$true] %s68
      %71 = dma.hbm_to_vmem [thread:$0]  %s66, 32, %s69, [#allocation3], 128, 128, 1
      %s72 = sadd.s32 %s59, 1
      %s73 = sld [smem:[#allocation5 + %s72]]
      %s74 = sshrl.u32 %s73, 3
      %s75 = sand.u32 %s73, 7
      %s76 = smul.u32 %s74, 16
      %s77 = sadd.s32 %s75, %s76
      %s78 = smul.addr %s77, 16
      %s79 = scalar_lea.hbm %s3, %s78
      %s80 = scalar_lea.vmem [#allocation2], 1
      %s81 = scalar_lea.sflag [#allocation3], 1
      %s83 = sshll.u32 %s80, 4
      %s84 = int_to_ptr.vmem [resolvable:$true] %s83
      %86 = dma.hbm_to_vmem [thread:$0]  %s79, 32, %s84, %s81, 128, 128, 1
      %s87 = sadd.s32 %s59, 2
      %s88 = sld [smem:[#allocation5 + %s87]]
      %s89 = sshrl.u32 %s88, 3
      %s90 = sand.u32 %s88, 7
      %s91 = smul.u32 %s89, 16
      %s92 = sadd.s32 %s90, %s91
      %s93 = smul.addr %s92, 16
      %s94 = scalar_lea.hbm %s3, %s93
      %s95 = scalar_lea.vmem [#allocation2], 2
      %s96 = scalar_lea.sflag [#allocation3], 2
      %s98 = sshll.u32 %s95, 4
      %s99 = int_to_ptr.vmem [resolvable:$true] %s98
      %101 = dma.hbm_to_vmem [thread:$0]  %s94, 32, %s99, %s96, 128, 128, 1
      %s102 = sadd.s32 %s59, 3
      %s103 = sld [smem:[#allocation5 + %s102]]
      %s104 = sshrl.u32 %s103, 3
      %s105 = sand.u32 %s103, 7
      %s106 = smul.u32 %s104, 16
      %s107 = sadd.s32 %s105, %s106
      %s108 = smul.addr %s107, 16
      %s109 = scalar_lea.hbm %s3, %s108
      %s110 = scalar_lea.vmem [#allocation2], 3
      %s111 = scalar_lea.sflag [#allocation3], 3
      %s113 = sshll.u32 %s110, 4
      %s114 = int_to_ptr.vmem [resolvable:$true] %s113
      %116 = dma.hbm_to_vmem [thread:$0]  %s109, 32, %s114, %s111, 128, 128, 1
      %s117 = sadd.s32 %s59, 4
      %s118 = sld [smem:[#allocation5 + %s117]]
      %s119 = sshrl.u32 %s118, 3
      %s120 = sand.u32 %s118, 7
      %s121 = smul.u32 %s119, 16
      %s122 = sadd.s32 %s120, %s121
      %s123 = smul.addr %s122, 16
      %s124 = scalar_lea.hbm %s3, %s123
      %s125 = scalar_lea.vmem [#allocation2], 4
      %s126 = scalar_lea.sflag [#allocation3], 4
      %s128 = sshll.u32 %s125, 4
      %s129 = int_to_ptr.vmem [resolvable:$true] %s128
      %131 = dma.hbm_to_vmem [thread:$0]  %s124, 32, %s129, %s126, 128, 128, 1
      %s132 = sadd.s32 %s59, 5
      %s133 = sld [smem:[#allocation5 + %s132]]
      %s134 = sshrl.u32 %s133, 3
      %s135 = sand.u32 %s133, 7
      %s136 = smul.u32 %s134, 16
      %s137 = sadd.s32 %s135, %s136
      %s138 = smul.addr %s137, 16
      %s139 = scalar_lea.hbm %s3, %s138
      %s140 = scalar_lea.vmem [#allocation2], 5
      %s141 = scalar_lea.sflag [#allocation3], 5
      %s143 = sshll.u32 %s140, 4
      %s144 = int_to_ptr.vmem [resolvable:$true] %s143
      %146 = dma.hbm_to_vmem [thread:$0]  %s139, 32, %s144, %s141, 128, 128, 1
      %s147 = sadd.s32 %s59, 6
      %s148 = sld [smem:[#allocation5 + %s147]]
      %s149 = sshrl.u32 %s148, 3
      %s150 = sand.u32 %s148, 7
      %s151 = smul.u32 %s149, 16
      %s152 = sadd.s32 %s150, %s151
      %s153 = smul.addr %s152, 16
      %s154 = scalar_lea.hbm %s3, %s153
      %s155 = scalar_lea.vmem [#allocation2], 6
      %s156 = scalar_lea.sflag [#allocation3], 6
      %s158 = sshll.u32 %s155, 4
      %s159 = int_to_ptr.vmem [resolvable:$true] %s158
      %161 = dma.hbm_to_vmem [thread:$0]  %s154, 32, %s159, %s156, 128, 128, 1
      %s162 = sadd.s32 %s59, 7
      %s163 = sld [smem:[#allocation5 + %s162]]
      %s164 = sshrl.u32 %s163, 3
      %s165 = sand.u32 %s163, 7
      %s166 = smul.u32 %s164, 16
      %s167 = sadd.s32 %s165, %s166
      %s168 = smul.addr %s167, 16
      %s169 = scalar_lea.hbm %s3, %s168
      %s170 = scalar_lea.vmem [#allocation2], 7
      %s171 = scalar_lea.sflag [#allocation3], 7
      %s173 = sshll.u32 %s170, 4
      %s174 = int_to_ptr.vmem [resolvable:$true] %s173
      %176 = dma.hbm_to_vmem [thread:$0]  %s169, 32, %s174, %s171, 128, 128, 1
      %s177 = sld [smem:[#allocation6 + %s59]]
      %s178 = sshrl.u32 %s177, 3
      %s179 = sand.u32 %s177, 7
      %s180 = smul.u32 %s178, 16
      %s181 = sadd.s32 %s179, %s180
      %s182 = smul.addr %s181, 16
      %s183 = scalar_lea.hbm %s4, %s182
      %s184 = scalar_lea.vmem [#allocation2], 16
      %s185 = scalar_lea.sflag [#allocation3], 8
      %s187 = sshll.u32 %s184, 4
      %s188 = int_to_ptr.vmem [resolvable:$true] %s187
      %190 = dma.hbm_to_vmem [thread:$0]  %s183, 32, %s188, %s185, 128, 128, 1
      %s191 = sld [smem:[#allocation6 + %s72]]
      %s192 = sshrl.u32 %s191, 3
      %s193 = sand.u32 %s191, 7
      %s194 = smul.u32 %s192, 16
      %s195 = sadd.s32 %s193, %s194
      %s196 = smul.addr %s195, 16
      %s197 = scalar_lea.hbm %s4, %s196
      %s198 = scalar_lea.vmem [#allocation2], 17
      %s199 = scalar_lea.sflag [#allocation3], 9
      %s201 = sshll.u32 %s198, 4
      %s202 = int_to_ptr.vmem [resolvable:$true] %s201
      %204 = dma.hbm_to_vmem [thread:$0]  %s197, 32, %s202, %s199, 128, 128, 1
      %s205 = sld [smem:[#allocation6 + %s87]]
      %s206 = sshrl.u32 %s205, 3
      %s207 = sand.u32 %s205, 7
      %s208 = smul.u32 %s206, 16
      %s209 = sadd.s32 %s207, %s208
      %s210 = smul.addr %s209, 16
      %s211 = scalar_lea.hbm %s4, %s210
      %s212 = scalar_lea.vmem [#allocation2], 18
      %s213 = scalar_lea.sflag [#allocation3], 10
      %s215 = sshll.u32 %s212, 4
      %s216 = int_to_ptr.vmem [resolvable:$true] %s215
      %218 = dma.hbm_to_vmem [thread:$0]  %s211, 32, %s216, %s213, 128, 128, 1
      %s219 = sld [smem:[#allocation6 + %s102]]
      %s220 = sshrl.u32 %s219, 3
      %s221 = sand.u32 %s219, 7
      %s222 = smul.u32 %s220, 16
      %s223 = sadd.s32 %s221, %s222
      %s224 = smul.addr %s223, 16
      %s225 = scalar_lea.hbm %s4, %s224
      %s226 = scalar_lea.vmem [#allocation2], 19
      %s227 = scalar_lea.sflag [#allocation3], 11
      %s229 = sshll.u32 %s226, 4
      %s230 = int_to_ptr.vmem [resolvable:$true] %s229
      %232 = dma.hbm_to_vmem [thread:$0]  %s225, 32, %s230, %s227, 128, 128, 1
      %s233 = sld [smem:[#allocation7 + %s59]]
      %s234 = sshrl.u32 %s233, 3
      %s235 = sand.u32 %s233, 7
      %s236 = smul.u32 %s234, 16
      %s237 = sadd.s32 %s235, %s236
      %s238 = smul.addr %s237, 16
      %s239 = scalar_lea.hbm %s4, %s238
      %s240 = scalar_lea.vmem [#allocation2], 20
      %s241 = scalar_lea.sflag [#allocation3], 12
      %s243 = sshll.u32 %s240, 4
      %s244 = int_to_ptr.vmem [resolvable:$true] %s243
      %246 = dma.hbm_to_vmem [thread:$0]  %s239, 32, %s244, %s241, 128, 128, 1
      %s247 = sld [smem:[#allocation7 + %s72]]
      %s248 = sshrl.u32 %s247, 3
      %s249 = sand.u32 %s247, 7
      %s250 = smul.u32 %s248, 16
      %s251 = sadd.s32 %s249, %s250
      %s252 = smul.addr %s251, 16
      %s253 = scalar_lea.hbm %s4, %s252
      %s254 = scalar_lea.vmem [#allocation2], 21
      %s255 = scalar_lea.sflag [#allocation3], 13
      %s257 = sshll.u32 %s254, 4
      %s258 = int_to_ptr.vmem [resolvable:$true] %s257
      %260 = dma.hbm_to_vmem [thread:$0]  %s253, 32, %s258, %s255, 128, 128, 1
      %s261 = sld [smem:[#allocation7 + %s87]]
      %s262 = sshrl.u32 %s261, 3
      %s263 = sand.u32 %s261, 7
      %s264 = smul.u32 %s262, 16
      %s265 = sadd.s32 %s263, %s264
      %s266 = smul.addr %s265, 16
      %s267 = scalar_lea.hbm %s4, %s266
      %s268 = scalar_lea.vmem [#allocation2], 22
      %s269 = scalar_lea.sflag [#allocation3], 14
      %s271 = sshll.u32 %s268, 4
      %s272 = int_to_ptr.vmem [resolvable:$true] %s271
      %274 = dma.hbm_to_vmem [thread:$0]  %s267, 32, %s272, %s269, 128, 128, 1
      %s275 = sld [smem:[#allocation7 + %s102]]
      %s276 = sshrl.u32 %s275, 3
      %s277 = sand.u32 %s275, 7
      %s278 = smul.u32 %s276, 16
      %s279 = sadd.s32 %s277, %s278
      %s280 = smul.addr %s279, 16
      %s281 = scalar_lea.hbm %s4, %s280
      %s282 = scalar_lea.vmem [#allocation2], 23
      %s283 = scalar_lea.sflag [#allocation3], 15
      %s285 = sshll.u32 %s282, 4
      %s286 = int_to_ptr.vmem [resolvable:$true] %s285
      %288 = dma.hbm_to_vmem [thread:$0]  %s281, 32, %s286, %s283, 128, 128, 1
      %s289 = sld [smem:[#allocation7 + %s117]]
      %s290 = sshrl.u32 %s289, 3
      %s291 = sand.u32 %s289, 7
      %s292 = smul.u32 %s290, 16
      %s293 = sadd.s32 %s291, %s292
      %s294 = smul.addr %s293, 16
      %s295 = scalar_lea.hbm %s4, %s294
      %s296 = scalar_lea.vmem [#allocation2], 32
      %s297 = scalar_lea.sflag [#allocation3], 16
      %s299 = sshll.u32 %s296, 4
      %s300 = int_to_ptr.vmem [resolvable:$true] %s299
      %302 = dma.hbm_to_vmem [thread:$0]  %s295, 32, %s300, %s297, 128, 128, 1
      %s303 = sld [smem:[#allocation7 + %s132]]
      %s304 = sshrl.u32 %s303, 3
      %s305 = sand.u32 %s303, 7
      %s306 = smul.u32 %s304, 16
      %s307 = sadd.s32 %s305, %s306
      %s308 = smul.addr %s307, 16
      %s309 = scalar_lea.hbm %s4, %s308
      %s310 = scalar_lea.vmem [#allocation2], 33
      %s311 = scalar_lea.sflag [#allocation3], 17
      %s313 = sshll.u32 %s310, 4
      %s314 = int_to_ptr.vmem [resolvable:$true] %s313
      %316 = dma.hbm_to_vmem [thread:$0]  %s309, 32, %s314, %s311, 128, 128, 1
      %s317 = sld [smem:[#allocation7 + %s147]]
      %s318 = sshrl.u32 %s317, 3
      %s319 = sand.u32 %s317, 7
      %s320 = smul.u32 %s318, 16
      %s321 = sadd.s32 %s319, %s320
      %s322 = smul.addr %s321, 16
      %s323 = scalar_lea.hbm %s4, %s322
      %s324 = scalar_lea.vmem [#allocation2], 34
      %s325 = scalar_lea.sflag [#allocation3], 18
      %s327 = sshll.u32 %s324, 4
      %s328 = int_to_ptr.vmem [resolvable:$true] %s327
      %330 = dma.hbm_to_vmem [thread:$0]  %s323, 32, %s328, %s325, 128, 128, 1
      %s331 = sld [smem:[#allocation7 + %s162]]
      %s332 = sshrl.u32 %s331, 3
      %s333 = sand.u32 %s331, 7
      %s334 = smul.u32 %s332, 16
      %s335 = sadd.s32 %s333, %s334
      %s336 = smul.addr %s335, 16
      %s337 = scalar_lea.hbm %s4, %s336
      %s338 = scalar_lea.vmem [#allocation2], 35
      %s339 = scalar_lea.sflag [#allocation3], 19
      %s341 = sshll.u32 %s338, 4
      %s342 = int_to_ptr.vmem [resolvable:$true] %s341
      %344 = dma.hbm_to_vmem [thread:$0]  %s337, 32, %s342, %s339, 128, 128, 1
      %s345 = sadd.s32 %s59, 8
      %s346 = sld [smem:[#allocation7 + %s345]]
      %s347 = sshrl.u32 %s346, 3
      %s348 = sand.u32 %s346, 7
      %s349 = smul.u32 %s347, 16
      %s350 = sadd.s32 %s348, %s349
      %s351 = smul.addr %s350, 16
      %s352 = scalar_lea.hbm %s4, %s351
      %s353 = scalar_lea.vmem [#allocation2], 36
      %s354 = scalar_lea.sflag [#allocation3], 20
      %s356 = sshll.u32 %s353, 4
      %s357 = int_to_ptr.vmem [resolvable:$true] %s356
      %359 = dma.hbm_to_vmem [thread:$0]  %s352, 32, %s357, %s354, 128, 128, 1
      %s360 = sadd.s32 %s59, 9
      %s361 = sld [smem:[#allocation7 + %s360]]
      %s362 = sshrl.u32 %s361, 3
      %s363 = sand.u32 %s361, 7
      %s364 = smul.u32 %s362, 16
      %s365 = sadd.s32 %s363, %s364
      %s366 = smul.addr %s365, 16
      %s367 = scalar_lea.hbm %s4, %s366
      %s368 = scalar_lea.vmem [#allocation2], 37
      %s369 = scalar_lea.sflag [#allocation3], 21
      %s371 = sshll.u32 %s368, 4
      %s372 = int_to_ptr.vmem [resolvable:$true] %s371
      %374 = dma.hbm_to_vmem [thread:$0]  %s367, 32, %s372, %s369, 128, 128, 1
      %s375 = sadd.s32 %s59, 10
      %s376 = sld [smem:[#allocation7 + %s375]]
      %s377 = sshrl.u32 %s376, 3
      %s378 = sand.u32 %s376, 7
      %s379 = smul.u32 %s377, 16
      %s380 = sadd.s32 %s378, %s379
      %s381 = smul.addr %s380, 16
      %s382 = scalar_lea.hbm %s4, %s381
      %s383 = scalar_lea.vmem [#allocation2], 38
      %s384 = scalar_lea.sflag [#allocation3], 22
      %s386 = sshll.u32 %s383, 4
      %s387 = int_to_ptr.vmem [resolvable:$true] %s386
      %389 = dma.hbm_to_vmem [thread:$0]  %s382, 32, %s387, %s384, 128, 128, 1
      %s390 = sadd.s32 %s59, 11
      %s391 = sld [smem:[#allocation7 + %s390]]
      %s392 = sshrl.u32 %s391, 3
      %s393 = sand.u32 %s391, 7
      %s394 = smul.u32 %s392, 16
      %s395 = sadd.s32 %s393, %s394
      %s396 = smul.addr %s395, 16
      %s397 = scalar_lea.hbm %s4, %s396
      %s398 = scalar_lea.vmem [#allocation2], 39
      %s399 = scalar_lea.sflag [#allocation3], 23
      %s401 = sshll.u32 %s398, 4
      %s402 = int_to_ptr.vmem [resolvable:$true] %s401
      %404 = dma.hbm_to_vmem [thread:$0]  %s397, 32, %s402, %s399, 128, 128, 1
      %s405 = sadd.s32 %s59, 12
      %s406 = sld [smem:[#allocation7 + %s405]]
      %s407 = sshrl.u32 %s406, 3
      %s408 = sand.u32 %s406, 7
      %s409 = smul.u32 %s407, 16
      %s410 = sadd.s32 %s408, %s409
      %s411 = smul.addr %s410, 16
      %s412 = scalar_lea.hbm %s4, %s411
      %s413 = scalar_lea.vmem [#allocation2], 48
      %s414 = scalar_lea.sflag [#allocation3], 24
      %s416 = sshll.u32 %s413, 4
      %s417 = int_to_ptr.vmem [resolvable:$true] %s416
      %419 = dma.hbm_to_vmem [thread:$0]  %s412, 32, %s417, %s414, 128, 128, 1
      %s420 = sadd.s32 %s59, 13
      %s421 = sld [smem:[#allocation7 + %s420]]
      %s422 = sshrl.u32 %s421, 3
      %s423 = sand.u32 %s421, 7
      %s424 = smul.u32 %s422, 16
      %s425 = sadd.s32 %s423, %s424
      %s426 = smul.addr %s425, 16
      %s427 = scalar_lea.hbm %s4, %s426
      %s428 = scalar_lea.vmem [#allocation2], 49
      %s429 = scalar_lea.sflag [#allocation3], 25
      %s431 = sshll.u32 %s428, 4
      %s432 = int_to_ptr.vmem [resolvable:$true] %s431
      %434 = dma.hbm_to_vmem [thread:$0]  %s427, 32, %s432, %s429, 128, 128, 1
      %s435 = sadd.s32 %s59, 14
      %s436 = sld [smem:[#allocation7 + %s435]]
      %s437 = sshrl.u32 %s436, 3
      %s438 = sand.u32 %s436, 7
      %s439 = smul.u32 %s437, 16
      %s440 = sadd.s32 %s438, %s439
      %s441 = smul.addr %s440, 16
      %s442 = scalar_lea.hbm %s4, %s441
      %s443 = scalar_lea.vmem [#allocation2], 50
      %s444 = scalar_lea.sflag [#allocation3], 26
      %s446 = sshll.u32 %s443, 4
      %s447 = int_to_ptr.vmem [resolvable:$true] %s446
      %449 = dma.hbm_to_vmem [thread:$0]  %s442, 32, %s447, %s444, 128, 128, 1
      %s450 = sadd.s32 %s59, 15
      %s451 = sld [smem:[#allocation7 + %s450]]
      %s452 = sshrl.u32 %s451, 3
      %s453 = sand.u32 %s451, 7
      %s454 = smul.u32 %s452, 16
      %s455 = sadd.s32 %s453, %s454
      %s456 = smul.addr %s455, 16
      %s457 = scalar_lea.hbm %s4, %s456
      %s458 = scalar_lea.vmem [#allocation2], 51
      %s459 = scalar_lea.sflag [#allocation3], 27
      %s461 = sshll.u32 %s458, 4
      %s462 = int_to_ptr.vmem [resolvable:$true] %s461
      %464 = dma.hbm_to_vmem [thread:$0]  %s457, 32, %s462, %s459, 128, 128, 1
      %s465 = sadd.s32 %s59, 16
      %s466 = sld [smem:[#allocation7 + %s465]]
      %s467 = sshrl.u32 %s466, 3
      %s468 = sand.u32 %s466, 7
      %s469 = smul.u32 %s467, 16
      %s470 = sadd.s32 %s468, %s469
      %s471 = smul.addr %s470, 16
      %s472 = scalar_lea.hbm %s4, %s471
      %s473 = scalar_lea.vmem [#allocation2], 52
      %s474 = scalar_lea.sflag [#allocation3], 28
      %s476 = sshll.u32 %s473, 4
      %s477 = int_to_ptr.vmem [resolvable:$true] %s476
      %479 = dma.hbm_to_vmem [thread:$0]  %s472, 32, %s477, %s474, 128, 128, 1
      %s480 = sadd.s32 %s59, 17
      %s481 = sld [smem:[#allocation7 + %s480]]
      %s482 = sshrl.u32 %s481, 3
      %s483 = sand.u32 %s481, 7
      %s484 = smul.u32 %s482, 16
      %s485 = sadd.s32 %s483, %s484
      %s486 = smul.addr %s485, 16
      %s487 = scalar_lea.hbm %s4, %s486
      %s488 = scalar_lea.vmem [#allocation2], 53
      %s489 = scalar_lea.sflag [#allocation3], 29
      %s491 = sshll.u32 %s488, 4
      %s492 = int_to_ptr.vmem [resolvable:$true] %s491
      %494 = dma.hbm_to_vmem [thread:$0]  %s487, 32, %s492, %s489, 128, 128, 1
      %s495 = sadd.s32 %s59, 18
      %s496 = sld [smem:[#allocation7 + %s495]]
      %s497 = sshrl.u32 %s496, 3
      %s498 = sand.u32 %s496, 7
      %s499 = smul.u32 %s497, 16
      %s500 = sadd.s32 %s498, %s499
      %s501 = smul.addr %s500, 16
      %s502 = scalar_lea.hbm %s4, %s501
      %s503 = scalar_lea.vmem [#allocation2], 54
      %s504 = scalar_lea.sflag [#allocation3], 30
      %s506 = sshll.u32 %s503, 4
      %s507 = int_to_ptr.vmem [resolvable:$true] %s506
      %509 = dma.hbm_to_vmem [thread:$0]  %s502, 32, %s507, %s504, 128, 128, 1
      %s510 = sadd.s32 %s59, 19
      %s511 = sld [smem:[#allocation7 + %s510]]
      %s512 = sshrl.u32 %s511, 3
      %s513 = sand.u32 %s511, 7
      %s514 = smul.u32 %s512, 16
      %s515 = sadd.s32 %s513, %s514
      %s516 = smul.addr %s515, 16
      %s517 = scalar_lea.hbm %s4, %s516
      %s518 = scalar_lea.vmem [#allocation2], 55
      %s519 = scalar_lea.sflag [#allocation3], 31
      %s521 = sshll.u32 %s518, 4
      %s522 = int_to_ptr.vmem [resolvable:$true] %s521
      %524 = dma.hbm_to_vmem [thread:$0]  %s517, 32, %s522, %s519, 128, 128, 1
      %s525 = sadd.s32 %s59, 20
      %s526 = sld [smem:[#allocation7 + %s525]]
      %s527 = sshrl.u32 %s526, 3
      %s528 = sand.u32 %s526, 7
      %s529 = smul.u32 %s527, 16
      %s530 = sadd.s32 %s528, %s529
      %s531 = smul.addr %s530, 16
      %s532 = scalar_lea.hbm %s4, %s531
      %s533 = scalar_lea.vmem [#allocation2], 64
      %s534 = scalar_lea.sflag [#allocation3], 32
      %s536 = sshll.u32 %s533, 4
      %s537 = int_to_ptr.vmem [resolvable:$true] %s536
      %539 = dma.hbm_to_vmem [thread:$0]  %s532, 32, %s537, %s534, 128, 128, 1
      %s540 = sadd.s32 %s59, 21
      %s541 = sld [smem:[#allocation7 + %s540]]
      %s542 = sshrl.u32 %s541, 3
      %s543 = sand.u32 %s541, 7
      %s544 = smul.u32 %s542, 16
      %s545 = sadd.s32 %s543, %s544
      %s546 = smul.addr %s545, 16
      %s547 = scalar_lea.hbm %s4, %s546
      %s548 = scalar_lea.vmem [#allocation2], 65
      %s549 = scalar_lea.sflag [#allocation3], 33
      %s551 = sshll.u32 %s548, 4
      %s552 = int_to_ptr.vmem [resolvable:$true] %s551
      %554 = dma.hbm_to_vmem [thread:$0]  %s547, 32, %s552, %s549, 128, 128, 1
      %s555 = sadd.s32 %s59, 22
      %s556 = sld [smem:[#allocation7 + %s555]]
      %s557 = sshrl.u32 %s556, 3
      %s558 = sand.u32 %s556, 7
      %s559 = smul.u32 %s557, 16
      %s560 = sadd.s32 %s558, %s559
      %s561 = smul.addr %s560, 16
      %s562 = scalar_lea.hbm %s4, %s561
      %s563 = scalar_lea.vmem [#allocation2], 66
      %s564 = scalar_lea.sflag [#allocation3], 34
      %s566 = sshll.u32 %s563, 4
      %s567 = int_to_ptr.vmem [resolvable:$true] %s566
      %569 = dma.hbm_to_vmem [thread:$0]  %s562, 32, %s567, %s564, 128, 128, 1
      %s570 = sadd.s32 %s59, 23
      %s571 = sld [smem:[#allocation7 + %s570]]
      %s572 = sshrl.u32 %s571, 3
      %s573 = sand.u32 %s571, 7
      %s574 = smul.u32 %s572, 16
      %s575 = sadd.s32 %s573, %s574
      %s576 = smul.addr %s575, 16
      %s577 = scalar_lea.hbm %s4, %s576
      %s578 = scalar_lea.vmem [#allocation2], 67
      %s579 = scalar_lea.sflag [#allocation3], 35
      %s581 = sshll.u32 %s578, 4
      %s582 = int_to_ptr.vmem [resolvable:$true] %s581
      %584 = dma.hbm_to_vmem [thread:$0]  %s577, 32, %s582, %s579, 128, 128, 1
      %s585 = sadd.s32 %s59, 24
      %s586 = sld [smem:[#allocation7 + %s585]]
      %s587 = sshrl.u32 %s586, 3
      %s588 = sand.u32 %s586, 7
      %s589 = smul.u32 %s587, 16
      %s590 = sadd.s32 %s588, %s589
      %s591 = smul.addr %s590, 16
      %s592 = scalar_lea.hbm %s4, %s591
      %s593 = scalar_lea.vmem [#allocation2], 68
      %s594 = scalar_lea.sflag [#allocation3], 36
      %s596 = sshll.u32 %s593, 4
      %s597 = int_to_ptr.vmem [resolvable:$true] %s596
      %599 = dma.hbm_to_vmem [thread:$0]  %s592, 32, %s597, %s594, 128, 128, 1
      %s600 = sadd.s32 %s59, 25
      %s601 = sld [smem:[#allocation7 + %s600]]
      %s602 = sshrl.u32 %s601, 3
      %s603 = sand.u32 %s601, 7
      %s604 = smul.u32 %s602, 16
      %s605 = sadd.s32 %s603, %s604
      %s606 = smul.addr %s605, 16
      %s607 = scalar_lea.hbm %s4, %s606
      %s608 = scalar_lea.vmem [#allocation2], 69
      %s609 = scalar_lea.sflag [#allocation3], 37
      %s611 = sshll.u32 %s608, 4
      %s612 = int_to_ptr.vmem [resolvable:$true] %s611
      %614 = dma.hbm_to_vmem [thread:$0]  %s607, 32, %s612, %s609, 128, 128, 1
      %s615 = sadd.s32 %s59, 26
      %s616 = sld [smem:[#allocation7 + %s615]]
      %s617 = sshrl.u32 %s616, 3
      %s618 = sand.u32 %s616, 7
      %s619 = smul.u32 %s617, 16
      %s620 = sadd.s32 %s618, %s619
      %s621 = smul.addr %s620, 16
      %s622 = scalar_lea.hbm %s4, %s621
      %s623 = scalar_lea.vmem [#allocation2], 70
      %s624 = scalar_lea.sflag [#allocation3], 38
      %s626 = sshll.u32 %s623, 4
      %s627 = int_to_ptr.vmem [resolvable:$true] %s626
      %629 = dma.hbm_to_vmem [thread:$0]  %s622, 32, %s627, %s624, 128, 128, 1
      %s630 = sadd.s32 %s59, 27
      %s631 = sld [smem:[#allocation7 + %s630]]
      %s632 = sshrl.u32 %s631, 3
      %s633 = sand.u32 %s631, 7
      %s634 = smul.u32 %s632, 16
      %s635 = sadd.s32 %s633, %s634
      %s636 = smul.addr %s635, 16
      %s637 = scalar_lea.hbm %s4, %s636
      %s638 = scalar_lea.vmem [#allocation2], 71
      %s639 = scalar_lea.sflag [#allocation3], 39
      %s641 = sshll.u32 %s638, 4
      %s642 = int_to_ptr.vmem [resolvable:$true] %s641
      %644 = dma.hbm_to_vmem [thread:$0]  %s637, 32, %s642, %s639, 128, 128, 1
      %s645 = sadd.s32 %s59, 28
      %s646 = sld [smem:[#allocation7 + %s645]]
      %s647 = sshrl.u32 %s646, 3
      %s648 = sand.u32 %s646, 7
      %s649 = smul.u32 %s647, 16
      %s650 = sadd.s32 %s648, %s649
      %s651 = smul.addr %s650, 16
      %s652 = scalar_lea.hbm %s4, %s651
      %s653 = scalar_lea.vmem [#allocation2], 80
      %s654 = scalar_lea.sflag [#allocation3], 40
      %s656 = sshll.u32 %s653, 4
      %s657 = int_to_ptr.vmem [resolvable:$true] %s656
      %659 = dma.hbm_to_vmem [thread:$0]  %s652, 32, %s657, %s654, 128, 128, 1
      %s660 = sadd.s32 %s59, 29
      %s661 = sld [smem:[#allocation7 + %s660]]
      %s662 = sshrl.u32 %s661, 3
      %s663 = sand.u32 %s661, 7
      %s664 = smul.u32 %s662, 16
      %s665 = sadd.s32 %s663, %s664
      %s666 = smul.addr %s665, 16
      %s667 = scalar_lea.hbm %s4, %s666
      %s668 = scalar_lea.vmem [#allocation2], 81
      %s669 = scalar_lea.sflag [#allocation3], 41
      %s671 = sshll.u32 %s668, 4
      %s672 = int_to_ptr.vmem [resolvable:$true] %s671
      %674 = dma.hbm_to_vmem [thread:$0]  %s667, 32, %s672, %s669, 128, 128, 1
      %s675 = sadd.s32 %s59, 30
      %s676 = sld [smem:[#allocation7 + %s675]]
      %s677 = sshrl.u32 %s676, 3
      %s678 = sand.u32 %s676, 7
      %s679 = smul.u32 %s677, 16
      %s680 = sadd.s32 %s678, %s679
      %s681 = smul.addr %s680, 16
      %s682 = scalar_lea.hbm %s4, %s681
      %s683 = scalar_lea.vmem [#allocation2], 82
      %s684 = scalar_lea.sflag [#allocation3], 42
      %s686 = sshll.u32 %s683, 4
      %s687 = int_to_ptr.vmem [resolvable:$true] %s686
      %689 = dma.hbm_to_vmem [thread:$0]  %s682, 32, %s687, %s684, 128, 128, 1
      %s690 = sadd.s32 %s59, 31
      %s691 = sld [smem:[#allocation7 + %s690]]
      %s692 = sshrl.u32 %s691, 3
      %s693 = sand.u32 %s691, 7
      %s694 = smul.u32 %s692, 16
      %s695 = sadd.s32 %s693, %s694
      %s696 = smul.addr %s695, 16
      %s697 = scalar_lea.hbm %s4, %s696
      %s698 = scalar_lea.vmem [#allocation2], 83
      %s699 = scalar_lea.sflag [#allocation3], 43
      %s701 = sshll.u32 %s698, 4
      %s702 = int_to_ptr.vmem [resolvable:$true] %s701
      %704 = dma.hbm_to_vmem [thread:$0]  %s697, 32, %s702, %s699, 128, 128, 1
      %s705 = smul.u32 1, 2
      %s706 = sshll.u32 %s705, 4
      %707 = dma.done [#allocation3], %s706
      %s708 = sshll.u32 %s705, 4
      %709 = dma.done %s81, %s708
      %s710 = sshll.u32 %s705, 4
      %711 = dma.done %s96, %s710
      %s712 = sshll.u32 %s705, 4
      %713 = dma.done %s111, %s712
      %s714 = sshll.u32 %s705, 4
      %715 = dma.done %s126, %s714
      %s716 = sshll.u32 %s705, 4
      %717 = dma.done %s141, %s716
      %s718 = sshll.u32 %s705, 4
      %719 = dma.done %s156, %s718
      %s720 = sshll.u32 %s705, 4
      %721 = dma.done %s171, %s720
      %s722 = sshll.u32 %s705, 4
      %723 = dma.done %s185, %s722
      %s724 = sshll.u32 %s705, 4
      %725 = dma.done %s199, %s724
      %s726 = sshll.u32 %s705, 4
      %727 = dma.done %s213, %s726
      %s728 = sshll.u32 %s705, 4
      %729 = dma.done %s227, %s728
      %s730 = sshll.u32 %s705, 4
      %731 = dma.done %s241, %s730
      %s732 = sshll.u32 %s705, 4
      %733 = dma.done %s255, %s732
      %s734 = sshll.u32 %s705, 4
      %735 = dma.done %s269, %s734
      %s736 = sshll.u32 %s705, 4
      %737 = dma.done %s283, %s736
      %s738 = sshll.u32 %s705, 4
      %739 = dma.done %s297, %s738
      %s740 = sshll.u32 %s705, 4
      %741 = dma.done %s311, %s740
      %s742 = sshll.u32 %s705, 4
      %743 = dma.done %s325, %s742
      %s744 = sshll.u32 %s705, 4
      %745 = dma.done %s339, %s744
      %s746 = sshll.u32 %s705, 4
      %747 = dma.done %s354, %s746
      %s748 = sshll.u32 %s705, 4
      %749 = dma.done %s369, %s748
      %s750 = sshll.u32 %s705, 4
      %751 = dma.done %s384, %s750
      %s752 = sshll.u32 %s705, 4
      %753 = dma.done %s399, %s752
      %s754 = sshll.u32 %s705, 4
      %755 = dma.done %s414, %s754
      %s756 = sshll.u32 %s705, 4
      %757 = dma.done %s429, %s756
      %s758 = sshll.u32 %s705, 4
      %759 = dma.done %s444, %s758
      %s760 = sshll.u32 %s705, 4
      %761 = dma.done %s459, %s760
      %s762 = sshll.u32 %s705, 4
      %763 = dma.done %s474, %s762
      %s764 = sshll.u32 %s705, 4
      %765 = dma.done %s489, %s764
      %s766 = sshll.u32 %s705, 4
      %767 = dma.done %s504, %s766
      %s768 = sshll.u32 %s705, 4
      %769 = dma.done %s519, %s768
      %s770 = sshll.u32 %s705, 4
      %771 = dma.done %s534, %s770
      %s772 = sshll.u32 %s705, 4
      %773 = dma.done %s549, %s772
      %s774 = sshll.u32 %s705, 4
      %775 = dma.done %s564, %s774
      %s776 = sshll.u32 %s705, 4
      %777 = dma.done %s579, %s776
      %s778 = sshll.u32 %s705, 4
      %779 = dma.done %s594, %s778
      %s780 = sshll.u32 %s705, 4
      %781 = dma.done %s609, %s780
      %s782 = sshll.u32 %s705, 4
      %783 = dma.done %s624, %s782
      %s784 = sshll.u32 %s705, 4
      %785 = dma.done %s639, %s784
      %s786 = sshll.u32 %s705, 4
      %787 = dma.done %s654, %s786
      %s788 = sshll.u32 %s705, 4
      %789 = dma.done %s669, %s788
      %s790 = sshll.u32 %s705, 4
      %791 = dma.done %s684, %s790
      %s792 = sshll.u32 %s705, 4
      %793 = dma.done %s699, %s792
      %v794 = vld [vmem:[#allocation2] sm:$0xff]
      %v795 = vld [vmem:[#allocation2 + $0x8] sm:$0xff]
      %v796 = vrot.slane %v794, 4
      %v797 = vadd.f32 %v794, %v796
      %v798 = vrot.slane %v797, 2
      %v799 = vadd.f32 %v797, %v798
      %v800 = vrot.slane %v799, 1
      %v801 = vadd.f32 %v799, %v800
      %v802 = vrot.slane %v795, 4
      %v803 = vadd.f32 %v795, %v802
      %v804 = vrot.slane %v803, 2
      %v805 = vadd.f32 %v803, %v804
      %v806 = vrot.slane %v805, 1
      %v807 = vadd.f32 %v805, %v806
      %v808 = vld [vmem:[#allocation2 + $0x10] sm:$0xf]
      %v809 = vld [vmem:[#allocation2 + $0x18] sm:$0xf]
      %vm810 = vcmask 1043456
      %v811 = vsel %vm810, %v808, 0.0
      %v812 = vrot.slane %v811, 4
      %v813 = vadd.f32 %v811, %v812
      %v814 = vrot.slane %v813, 2
      %v815 = vadd.f32 %v813, %v814
      %v816 = vrot.slane %v815, 1
      %v817 = vadd.f32 %v815, %v816
      %v818 = vsel %vm810, %v809, 0.0
      %v819 = vrot.slane %v818, 4
      %v820 = vadd.f32 %v818, %v819
      %v821 = vrot.slane %v820, 2
      %v822 = vadd.f32 %v820, %v821
      %v823 = vrot.slane %v822, 1
      %v824 = vadd.f32 %v822, %v823
      %v825 = vld [vmem:[#allocation2 + $0x10] sm:$0xf0]
      %v826 = vld [vmem:[#allocation2 + $0x18] sm:$0xf0]
      %v827 = vld [vmem:[#allocation2 + $0x20] sm:$0xff]
      %v828 = vld [vmem:[#allocation2 + $0x28] sm:$0xff]
      %v829 = vld [vmem:[#allocation2 + $0x30] sm:$0xff]
      %v830 = vld [vmem:[#allocation2 + $0x38] sm:$0xff]
      %v831 = vld [vmem:[#allocation2 + $0x40] sm:$0xff]
      %v832 = vld [vmem:[#allocation2 + $0x48] sm:$0xff]
      %v833 = vld [vmem:[#allocation2 + $0x50] sm:$0xf]
      %v834 = vld [vmem:[#allocation2 + $0x58] sm:$0xf]
      %v845 = vrot.slane %v825, 4
      %v846 = vrot.slane %v827, 4
      %v847 = vsel %vm810, %v845, %v846
      %v848 = vrot.slane %v826, 4
      %v849 = vrot.slane %v828, 4
      %v850 = vsel %vm810, %v848, %v849
      %v851 = vrot.slane %v829, 4
      %v852 = vsel %vm810, %v846, %v851
      %v853 = vrot.slane %v830, 4
      %v854 = vsel %vm810, %v849, %v853
      %v855 = vrot.slane %v831, 4
      %v856 = vsel %vm810, %v851, %v855
      %v857 = vrot.slane %v832, 4
      %v858 = vsel %vm810, %v853, %v857
      %v859 = vrot.slane %v833, 4
      %v860 = vsel %vm810, %v855, %v859
      %v861 = vrot.slane %v834, 4
      %v862 = vsel %vm810, %v857, %v861
      %v871 = vadd.f32 %v847, %v852
      %v872 = vadd.f32 %v871, %v856
      %v873 = vadd.f32 %v872, %v860
      %v874 = vrot.slane %v873, 4
      %v875 = vadd.f32 %v873, %v874
      %v876 = vrot.slane %v875, 2
      %v877 = vadd.f32 %v875, %v876
      %v878 = vrot.slane %v877, 1
      %v879 = vadd.f32 %v877, %v878
      %v880 = vadd.f32 %v850, %v854
      %v881 = vadd.f32 %v880, %v858
      %v882 = vadd.f32 %v881, %v862
      %v883 = vrot.slane %v882, 4
      %v884 = vadd.f32 %v882, %v883
      %v885 = vrot.slane %v884, 2
      %v886 = vadd.f32 %v884, %v885
      %v887 = vrot.slane %v886, 1
      %v888 = vadd.f32 %v886, %v887
      %v889 = vmul.f32 %v801, %v879
      %v890 = vmul.f32 %v807, %v888
      %v891 = vmul.f32 %v801, %v817
      %v892 = vmul.f32 %v807, %v824
      %v893 = vmul.f32 %v801, %v801
      %v894 = vmul.f32 %v807, %v807
      %v895 = vmul.f32 %v817, %v817
      %v896 = vmul.f32 %v824, %v824
      %v897 = vmul.f32 %v879, %v879
      %v898 = vmul.f32 %v888, %v888
      %vm899 = vcmask 1040384
      %v900 = vsel %vm899, %v889, %v891
      %v901 = vsel %vm899, %v890, %v892
      %vm902 = vcmask 1041408
      %v903 = vsel %vm902, %v900, %v893
      %v904 = vsel %vm902, %v901, %v894
      %vm905 = vcmask 1042432
      %v906 = vsel %vm905, %v903, %v895
      %v907 = vsel %vm905, %v904, %v896
      %v908 = vsel %vm810, %v906, %v897
      %v909 = vsel %vm810, %v907, %v898
      %vm910 = vcmask 1044480
      %v911 = vsel %vm910, %v908, 0.0
      %v912 = vsel %vm910, %v909, 0.0
      %v913 = vadd.f32 %v911, %v912
      %914 = vadd.xlane.f32.xlu0 %v913
      %v915 = vpop.xlane.xlu0 %914
      %s916 = vtos %v915
      %v917 = vrot.slane %v915, 1
      %s918 = vtos %v917
      %v919 = vrot.slane %v915, 2
      %s920 = vtos %v919
      %v921 = vrot.slane %v915, 3
      %s922 = vtos %v921
      %v923 = vrot.slane %v915, 4
      %s924 = vtos %v923
      %s925 = smul.f32 %s920, %s924
      %s926 = smax.f32 %s925, 1e-16
      %v927 = vstv %s926
      %v928 = vrsqrt.pop %v927
      %s929 = vtos %v928
      %s930 = smul.f32 %s916, %s929
      %s931 = smul.f32 %s920, %s922
      %s932 = smax.f32 %s931, 1e-16
      %v933 = vstv %s932
      %v934 = vrsqrt.pop %v933
      %s935 = vtos %v934
      %s936 = smul.f32 %s918, %s935
      %s937 = ssub.f32 %s930, %s936
      %s938 = sadd.f32 %s937, 0.1
      %s939 = smax.f32 %s938, 0.0
      %v940 = vstv %s939
      %vm941 = vcmask 0
      %942 = vst.msk [vmem:[%s58] sm:$0x1] %vm941, %v940
      %p943 = scmp.lt.s32.totalorder %s21, 3
      %s944 = scalar_select %p943, %s21, 3
      %s945 = scalar_lea.vmem %s5, %s944
      // Predicated region
      $region13: #{tagspace_forward.1} parent=11 // pred_check
        %p946 = pneg %p36
      $region14: #{tagspace_forward.1} parent=11 // pred_check_branch
        %948 = sbr.rel (%p946) target = $region16
      $region15: #{tagspace_forward.1} parent=11 // pred_region
        _
      $region16: #{tagspace_forward.1} parent=11 // pred_fallthru
        _
    $region12: #{tagspace_forward.1} parent=5 // pred_fallthru
      _
    %p949 = scmp.le.s32.totalorder 1, %s21
    // Predicated region
    $region17: #{tagspace_forward.1} parent=5 // pred_check
      %p950 = pneg %p949
    $region18: #{tagspace_forward.1} parent=5 // pred_check_branch
      %952 = sbr.rel (%p950) target = $region20
    $region19: #{tagspace_forward.1} parent=5 // pred_region
      %s953 = ssub.s32 %s21, 1
      // Predicated region
      $region21: #{tagspace_forward.1} parent=19 // pred_check
        %p954 = pneg %p42
      $region22: #{tagspace_forward.1} parent=19 // pred_check_branch
        %956 = sbr.rel (%p954) target = $region24
      $region23: #{tagspace_forward.1} parent=19 // pred_region
        %p957 = scmp.lt.s32.totalorder %s26, 3
        %s958 = scalar_select %p957, %s26, 3
        %s959 = scalar_lea.vmem %s5, %s958
      $region24: #{tagspace_forward.1} parent=19 // pred_fallthru
        _
    $region20: #{tagspace_forward.1} parent=5 // pred_fallthru
      _
  $region6: #{tagspace_forward.1} parent=0 // loop_footer
    %s25 = sadd.s32 1, %s21
  $region7: #{tagspace_forward.1} parent=0 // loop_footer_branch
    %20 = sbr.rel target = $region3
  $region8: #{tagspace_forward.1} parent=0 // loop_exit
    _
  %960 = vsyncmov [#allocation3]
  %s961 = vpop.sfrf %960
  %p962 = scmp.eq.s32.totalorder %s961, 0
  %p963 = pneg %p962
  %965 = shalt.err (%p963)
  %s966 = scalar_lea.sflag [#allocation3], 1
  %967 = vsyncmov %s966
  %s968 = vpop.sfrf %967
  %p969 = scmp.eq.s32.totalorder %s968, 0
  %p970 = pneg %p969
  %972 = shalt.err (%p970)
  %s973 = scalar_lea.sflag [#allocation3], 2
  %974 = vsyncmov %s973
  %s975 = vpop.sfrf %974
  %p976 = scmp.eq.s32.totalorder %s975, 0
  %p977 = pneg %p976
  %979 = shalt.err (%p977)
  %s980 = scalar_lea.sflag [#allocation3], 3
  %981 = vsyncmov %s980
  %s982 = vpop.sfrf %981
  %p983 = scmp.eq.s32.totalorder %s982, 0
  %p984 = pneg %p983
  %986 = shalt.err (%p984)
  %s987 = scalar_lea.sflag [#allocation3], 4
  %988 = vsyncmov %s987
  %s989 = vpop.sfrf %988
  %p990 = scmp.eq.s32.totalorder %s989, 0
  %p991 = pneg %p990
  %993 = shalt.err (%p991)
  %s994 = scalar_lea.sflag [#allocation3], 5
  %995 = vsyncmov %s994
  %s996 = vpop.sfrf %995
  %p997 = scmp.eq.s32.totalorder %s996, 0
  %p998 = pneg %p997
  %1000 = shalt.err (%p998)
  %s1001 = scalar_lea.sflag [#allocation3], 6
  %1002 = vsyncmov %s1001
  %s1003 = vpop.sfrf %1002
  %p1004 = scmp.eq.s32.totalorder %s1003, 0
  %p1005 = pneg %p1004
  %1007 = shalt.err (%p1005)
  %s1008 = scalar_lea.sflag [#allocation3], 7
  %1009 = vsyncmov %s1008
  %s1010 = vpop.sfrf %1009
  %p1011 = scmp.eq.s32.totalorder %s1010, 0
  %p1012 = pneg %p1011
  %1014 = shalt.err (%p1012)
  %s1015 = scalar_lea.sflag [#allocation3], 8
  %1016 = vsyncmov %s1015
  %s1017 = vpop.sfrf %1016
  %p1018 = scmp.eq.s32.totalorder %s1017, 0
  %p1019 = pneg %p1018
  %1021 = shalt.err (%p1019)
  %s1022 = scalar_lea.sflag [#allocation3], 9
  %1023 = vsyncmov %s1022
  %s1024 = vpop.sfrf %1023
  %p1025 = scmp.eq.s32.totalorder %s1024, 0
  %p1026 = pneg %p1025
  %1028 = shalt.err (%p1026)
  %s1029 = scalar_lea.sflag [#allocation3], 10
  %1030 = vsyncmov %s1029
  %s1031 = vpop.sfrf %1030
  %p1032 = scmp.eq.s32.totalorder %s1031, 0
  %p1033 = pneg %p1032
  %1035 = shalt.err (%p1033)
  %s1036 = scalar_lea.sflag [#allocation3], 11
  %1037 = vsyncmov %s1036
  %s1038 = vpop.sfrf %1037
  %p1039 = scmp.eq.s32.totalorder %s1038, 0
  %p1040 = pneg %p1039
  %1042 = shalt.err (%p1040)
  %s1043 = scalar_lea.sflag [#allocation3], 12
  %1044 = vsyncmov %s1043
  %s1045 = vpop.sfrf %1044
  %p1046 = scmp.eq.s32.totalorder %s1045, 0
  %p1047 = pneg %p1046
  %1049 = shalt.err (%p1047)
  %s1050 = scalar_lea.sflag [#allocation3], 13
  %1051 = vsyncmov %s1050
  %s1052 = vpop.sfrf %1051
  %p1053 = scmp.eq.s32.totalorder %s1052, 0
  %p1054 = pneg %p1053
  %1056 = shalt.err (%p1054)
  %s1057 = scalar_lea.sflag [#allocation3], 14
  %1058 = vsyncmov %s1057
  %s1059 = vpop.sfrf %1058
  %p1060 = scmp.eq.s32.totalorder %s1059, 0
  %p1061 = pneg %p1060
  %1063 = shalt.err (%p1061)
  %s1064 = scalar_lea.sflag [#allocation3], 15
  %1065 = vsyncmov %s1064
  %s1066 = vpop.sfrf %1065
  %p1067 = scmp.eq.s32.totalorder %s1066, 0
  %p1068 = pneg %p1067
  %1070 = shalt.err (%p1068)
  %s1071 = scalar_lea.sflag [#allocation3], 16
  %1072 = vsyncmov %s1071
  %s1073 = vpop.sfrf %1072
  %p1074 = scmp.eq.s32.totalorder %s1073, 0
  %p1075 = pneg %p1074
  %1077 = shalt.err (%p1075)
  %s1078 = scalar_lea.sflag [#allocation3], 17
  %1079 = vsyncmov %s1078
  %s1080 = vpop.sfrf %1079
  %p1081 = scmp.eq.s32.totalorder %s1080, 0
  %p1082 = pneg %p1081
  %1084 = shalt.err (%p1082)
  %s1085 = scalar_lea.sflag [#allocation3], 18
  %1086 = vsyncmov %s1085
  %s1087 = vpop.sfrf %1086
  %p1088 = scmp.eq.s32.totalorder %s1087, 0
  %p1089 = pneg %p1088
  %1091 = shalt.err (%p1089)
  %s1092 = scalar_lea.sflag [#allocation3], 19
  %1093 = vsyncmov %s1092
  %s1094 = vpop.sfrf %1093
  %p1095 = scmp.eq.s32.totalorder %s1094, 0
  %p1096 = pneg %p1095
  %1098 = shalt.err (%p1096)
  %s1099 = scalar_lea.sflag [#allocation3], 20
  %1100 = vsyncmov %s1099
  %s1101 = vpop.sfrf %1100
  %p1102 = scmp.eq.s32.totalorder %s1101, 0
  %p1103 = pneg %p1102
  %1105 = shalt.err (%p1103)
  %s1106 = scalar_lea.sflag [#allocation3], 21
  %1107 = vsyncmov %s1106
  %s1108 = vpop.sfrf %1107
  %p1109 = scmp.eq.s32.totalorder %s1108, 0
  %p1110 = pneg %p1109
  %1112 = shalt.err (%p1110)
  %s1113 = scalar_lea.sflag [#allocation3], 22
  %1114 = vsyncmov %s1113
  %s1115 = vpop.sfrf %1114
  %p1116 = scmp.eq.s32.totalorder %s1115, 0
  %p1117 = pneg %p1116
  %1119 = shalt.err (%p1117)
  %s1120 = scalar_lea.sflag [#allocation3], 23
  %1121 = vsyncmov %s1120
  %s1122 = vpop.sfrf %1121
  %p1123 = scmp.eq.s32.totalorder %s1122, 0
  %p1124 = pneg %p1123
  %1126 = shalt.err (%p1124)
  %s1127 = scalar_lea.sflag [#allocation3], 24
  %1128 = vsyncmov %s1127
  %s1129 = vpop.sfrf %1128
  %p1130 = scmp.eq.s32.totalorder %s1129, 0
  %p1131 = pneg %p1130
  %1133 = shalt.err (%p1131)
  %s1134 = scalar_lea.sflag [#allocation3], 25
  %1135 = vsyncmov %s1134
  %s1136 = vpop.sfrf %1135
  %p1137 = scmp.eq.s32.totalorder %s1136, 0
  %p1138 = pneg %p1137
  %1140 = shalt.err (%p1138)
  %s1141 = scalar_lea.sflag [#allocation3], 26
  %1142 = vsyncmov %s1141
  %s1143 = vpop.sfrf %1142
  %p1144 = scmp.eq.s32.totalorder %s1143, 0
  %p1145 = pneg %p1144
  %1147 = shalt.err (%p1145)
  %s1148 = scalar_lea.sflag [#allocation3], 27
  %1149 = vsyncmov %s1148
  %s1150 = vpop.sfrf %1149
  %p1151 = scmp.eq.s32.totalorder %s1150, 0
  %p1152 = pneg %p1151
  %1154 = shalt.err (%p1152)
  %s1155 = scalar_lea.sflag [#allocation3], 28
  %1156 = vsyncmov %s1155
  %s1157 = vpop.sfrf %1156
  %p1158 = scmp.eq.s32.totalorder %s1157, 0
  %p1159 = pneg %p1158
  %1161 = shalt.err (%p1159)
  %s1162 = scalar_lea.sflag [#allocation3], 29
  %1163 = vsyncmov %s1162
  %s1164 = vpop.sfrf %1163
  %p1165 = scmp.eq.s32.totalorder %s1164, 0
  %p1166 = pneg %p1165
  %1168 = shalt.err (%p1166)
  %s1169 = scalar_lea.sflag [#allocation3], 30
  %1170 = vsyncmov %s1169
  %s1171 = vpop.sfrf %1170
  %p1172 = scmp.eq.s32.totalorder %s1171, 0
  %p1173 = pneg %p1172
  %1175 = shalt.err (%p1173)
  %s1176 = scalar_lea.sflag [#allocation3], 31
  %1177 = vsyncmov %s1176
  %s1178 = vpop.sfrf %1177
  %p1179 = scmp.eq.s32.totalorder %s1178, 0
  %p1180 = pneg %p1179
  %1182 = shalt.err (%p1180)
  %s1183 = scalar_lea.sflag [#allocation3], 32
  %1184 = vsyncmov %s1183
  %s1185 = vpop.sfrf %1184
  %p1186 = scmp.eq.s32.totalorder %s1185, 0
  %p1187 = pneg %p1186
  %1189 = shalt.err (%p1187)
  %s1190 = scalar_lea.sflag [#allocation3], 33
  %1191 = vsyncmov %s1190
  %s1192 = vpop.sfrf %1191
  %p1193 = scmp.eq.s32.totalorder %s1192, 0
  %p1194 = pneg %p1193
  %1196 = shalt.err (%p1194)
  %s1197 = scalar_lea.sflag [#allocation3], 34
  %1198 = vsyncmov %s1197
  %s1199 = vpop.sfrf %1198
  %p1200 = scmp.eq.s32.totalorder %s1199, 0
  %p1201 = pneg %p1200
  %1203 = shalt.err (%p1201)
  %s1204 = scalar_lea.sflag [#allocation3], 35
  %1205 = vsyncmov %s1204
  %s1206 = vpop.sfrf %1205
  %p1207 = scmp.eq.s32.totalorder %s1206, 0
  %p1208 = pneg %p1207
  %1210 = shalt.err (%p1208)
  %s1211 = scalar_lea.sflag [#allocation3], 36
  %1212 = vsyncmov %s1211
  %s1213 = vpop.sfrf %1212
  %p1214 = scmp.eq.s32.totalorder %s1213, 0
  %p1215 = pneg %p1214
  %1217 = shalt.err (%p1215)
  %s1218 = scalar_lea.sflag [#allocation3], 37
  %1219 = vsyncmov %s1218
  %s1220 = vpop.sfrf %1219
  %p1221 = scmp.eq.s32.totalorder %s1220, 0
  %p1222 = pneg %p1221
  %1224 = shalt.err (%p1222)
  %s1225 = scalar_lea.sflag [#allocation3], 38
  %1226 = vsyncmov %s1225
  %s1227 = vpop.sfrf %1226
  %p1228 = scmp.eq.s32.totalorder %s1227, 0
  %p1229 = pneg %p1228
  %1231 = shalt.err (%p1229)
  %s1232 = scalar_lea.sflag [#allocation3], 39
  %1233 = vsyncmov %s1232
  %s1234 = vpop.sfrf %1233
  %p1235 = scmp.eq.s32.totalorder %s1234, 0
  %p1236 = pneg %p1235
  %1238 = shalt.err (%p1236)
  %s1239 = scalar_lea.sflag [#allocation3], 40
  %1240 = vsyncmov %s1239
  %s1241 = vpop.sfrf %1240
  %p1242 = scmp.eq.s32.totalorder %s1241, 0
  %p1243 = pneg %p1242
  %1245 = shalt.err (%p1243)
  %s1246 = scalar_lea.sflag [#allocation3], 41
  %1247 = vsyncmov %s1246
  %s1248 = vpop.sfrf %1247
  %p1249 = scmp.eq.s32.totalorder %s1248, 0
  %p1250 = pneg %p1249
  %1252 = shalt.err (%p1250)
  %s1253 = scalar_lea.sflag [#allocation3], 42
  %1254 = vsyncmov %s1253
  %s1255 = vpop.sfrf %1254
  %p1256 = scmp.eq.s32.totalorder %s1255, 0
  %p1257 = pneg %p1256
  %1259 = shalt.err (%p1257)
  %s1260 = scalar_lea.sflag [#allocation3], 43
  %1261 = vsyncmov %s1260
  %s1262 = vpop.sfrf %1261
  %p1263 = scmp.eq.s32.totalorder %s1262, 0
  %p1264 = pneg %p1263
  %1266 = shalt.err (%p1264)

</llo_original>
